<compile_context>
chip_gen: v6e
topology: v6e:2x2x1
jax: 0.10.0
libtpu: 0.0.40
codegen_flags: <defaults>
</compile_context>

<pallas_src>
import functools

import jax
import jax.numpy as jnp
import numpy as np
from jax import lax
from jax.experimental import pallas as pl
from jax.experimental.pallas import tpu as pltpu


def capsule_routing_kernel(xt_ref, w_ref, e_ref, g_ref, v_ref, s_ref, *, num_routing):
    """Fused u_hat transform + routing-by-agreement.

    xt_ref: (B, C, K)   pre-transposed input (batch, in_channel, in_unit), f32
    w_ref:  (K, C, N*U) pre-transformed weight, f32
    e_ref:  (N, N*U)    0/1 expand matrix   E[n, n*U+u] = 1
    g_ref:  (N*U, N)    0/1 group-sum matrix G[n*U+u, n] = 1
    v_ref:  (B, N*U)    output capsules, lane-dense, f32
    s_ref:  (B, N*U)    VMEM scratch for the per-iteration s_j slab
    """
    B, C, K = xt_ref.shape
    NU = w_ref.shape[2]
    N = e_ref.shape[0]
    f32 = jnp.float32
    HIGH = lax.Precision.HIGHEST

    xt = xt_ref[...]                                  # (B, C, K), ~2 KiB
    E = e_ref[...]                                    # (N, NU)
    G = g_ref[...]                                    # (NU, N)

    # ---------------- Stage 1: u_hat ---------------------------------------
    # u_hat[b][c, n*U+u] = sum_k xt[b, c, k] * W[0, c, n, u, k]
    # K is tiny -> VPU broadcast-MAC; k-outer so each (C, NU) weight slab is
    # loaded from VMEM exactly once and reused across the batch.
    xb = [xt[b] for b in range(B)]                    # B x (C, K)
    w0 = w_ref[0]                                     # (C, NU)
    u = [xb[b][:, 0:1] * w0 for b in range(B)]        # B x (C, NU)
    for k in range(1, K):
        wk = w_ref[k]
        for b in range(B):
            u[b] = u[b] + xb[b][:, k:k + 1] * wk

    # ---------------- Stage 2: routing by agreement -------------------------
    b_ij = jnp.zeros((C, N), f32)
    v = None
    for it in range(num_routing):                     # static unroll
        if it == 0:
            # b_ij == 0 -> softmax is exactly uniform; skip the exp chain and
            # the expand matmul on the first (peeled) iteration.
            c_exp = jnp.full((C, NU), 1.0 / N, f32)
        else:
            # c_ij = softmax(b_ij) over num_unit (== F.softmax(b_ij, dim=2));
            # exact normalization kept (approx reciprocal would cost accuracy).
            mx = jnp.max(b_ij, axis=-1, keepdims=True)
            ex = jnp.exp(b_ij - mx)
            c_ij = ex / jnp.sum(ex, axis=-1, keepdims=True)            # (C, N)
            c_exp = jnp.dot(c_ij, E, preferred_element_type=f32)       # (C, NU)

        # s_j rows: VPU multiply + sublane reduce per batch element, assembled
        # into one lane-dense (B, NU) slab so the squash matmuls below run
        # once for the whole batch (4 MXU ops / iteration, not 2B+2).
        for b in range(B):
            s_ref[b:b + 1, :] = jnp.sum(c_exp * u[b], axis=0, keepdims=True)
        s = s_ref[...]                                                  # (B, NU)

        # squash along unit_size: sq = sum_u s^2 per (b, n) via one G matmul.
        sq = jnp.dot(s * s, G, precision=HIGH,
                     preferred_element_type=f32)                        # (B, N)
        scale = (sq / (1.0 + sq)) * lax.rsqrt(sq)                       # (B, N) (EUP rsqrt)
        v = s * jnp.dot(scale, E, preferred_element_type=f32)          # (B, NU)

        if it + 1 < num_routing:
            # agreement: b_ij += mean over batch of <u_hat, v_j>.  Dead on the
            # final iteration -> peeled (b_ij is never consumed afterwards).
            prod = u[0] * v[0:1, :]
            for b in range(1, B):
                prod = prod + u[b] * v[b:b + 1, :]
            b_ij = b_ij + jnp.dot(prod, G, precision=HIGH,
                                  preferred_element_type=f32) * (1.0 / B)

    v_ref[...] = v                                    # single coalesced store


def prepare_capsule_weight(weight):
    """One-time parameter prep (would live at module init):
    (1, C, N, U, K) -> (K, C, N*U) with w[k, c, n*U+u] = weight[0, c, n, u, k]."""
    _, C, N, U, K = weight.shape
    return (jnp.transpose(weight[0], (3, 0, 1, 2))
            .reshape(K, C, N * U)
            .astype(jnp.float32))


def _make_group_constants(num_unit, unit_size):
    """0/1 expand / group-sum constants, baked with numpy at trace time."""
    NU = num_unit * unit_size
    grp = np.arange(NU) // unit_size
    E = (np.arange(num_unit)[:, None] == grp[None, :]).astype(np.float32)  # (N, NU)
    return E, np.ascontiguousarray(E.T)                                    # (NU, N)


@functools.partial(jax.jit, static_argnames=("num_unit", "unit_size", "num_routing"))
def capsule_layer_routing(x, w_prep, *, num_unit, unit_size, num_routing):
    """x: (batch, in_unit, in_channel); w_prep: prepare_capsule_weight(weight).

    Returns (batch, num_unit, unit_size, 1), matching CapsuleLayer.routing(x).
    """
    assert num_routing >= 1
    B, K, C = x.shape
    Kw, Cw, NU = w_prep.shape
    assert (K, C, num_unit * unit_size) == (Kw, Cw, NU)

    # Relayout x to (B, C, K) here (~2 KiB, effectively free) so the kernel
    # never spends MXU/XLU work on the transpose.
    xt = jnp.transpose(x.astype(jnp.float32), (0, 2, 1))
    E_np, G_np = _make_group_constants(num_unit, unit_size)

    kernel = functools.partial(capsule_routing_kernel, num_routing=num_routing)
    # Single fused kernel, no grid: whole problem (~200 KiB) is VMEM-resident.
    v = pl.pallas_call(
        kernel,
        out_shape=jax.ShapeDtypeStruct((B, NU), jnp.float32),
        scratch_shapes=[pltpu.VMEM((B, NU), jnp.float32)],
    )(xt, w_prep, jnp.asarray(E_np), jnp.asarray(G_np))
    return v.reshape(B, num_unit, unit_size, 1)       # metadata-only reshape


def reference_routing(x, weight, num_routing):
    """Pure-JAX reference mirroring the PyTorch routing() code path."""
    B = x.shape[0]
    HIGH = lax.Precision.HIGHEST
    xt = jnp.transpose(x, (0, 2, 1))                                 # (B, C, K)
    W = weight[0]                                                    # (C, N, U, K)
    u_hat = jnp.einsum("bck,cnuk->bcnu", xt, W, precision=HIGH)      # (B, C, N, U)
    C, N = W.shape[0], W.shape[1]
    b_ij = jnp.zeros((C, N), jnp.float32)
    v_j = None
    for _ in range(num_routing):
        c_ij = jax.nn.softmax(b_ij, axis=-1)
        s_j = jnp.einsum("cn,bcnu->bnu", c_ij, u_hat, precision=HIGH)
        sq = jnp.sum(s_j ** 2, axis=-1, keepdims=True)
        v_j = (sq / (1.0 + sq)) * (s_j / jnp.sqrt(sq))
        u_vj = jnp.einsum("bcnu,bnu->cn", u_hat, v_j, precision=HIGH) / B
        b_ij = b_ij + u_vj
    return v_j[..., None]


if __name__ == "__main__":
    # small shapes consistent with the module: x is (batch, in_unit, in_channel)
    batch, in_unit, in_channel = 2, 8, 32
    num_unit, unit_size, num_routing = 10, 16, 3

    key = jax.random.PRNGKey(0)
    kx, kw = jax.random.split(key)
    x = jax.random.normal(kx, (batch, in_unit, in_channel), dtype=jnp.float32)
    # deterministic stand-in for nn.Parameter(torch.randn(1, C, N, U, K))
    weight = jax.random.normal(
        kw, (1, in_channel, num_unit, unit_size, in_unit), dtype=jnp.float32
    )

    # one-time parameter prep (equivalent work happens at module init)
    w_prep = jax.block_until_ready(prepare_capsule_weight(weight))

    out = capsule_layer_routing(
        x, w_prep, num_unit=num_unit, unit_size=unit_size, num_routing=num_routing
    )
    out = jax.block_until_ready(out)

    ref = jax.block_until_ready(reference_routing(x, weight, num_routing))
    assert out.shape == (batch, num_unit, unit_size, 1)
    np.testing.assert_allclose(np.asarray(out), np.asarray(ref), rtol=1e-4, atol=1e-4)
    print("KERNEL_OK")
</pallas_src>

<mosaic_0001>
module attributes {stable_mosaic.version = 11 : i64} {
  func.func @capsule_routing_kernel(%arg0: memref<2x32x8xf32, #tpu.memory_space<vmem>>, %arg1: memref<8x32x160xf32, #tpu.memory_space<vmem>>, %arg2: memref<10x160xf32, #tpu.memory_space<vmem>>, %arg3: memref<160x10xf32, #tpu.memory_space<vmem>>, %arg4: memref<2x160xf32, #tpu.memory_space<vmem>>, %arg5: memref<2x160xf32, #tpu.memory_space<vmem>>) attributes {dimension_semantics = [], scalar_prefetch = 0 : i64, scratch_operands = 1 : i64, tpu.core_type = #tpu.core_type<tc>} {
    %c0 = arith.constant 0 : index
    %c0_0 = arith.constant 0 : index
    %c0_1 = arith.constant 0 : index
    %0 = vector.load %arg0[%c0, %c0_0, %c0_1] : memref<2x32x8xf32, #tpu.memory_space<vmem>>, vector<2x32x8xf32>
    %c0_2 = arith.constant 0 : index
    %c0_3 = arith.constant 0 : index
    %1 = vector.load %arg2[%c0_2, %c0_3] : memref<10x160xf32, #tpu.memory_space<vmem>>, vector<10x160xf32>
    %c0_4 = arith.constant 0 : index
    %c0_5 = arith.constant 0 : index
    %2 = vector.load %arg3[%c0_4, %c0_5] : memref<160x10xf32, #tpu.memory_space<vmem>>, vector<160x10xf32>
    %3 = vector.extract_strided_slice %0 {offsets = [0, 0, 0], sizes = [1, 32, 8], strides = [1, 1, 1]} : vector<2x32x8xf32> to vector<1x32x8xf32>
    %4 = vector.shape_cast %3 : vector<1x32x8xf32> to vector<32x8xf32>
    %5 = vector.extract_strided_slice %0 {offsets = [1, 0, 0], sizes = [1, 32, 8], strides = [1, 1, 1]} : vector<2x32x8xf32> to vector<1x32x8xf32>
    %6 = vector.shape_cast %5 : vector<1x32x8xf32> to vector<32x8xf32>
    %c0_6 = arith.constant 0 : index
    %c0_7 = arith.constant 0 : index
    %c0_8 = arith.constant 0 : index
    %7 = vector.load %arg1[%c0_6, %c0_7, %c0_8] : memref<8x32x160xf32, #tpu.memory_space<vmem>>, vector<1x32x160xf32>
    %8 = vector.shape_cast %7 : vector<1x32x160xf32> to vector<32x160xf32>
    %9 = vector.extract_strided_slice %4 {offsets = [0, 0], sizes = [32, 1], strides = [1, 1]} : vector<32x8xf32> to vector<32x1xf32>
    %10 = vector.broadcast %9 : vector<32x1xf32> to vector<32x160xf32>
    %11 = arith.mulf %10, %8 : vector<32x160xf32>
    %12 = vector.extract_strided_slice %6 {offsets = [0, 0], sizes = [32, 1], strides = [1, 1]} : vector<32x8xf32> to vector<32x1xf32>
    %13 = vector.broadcast %12 : vector<32x1xf32> to vector<32x160xf32>
    %14 = arith.mulf %13, %8 : vector<32x160xf32>
    %c1 = arith.constant 1 : index
    %c0_9 = arith.constant 0 : index
    %c0_10 = arith.constant 0 : index
    %15 = vector.load %arg1[%c1, %c0_9, %c0_10] : memref<8x32x160xf32, #tpu.memory_space<vmem>>, vector<1x32x160xf32>
    %16 = vector.shape_cast %15 : vector<1x32x160xf32> to vector<32x160xf32>
    %17 = vector.extract_strided_slice %4 {offsets = [0, 1], sizes = [32, 1], strides = [1, 1]} : vector<32x8xf32> to vector<32x1xf32>
    %18 = vector.broadcast %17 : vector<32x1xf32> to vector<32x160xf32>
    %19 = arith.mulf %18, %16 : vector<32x160xf32>
    %20 = arith.addf %11, %19 : vector<32x160xf32>
    %21 = vector.extract_strided_slice %6 {offsets = [0, 1], sizes = [32, 1], strides = [1, 1]} : vector<32x8xf32> to vector<32x1xf32>
    %22 = vector.broadcast %21 : vector<32x1xf32> to vector<32x160xf32>
    %23 = arith.mulf %22, %16 : vector<32x160xf32>
    %24 = arith.addf %14, %23 : vector<32x160xf32>
    %c2 = arith.constant 2 : index
    %c0_11 = arith.constant 0 : index
    %c0_12 = arith.constant 0 : index
    %25 = vector.load %arg1[%c2, %c0_11, %c0_12] : memref<8x32x160xf32, #tpu.memory_space<vmem>>, vector<1x32x160xf32>
    %26 = vector.shape_cast %25 : vector<1x32x160xf32> to vector<32x160xf32>
    %27 = vector.extract_strided_slice %4 {offsets = [0, 2], sizes = [32, 1], strides = [1, 1]} : vector<32x8xf32> to vector<32x1xf32>
    %28 = vector.broadcast %27 : vector<32x1xf32> to vector<32x160xf32>
    %29 = arith.mulf %28, %26 : vector<32x160xf32>
    %30 = arith.addf %20, %29 : vector<32x160xf32>
    %31 = vector.extract_strided_slice %6 {offsets = [0, 2], sizes = [32, 1], strides = [1, 1]} : vector<32x8xf32> to vector<32x1xf32>
    %32 = vector.broadcast %31 : vector<32x1xf32> to vector<32x160xf32>
    %33 = arith.mulf %32, %26 : vector<32x160xf32>
    %34 = arith.addf %24, %33 : vector<32x160xf32>
    %c3 = arith.constant 3 : index
    %c0_13 = arith.constant 0 : index
    %c0_14 = arith.constant 0 : index
    %35 = vector.load %arg1[%c3, %c0_13, %c0_14] : memref<8x32x160xf32, #tpu.memory_space<vmem>>, vector<1x32x160xf32>
    %36 = vector.shape_cast %35 : vector<1x32x160xf32> to vector<32x160xf32>
    %37 = vector.extract_strided_slice %4 {offsets = [0, 3], sizes = [32, 1], strides = [1, 1]} : vector<32x8xf32> to vector<32x1xf32>
    %38 = vector.broadcast %37 : vector<32x1xf32> to vector<32x160xf32>
    %39 = arith.mulf %38, %36 : vector<32x160xf32>
    %40 = arith.addf %30, %39 : vector<32x160xf32>
    %41 = vector.extract_strided_slice %6 {offsets = [0, 3], sizes = [32, 1], strides = [1, 1]} : vector<32x8xf32> to vector<32x1xf32>
    %42 = vector.broadcast %41 : vector<32x1xf32> to vector<32x160xf32>
    %43 = arith.mulf %42, %36 : vector<32x160xf32>
    %44 = arith.addf %34, %43 : vector<32x160xf32>
    %c4 = arith.constant 4 : index
    %c0_15 = arith.constant 0 : index
    %c0_16 = arith.constant 0 : index
    %45 = vector.load %arg1[%c4, %c0_15, %c0_16] : memref<8x32x160xf32, #tpu.memory_space<vmem>>, vector<1x32x160xf32>
    %46 = vector.shape_cast %45 : vector<1x32x160xf32> to vector<32x160xf32>
    %47 = vector.extract_strided_slice %4 {offsets = [0, 4], sizes = [32, 1], strides = [1, 1]} : vector<32x8xf32> to vector<32x1xf32>
    %48 = vector.broadcast %47 : vector<32x1xf32> to vector<32x160xf32>
    %49 = arith.mulf %48, %46 : vector<32x160xf32>
    %50 = arith.addf %40, %49 : vector<32x160xf32>
    %51 = vector.extract_strided_slice %6 {offsets = [0, 4], sizes = [32, 1], strides = [1, 1]} : vector<32x8xf32> to vector<32x1xf32>
    %52 = vector.broadcast %51 : vector<32x1xf32> to vector<32x160xf32>
    %53 = arith.mulf %52, %46 : vector<32x160xf32>
    %54 = arith.addf %44, %53 : vector<32x160xf32>
    %c5 = arith.constant 5 : index
    %c0_17 = arith.constant 0 : index
    %c0_18 = arith.constant 0 : index
    %55 = vector.load %arg1[%c5, %c0_17, %c0_18] : memref<8x32x160xf32, #tpu.memory_space<vmem>>, vector<1x32x160xf32>
    %56 = vector.shape_cast %55 : vector<1x32x160xf32> to vector<32x160xf32>
    %57 = vector.extract_strided_slice %4 {offsets = [0, 5], sizes = [32, 1], strides = [1, 1]} : vector<32x8xf32> to vector<32x1xf32>
    %58 = vector.broadcast %57 : vector<32x1xf32> to vector<32x160xf32>
    %59 = arith.mulf %58, %56 : vector<32x160xf32>
    %60 = arith.addf %50, %59 : vector<32x160xf32>
    %61 = vector.extract_strided_slice %6 {offsets = [0, 5], sizes = [32, 1], strides = [1, 1]} : vector<32x8xf32> to vector<32x1xf32>
    %62 = vector.broadcast %61 : vector<32x1xf32> to vector<32x160xf32>
    %63 = arith.mulf %62, %56 : vector<32x160xf32>
    %64 = arith.addf %54, %63 : vector<32x160xf32>
    %c6 = arith.constant 6 : index
    %c0_19 = arith.constant 0 : index
    %c0_20 = arith.constant 0 : index
    %65 = vector.load %arg1[%c6, %c0_19, %c0_20] : memref<8x32x160xf32, #tpu.memory_space<vmem>>, vector<1x32x160xf32>
    %66 = vector.shape_cast %65 : vector<1x32x160xf32> to vector<32x160xf32>
    %67 = vector.extract_strided_slice %4 {offsets = [0, 6], sizes = [32, 1], strides = [1, 1]} : vector<32x8xf32> to vector<32x1xf32>
    %68 = vector.broadcast %67 : vector<32x1xf32> to vector<32x160xf32>
    %69 = arith.mulf %68, %66 : vector<32x160xf32>
    %70 = arith.addf %60, %69 : vector<32x160xf32>
    %71 = vector.extract_strided_slice %6 {offsets = [0, 6], sizes = [32, 1], strides = [1, 1]} : vector<32x8xf32> to vector<32x1xf32>
    %72 = vector.broadcast %71 : vector<32x1xf32> to vector<32x160xf32>
    %73 = arith.mulf %72, %66 : vector<32x160xf32>
    %74 = arith.addf %64, %73 : vector<32x160xf32>
    %c7 = arith.constant 7 : index
    %c0_21 = arith.constant 0 : index
    %c0_22 = arith.constant 0 : index
    %75 = vector.load %arg1[%c7, %c0_21, %c0_22] : memref<8x32x160xf32, #tpu.memory_space<vmem>>, vector<1x32x160xf32>
    %76 = vector.shape_cast %75 : vector<1x32x160xf32> to vector<32x160xf32>
    %77 = vector.extract_strided_slice %4 {offsets = [0, 7], sizes = [32, 1], strides = [1, 1]} : vector<32x8xf32> to vector<32x1xf32>
    %78 = vector.broadcast %77 : vector<32x1xf32> to vector<32x160xf32>
    %79 = arith.mulf %78, %76 : vector<32x160xf32>
    %80 = arith.addf %70, %79 : vector<32x160xf32>
    %81 = vector.extract_strided_slice %6 {offsets = [0, 7], sizes = [32, 1], strides = [1, 1]} : vector<32x8xf32> to vector<32x1xf32>
    %82 = vector.broadcast %81 : vector<32x1xf32> to vector<32x160xf32>
    %83 = arith.mulf %82, %76 : vector<32x160xf32>
    %84 = arith.addf %74, %83 : vector<32x160xf32>
    %cst = arith.constant 0.000000e+00 : f32
    %85 = vector.broadcast %cst : f32 to vector<32x10xf32>
    %cst_23 = arith.constant 1.000000e-01 : f32
    %86 = vector.broadcast %cst_23 : f32 to vector<32x160xf32>
    %87 = arith.mulf %86, %80 : vector<32x160xf32>
    %cst_24 = arith.constant dense<0.000000e+00> : vector<160xf32>
    %88 = vector.multi_reduction <add>, %87, %cst_24 [0] : vector<32x160xf32> to vector<160xf32>
    %89 = vector.shape_cast %88 : vector<160xf32> to vector<1x160xf32>
    %c0_25 = arith.constant 0 : index
    %c0_26 = arith.constant 0 : index
    %90 = vector.load %arg5[%c0_25, %c0_26] : memref<2x160xf32, #tpu.memory_space<vmem>>, vector<1x160xf32>
    tpu.vector_store %arg5[%c0_25, %c0_26], %89 {strides = array<i32>} : memref<2x160xf32, #tpu.memory_space<vmem>>, vector<1x160xf32>,
    %91 = arith.mulf %86, %84 : vector<32x160xf32>
    %cst_27 = arith.constant dense<0.000000e+00> : vector<160xf32>
    %92 = vector.multi_reduction <add>, %91, %cst_27 [0] : vector<32x160xf32> to vector<160xf32>
    %93 = vector.shape_cast %92 : vector<160xf32> to vector<1x160xf32>
    %c1_28 = arith.constant 1 : index
    %c0_29 = arith.constant 0 : index
    %94 = vector.load %arg5[%c1_28, %c0_29] : memref<2x160xf32, #tpu.memory_space<vmem>>, vector<1x160xf32>
    tpu.vector_store %arg5[%c1_28, %c0_29], %93 {strides = array<i32>} : memref<2x160xf32, #tpu.memory_space<vmem>>, vector<1x160xf32>,
    %c0_30 = arith.constant 0 : index
    %c0_31 = arith.constant 0 : index
    %95 = vector.load %arg5[%c0_30, %c0_31] : memref<2x160xf32, #tpu.memory_space<vmem>>, vector<2x160xf32>
    %96 = arith.mulf %95, %95 : vector<2x160xf32>
    %cst_32 = arith.constant dense<0.000000e+00> : vector<2x10xf32>
    %97 = tpu.matmul %96, %2, %cst_32 {dimension_numbers = #tpu.dot_dimension_numbers<[1], [0], [0], [1], [0, 0, 1, 1], [], []>, precision = #tpu.contract_precision<fp32>} : vector<2x160xf32>, vector<160x10xf32>, vector<2x10xf32> -> vector<2x10xf32>
    %cst_33 = arith.constant 1.000000e+00 : f32
    %98 = vector.broadcast %cst_33 : f32 to vector<2x10xf32>
    %99 = arith.addf %98, %97 : vector<2x10xf32>
    %100 = arith.divf %97, %99 : vector<2x10xf32>
    %101 = math.rsqrt %97 : vector<2x10xf32>
    %102 = arith.mulf %100, %101 : vector<2x10xf32>
    %cst_34 = arith.constant dense<0.000000e+00> : vector<2x160xf32>
    %103 = tpu.matmul %102, %1, %cst_34 {dimension_numbers = #tpu.dot_dimension_numbers<[1], [0], [0], [1], [0, 0, 1, 1], [], []>} : vector<2x10xf32>, vector<10x160xf32>, vector<2x160xf32> -> vector<2x160xf32>
    %104 = arith.mulf %95, %103 : vector<2x160xf32>
    %105 = vector.extract_strided_slice %104 {offsets = [0, 0], sizes = [1, 160], strides = [1, 1]} : vector<2x160xf32> to vector<1x160xf32>
    %106 = vector.broadcast %105 : vector<1x160xf32> to vector<32x160xf32>
    %107 = arith.mulf %80, %106 : vector<32x160xf32>
    %108 = vector.extract_strided_slice %104 {offsets = [1, 0], sizes = [1, 160], strides = [1, 1]} : vector<2x160xf32> to vector<1x160xf32>
    %109 = vector.broadcast %108 : vector<1x160xf32> to vector<32x160xf32>
    %110 = arith.mulf %84, %109 : vector<32x160xf32>
    %111 = arith.addf %107, %110 : vector<32x160xf32>
    %cst_35 = arith.constant dense<0.000000e+00> : vector<32x10xf32>
    %112 = tpu.matmul %111, %2, %cst_35 {dimension_numbers = #tpu.dot_dimension_numbers<[1], [0], [0], [1], [0, 0, 1, 1], [], []>, precision = #tpu.contract_precision<fp32>} : vector<32x160xf32>, vector<160x10xf32>, vector<32x10xf32> -> vector<32x10xf32>
    %cst_36 = arith.constant 5.000000e-01 : f32
    %113 = vector.broadcast %cst_36 : f32 to vector<32x10xf32>
    %114 = arith.mulf %112, %113 : vector<32x10xf32>
    %115 = arith.addf %85, %114 : vector<32x10xf32>
    %cst_37 = arith.constant dense<0xFF800000> : vector<32xf32>
    %116 = vector.multi_reduction <maximumf>, %115, %cst_37 [1] : vector<32x10xf32> to vector<32xf32>
    %117 = vector.shape_cast %116 : vector<32xf32> to vector<32x1xf32>
    %118 = vector.broadcast %117 : vector<32x1xf32> to vector<32x10xf32>
    %119 = arith.subf %115, %118 : vector<32x10xf32>
    %120 = math.exp %119 : vector<32x10xf32>
    %cst_38 = arith.constant dense<0.000000e+00> : vector<32xf32>
    %121 = vector.multi_reduction <add>, %120, %cst_38 [1] : vector<32x10xf32> to vector<32xf32>
    %122 = vector.shape_cast %121 : vector<32xf32> to vector<32x1xf32>
    %123 = vector.broadcast %122 : vector<32x1xf32> to vector<32x10xf32>
    %124 = arith.divf %120, %123 : vector<32x10xf32>
    %cst_39 = arith.constant dense<0.000000e+00> : vector<32x160xf32>
    %125 = tpu.matmul %124, %1, %cst_39 {dimension_numbers = #tpu.dot_dimension_numbers<[1], [0], [0], [1], [0, 0, 1, 1], [], []>} : vector<32x10xf32>, vector<10x160xf32>, vector<32x160xf32> -> vector<32x160xf32>
    %126 = arith.mulf %125, %80 : vector<32x160xf32>
    %cst_40 = arith.constant dense<0.000000e+00> : vector<160xf32>
    %127 = vector.multi_reduction <add>, %126, %cst_40 [0] : vector<32x160xf32> to vector<160xf32>
    %128 = vector.shape_cast %127 : vector<160xf32> to vector<1x160xf32>
    %c0_41 = arith.constant 0 : index
    %c0_42 = arith.constant 0 : index
    %129 = vector.load %arg5[%c0_41, %c0_42] : memref<2x160xf32, #tpu.memory_space<vmem>>, vector<1x160xf32>
    tpu.vector_store %arg5[%c0_41, %c0_42], %128 {strides = array<i32>} : memref<2x160xf32, #tpu.memory_space<vmem>>, vector<1x160xf32>,
    %130 = arith.mulf %125, %84 : vector<32x160xf32>
    %cst_43 = arith.constant dense<0.000000e+00> : vector<160xf32>
    %131 = vector.multi_reduction <add>, %130, %cst_43 [0] : vector<32x160xf32> to vector<160xf32>
    %132 = vector.shape_cast %131 : vector<160xf32> to vector<1x160xf32>
    %c1_44 = arith.constant 1 : index
    %c0_45 = arith.constant 0 : index
    %133 = vector.load %arg5[%c1_44, %c0_45] : memref<2x160xf32, #tpu.memory_space<vmem>>, vector<1x160xf32>
    tpu.vector_store %arg5[%c1_44, %c0_45], %132 {strides = array<i32>} : memref<2x160xf32, #tpu.memory_space<vmem>>, vector<1x160xf32>,
    %c0_46 = arith.constant 0 : index
    %c0_47 = arith.constant 0 : index
    %134 = vector.load %arg5[%c0_46, %c0_47] : memref<2x160xf32, #tpu.memory_space<vmem>>, vector<2x160xf32>
    %135 = arith.mulf %134, %134 : vector<2x160xf32>
    %cst_48 = arith.constant dense<0.000000e+00> : vector<2x10xf32>
    %136 = tpu.matmul %135, %2, %cst_48 {dimension_numbers = #tpu.dot_dimension_numbers<[1], [0], [0], [1], [0, 0, 1, 1], [], []>, precision = #tpu.contract_precision<fp32>} : vector<2x160xf32>, vector<160x10xf32>, vector<2x10xf32> -> vector<2x10xf32>
    %cst_49 = arith.constant 1.000000e+00 : f32
    %137 = vector.broadcast %cst_49 : f32 to vector<2x10xf32>
    %138 = arith.addf %137, %136 : vector<2x10xf32>
    %139 = arith.divf %136, %138 : vector<2x10xf32>
    %140 = math.rsqrt %136 : vector<2x10xf32>
    %141 = arith.mulf %139, %140 : vector<2x10xf32>
    %cst_50 = arith.constant dense<0.000000e+00> : vector<2x160xf32>
    %142 = tpu.matmul %141, %1, %cst_50 {dimension_numbers = #tpu.dot_dimension_numbers<[1], [0], [0], [1], [0, 0, 1, 1], [], []>} : vector<2x10xf32>, vector<10x160xf32>, vector<2x160xf32> -> vector<2x160xf32>
    %143 = arith.mulf %134, %142 : vector<2x160xf32>
    %144 = vector.extract_strided_slice %143 {offsets = [0, 0], sizes = [1, 160], strides = [1, 1]} : vector<2x160xf32> to vector<1x160xf32>
    %145 = vector.broadcast %144 : vector<1x160xf32> to vector<32x160xf32>
    %146 = arith.mulf %80, %145 : vector<32x160xf32>
    %147 = vector.extract_strided_slice %143 {offsets = [1, 0], sizes = [1, 160], strides = [1, 1]} : vector<2x160xf32> to vector<1x160xf32>
    %148 = vector.broadcast %147 : vector<1x160xf32> to vector<32x160xf32>
    %149 = arith.mulf %84, %148 : vector<32x160xf32>
    %150 = arith.addf %146, %149 : vector<32x160xf32>
    %cst_51 = arith.constant dense<0.000000e+00> : vector<32x10xf32>
    %151 = tpu.matmul %150, %2, %cst_51 {dimension_numbers = #tpu.dot_dimension_numbers<[1], [0], [0], [1], [0, 0, 1, 1], [], []>, precision = #tpu.contract_precision<fp32>} : vector<32x160xf32>, vector<160x10xf32>, vector<32x10xf32> -> vector<32x10xf32>
    %cst_52 = arith.constant 5.000000e-01 : f32
    %152 = vector.broadcast %cst_52 : f32 to vector<32x10xf32>
    %153 = arith.mulf %151, %152 : vector<32x10xf32>
    %154 = arith.addf %115, %153 : vector<32x10xf32>
    %cst_53 = arith.constant dense<0xFF800000> : vector<32xf32>
    %155 = vector.multi_reduction <maximumf>, %154, %cst_53 [1] : vector<32x10xf32> to vector<32xf32>
    %156 = vector.shape_cast %155 : vector<32xf32> to vector<32x1xf32>
    %157 = vector.broadcast %156 : vector<32x1xf32> to vector<32x10xf32>
    %158 = arith.subf %154, %157 : vector<32x10xf32>
    %159 = math.exp %158 : vector<32x10xf32>
    %cst_54 = arith.constant dense<0.000000e+00> : vector<32xf32>
    %160 = vector.multi_reduction <add>, %159, %cst_54 [1] : vector<32x10xf32> to vector<32xf32>
    %161 = vector.shape_cast %160 : vector<32xf32> to vector<32x1xf32>
    %162 = vector.broadcast %161 : vector<32x1xf32> to vector<32x10xf32>
    %163 = arith.divf %159, %162 : vector<32x10xf32>
    %cst_55 = arith.constant dense<0.000000e+00> : vector<32x160xf32>
    %164 = tpu.matmul %163, %1, %cst_55 {dimension_numbers = #tpu.dot_dimension_numbers<[1], [0], [0], [1], [0, 0, 1, 1], [], []>} : vector<32x10xf32>, vector<10x160xf32>, vector<32x160xf32> -> vector<32x160xf32>
    %165 = arith.mulf %164, %80 : vector<32x160xf32>
    %cst_56 = arith.constant dense<0.000000e+00> : vector<160xf32>
    %166 = vector.multi_reduction <add>, %165, %cst_56 [0] : vector<32x160xf32> to vector<160xf32>
    %167 = vector.shape_cast %166 : vector<160xf32> to vector<1x160xf32>
    %c0_57 = arith.constant 0 : index
    %c0_58 = arith.constant 0 : index
    %168 = vector.load %arg5[%c0_57, %c0_58] : memref<2x160xf32, #tpu.memory_space<vmem>>, vector<1x160xf32>
    tpu.vector_store %arg5[%c0_57, %c0_58], %167 {strides = array<i32>} : memref<2x160xf32, #tpu.memory_space<vmem>>, vector<1x160xf32>,
    %169 = arith.mulf %164, %84 : vector<32x160xf32>
    %cst_59 = arith.constant dense<0.000000e+00> : vector<160xf32>
    %170 = vector.multi_reduction <add>, %169, %cst_59 [0] : vector<32x160xf32> to vector<160xf32>
    %171 = vector.shape_cast %170 : vector<160xf32> to vector<1x160xf32>
    %c1_60 = arith.constant 1 : index
    %c0_61 = arith.constant 0 : index
    %172 = vector.load %arg5[%c1_60, %c0_61] : memref<2x160xf32, #tpu.memory_space<vmem>>, vector<1x160xf32>
    tpu.vector_store %arg5[%c1_60, %c0_61], %171 {strides = array<i32>} : memref<2x160xf32, #tpu.memory_space<vmem>>, vector<1x160xf32>,
    %c0_62 = arith.constant 0 : index
    %c0_63 = arith.constant 0 : index
    %173 = vector.load %arg5[%c0_62, %c0_63] : memref<2x160xf32, #tpu.memory_space<vmem>>, vector<2x160xf32>
    %174 = arith.mulf %173, %173 : vector<2x160xf32>
    %cst_64 = arith.constant dense<0.000000e+00> : vector<2x10xf32>
    %175 = tpu.matmul %174, %2, %cst_64 {dimension_numbers = #tpu.dot_dimension_numbers<[1], [0], [0], [1], [0, 0, 1, 1], [], []>, precision = #tpu.contract_precision<fp32>} : vector<2x160xf32>, vector<160x10xf32>, vector<2x10xf32> -> vector<2x10xf32>
    %cst_65 = arith.constant 1.000000e+00 : f32
    %176 = vector.broadcast %cst_65 : f32 to vector<2x10xf32>
    %177 = arith.addf %176, %175 : vector<2x10xf32>
    %178 = arith.divf %175, %177 : vector<2x10xf32>
    %179 = math.rsqrt %175 : vector<2x10xf32>
    %180 = arith.mulf %178, %179 : vector<2x10xf32>
    %cst_66 = arith.constant dense<0.000000e+00> : vector<2x160xf32>
    %181 = tpu.matmul %180, %1, %cst_66 {dimension_numbers = #tpu.dot_dimension_numbers<[1], [0], [0], [1], [0, 0, 1, 1], [], []>} : vector<2x10xf32>, vector<10x160xf32>, vector<2x160xf32> -> vector<2x160xf32>
    %182 = arith.mulf %173, %181 : vector<2x160xf32>
    %c0_67 = arith.constant 0 : index
    %c0_68 = arith.constant 0 : index
    %183 = vector.load %arg4[%c0_67, %c0_68] : memref<2x160xf32, #tpu.memory_space<vmem>>, vector<2x160xf32>
    tpu.vector_store %arg4[%c0_67, %c0_68], %182 {strides = array<i32>} : memref<2x160xf32, #tpu.memory_space<vmem>>, vector<2x160xf32>,
    return
  }
}

</mosaic_0001>

<llo_original>
// kernel: capsule_layer_routing.1
$region0: #{capsule_layer_routing.1}
  #allocation0 [shape = 'u32[]', space=smem, size = 0x4, offset = 0x4, fixed_abs, tag = 'smem constant byte address 0x4 - core index']
  #allocation1 [shape = 'u32[144,128]{1,0:T(1,128)}', space=vmem, size = 0x12000, scoped, tag = 'internal scratch']
  #allocation2 [shape = 'f32[2,160]{1,0:T(2,128)}', space=vmem, size = 0x800, scoped, tag = 'scratch operand']
  %s0 = inlined_call_operand.vmem [shape: f32[2,32,8], index: 0, kind: input, shape index: {}]
  %s1 = inlined_call_operand.hbm [shape: f32[8,32,160], index: 1, kind: input, shape index: {}]
  %s2 = inlined_call_operand.vmem [shape: f32[10,160], index: 2, kind: input, shape index: {}]
  %s3 = inlined_call_operand.hbm [shape: f32[160,10], index: 3, kind: input, shape index: {}]
  %s4 = inlined_call_operand.vmem [shape: f32[2,160], index: 4, kind: output, shape index: {}]
  %s5 = sld [smem:[#allocation0]]
  $region34: #{capsule_layer_routing.1} parent=0
    _
  %s7 = ssub.s32 1, %s5
  %s8 = scalar_select 0, %s7, %s5
  $region1: #{capsule_layer_routing.1} parent=0
    #allocation3 [shape = 'u8[262144]{0}', space=vmem, size = 0x40000, scoped, tag = 'input window, operand 1, single buffered']
    #allocation4 [shape = 's32[1]{0}', space=sflag, size = 0x4, scoped, tag = 'scoped memory for capsule_layer_routing.1']
    #allocation5 [shape = 'u8[81920]{0}', space=vmem, size = 0x14000, scoped, tag = 'input window, operand 3, single buffered']
    #allocation6 [shape = 's32[1]{0}', space=sflag, size = 0x4, scoped, tag = 'scoped memory for capsule_layer_routing.1']
    %9 = vsyncpa [#allocation4], 0
    %10 = vsyncpa [#allocation6], 0
    // Predicated region
    $region2: #{capsule_layer_routing.1} parent=1 // pred_check
      _
    $region3: #{capsule_layer_routing.1} parent=1 // pred_check_branch
      %12 = sbr.rel (0) target = $region5
    $region4: #{capsule_layer_routing.1} parent=1 // pred_region
      _
    $region5: #{capsule_layer_routing.1} parent=1 // pred_fallthru
      _
    // Predicated region
    $region6: #{capsule_layer_routing.1} parent=1 // pred_check
      _
    $region7: #{capsule_layer_routing.1} parent=1 // pred_check_branch
      %14 = sbr.rel (0) target = $region9
    $region8: #{capsule_layer_routing.1} parent=1 // pred_region
      %s16 = ssub.s32 8192, 8192
      %17 = vsyncadd [#allocation4], %s16
      %s18 = sshll.u32 [#allocation3], 4
      %s19 = int_to_ptr.vmem [resolvable:$true] %s18
      %24 = dma.hbm_to_vmem [thread:$0]  %s1, 8192, %s19, [#allocation4], 256, 256, 16
    $region9: #{capsule_layer_routing.1} parent=1 // pred_fallthru
      _
    // Predicated region
    $region10: #{capsule_layer_routing.1} parent=1 // pred_check
      _
    $region11: #{capsule_layer_routing.1} parent=1 // pred_check_branch
      %26 = sbr.rel (0) target = $region13
    $region12: #{capsule_layer_routing.1} parent=1 // pred_region
      _
    $region13: #{capsule_layer_routing.1} parent=1 // pred_fallthru
      _
    // Predicated region
    $region14: #{capsule_layer_routing.1} parent=1 // pred_check
      _
    $region15: #{capsule_layer_routing.1} parent=1 // pred_check_branch
      %28 = sbr.rel (0) target = $region17
    $region16: #{capsule_layer_routing.1} parent=1 // pred_region
      %s30 = ssub.s32 2560, 2560
      %31 = vsyncadd [#allocation6], %s30
      %s32 = sshll.u32 [#allocation5], 4
      %s33 = int_to_ptr.vmem [resolvable:$true] %s32
      %38 = dma.hbm_to_vmem [thread:$0]  %s3, 2560, %s33, [#allocation6], 128, 128, 8
    $region17: #{capsule_layer_routing.1} parent=1 // pred_fallthru
      _
    // Predicated region
    $region18: #{capsule_layer_routing.1} parent=1 // pred_check
      _
    $region19: #{capsule_layer_routing.1} parent=1 // pred_check_branch
      %40 = sbr.rel (0) target = $region21
    $region20: #{capsule_layer_routing.1} parent=1 // pred_region
      %41 = dma.done [#allocation4], 8192
    $region21: #{capsule_layer_routing.1} parent=1 // pred_fallthru
      _
    // Predicated region
    $region22: #{capsule_layer_routing.1} parent=1 // pred_check
      _
    $region23: #{capsule_layer_routing.1} parent=1 // pred_check_branch
      %43 = sbr.rel (0) target = $region25
    $region24: #{capsule_layer_routing.1} parent=1 // pred_region
      %44 = dma.done [#allocation6], 2560
    $region25: #{capsule_layer_routing.1} parent=1 // pred_fallthru
      _
    %v45 = vld [vmem:[%s0] sm:$0xff]
    %v46 = vld [vmem:[%s0 + $0x8] sm:$0xff]
    %v47 = vld [vmem:[%s0 + $0x10] sm:$0xff]
    %v48 = vld [vmem:[%s0 + $0x18] sm:$0xff]
    %v49 = vld [vmem:[%s0 + $0x20] sm:$0xff]
    %v50 = vld [vmem:[%s0 + $0x28] sm:$0xff]
    %v51 = vld [vmem:[%s0 + $0x30] sm:$0xff]
    %v52 = vld [vmem:[%s0 + $0x38] sm:$0xff]
    %v53 = vld [vmem:[%s2] sm:$0xff]
    %v54 = vld [vmem:[%s2 + $0x8] sm:$0xff]
    %v55 = vld [vmem:[%s2 + $0x10] sm:$0x3]
    %v56 = vld [vmem:[%s2 + $0x18] sm:$0x3]
    %v57 = vld [vmem:[#allocation5] sm:$0xff]
    %v58 = vld [vmem:[#allocation5 + $0x8] sm:$0xff]
    %v59 = vld [vmem:[#allocation5 + $0x10] sm:$0xff]
    %v60 = vld [vmem:[#allocation5 + $0x18] sm:$0xff]
    %v61 = vld [vmem:[#allocation5 + $0x20] sm:$0xff]
    %v62 = vld [vmem:[#allocation5 + $0x28] sm:$0xff]
    %v63 = vld [vmem:[#allocation5 + $0x30] sm:$0xff]
    %v64 = vld [vmem:[#allocation5 + $0x38] sm:$0xff]
    %v65 = vld [vmem:[#allocation5 + $0x40] sm:$0xff]
    %v66 = vld [vmem:[#allocation5 + $0x48] sm:$0xff]
    %v67 = vld [vmem:[#allocation5 + $0x50] sm:$0xff]
    %v68 = vld [vmem:[#allocation5 + $0x58] sm:$0xff]
    %v69 = vld [vmem:[#allocation5 + $0x60] sm:$0xff]
    %v70 = vld [vmem:[#allocation5 + $0x68] sm:$0xff]
    %v71 = vld [vmem:[#allocation5 + $0x70] sm:$0xff]
    %v72 = vld [vmem:[#allocation5 + $0x78] sm:$0xff]
    %v73 = vld [vmem:[#allocation5 + $0x80] sm:$0xff]
    %v74 = vld [vmem:[#allocation5 + $0x88] sm:$0xff]
    %v75 = vld [vmem:[#allocation5 + $0x90] sm:$0xff]
    %v76 = vld [vmem:[#allocation5 + $0x98] sm:$0xff]
    %v77 = vld [vmem:[#allocation3] sm:$0xff]
    %v78 = vld [vmem:[#allocation3 + $0x8] sm:$0xff]
    %v79 = vld [vmem:[#allocation3 + $0x10] sm:$0xff]
    %v80 = vld [vmem:[#allocation3 + $0x18] sm:$0xff]
    %v81 = vld [vmem:[#allocation3 + $0x20] sm:$0xff]
    %v82 = vld [vmem:[#allocation3 + $0x28] sm:$0xff]
    %v83 = vld [vmem:[#allocation3 + $0x30] sm:$0xff]
    %v84 = vld [vmem:[#allocation3 + $0x38] sm:$0xff]
    %86 = vset.pattern.permute.xlu0 0
    %87 = vperm.xlu0 %86, %v45
    %v88 = vpop.permute.xlu0 %87
    %91 = vset.pattern.permute.xlu0 0
    %92 = vperm.xlu0 %91, %v46
    %v93 = vpop.permute.xlu0 %92
    %96 = vset.pattern.permute.xlu0 0
    %97 = vperm.xlu0 %96, %v47
    %v98 = vpop.permute.xlu0 %97
    %101 = vset.pattern.permute.xlu0 0
    %102 = vperm.xlu0 %101, %v48
    %v103 = vpop.permute.xlu0 %102
    %v105 = vmul.f32 %v88, %v77
    %v106 = vmul.f32 %v88, %v78
    %v107 = vmul.f32 %v93, %v79
    %v108 = vmul.f32 %v93, %v80
    %v109 = vmul.f32 %v98, %v81
    %v110 = vmul.f32 %v98, %v82
    %v111 = vmul.f32 %v103, %v83
    %v112 = vmul.f32 %v103, %v84
    %114 = vset.pattern.permute.xlu0 0
    %115 = vperm.xlu0 %114, %v49
    %v116 = vpop.permute.xlu0 %115
    %119 = vset.pattern.permute.xlu0 0
    %120 = vperm.xlu0 %119, %v50
    %v121 = vpop.permute.xlu0 %120
    %124 = vset.pattern.permute.xlu0 0
    %125 = vperm.xlu0 %124, %v51
    %v126 = vpop.permute.xlu0 %125
    %129 = vset.pattern.permute.xlu0 0
    %130 = vperm.xlu0 %129, %v52
    %v131 = vpop.permute.xlu0 %130
    %v133 = vmul.f32 %v116, %v77
    %v134 = vmul.f32 %v116, %v78
    %v135 = vmul.f32 %v121, %v79
    %v136 = vmul.f32 %v121, %v80
    %v137 = vmul.f32 %v126, %v81
    %v138 = vmul.f32 %v126, %v82
    %v139 = vmul.f32 %v131, %v83
    %v140 = vmul.f32 %v131, %v84
    %s141 = scalar_lea.vmem [#allocation3], 64
    %v142 = vld [vmem:[%s141] sm:$0xff]
    %v143 = vld [vmem:[%s141 + $0x8] sm:$0xff]
    %v144 = vld [vmem:[%s141 + $0x10] sm:$0xff]
    %v145 = vld [vmem:[%s141 + $0x18] sm:$0xff]
    %v146 = vld [vmem:[%s141 + $0x20] sm:$0xff]
    %v147 = vld [vmem:[%s141 + $0x28] sm:$0xff]
    %v148 = vld [vmem:[%s141 + $0x30] sm:$0xff]
    %v149 = vld [vmem:[%s141 + $0x38] sm:$0xff]
    %150 = vset.pattern.permute.xlu0 1
    %151 = vperm.xlu0 %150, %v45
    %v152 = vpop.permute.xlu0 %151
    %154 = vset.pattern.permute.xlu0 1
    %155 = vperm.xlu0 %154, %v46
    %v156 = vpop.permute.xlu0 %155
    %158 = vset.pattern.permute.xlu0 1
    %159 = vperm.xlu0 %158, %v47
    %v160 = vpop.permute.xlu0 %159
    %162 = vset.pattern.permute.xlu0 1
    %163 = vperm.xlu0 %162, %v48
    %v164 = vpop.permute.xlu0 %163
    %v166 = vmul.f32 %v152, %v142
    %v167 = vmul.f32 %v152, %v143
    %v168 = vmul.f32 %v156, %v144
    %v169 = vmul.f32 %v156, %v145
    %v170 = vmul.f32 %v160, %v146
    %v171 = vmul.f32 %v160, %v147
    %v172 = vmul.f32 %v164, %v148
    %v173 = vmul.f32 %v164, %v149
    %v174 = vadd.f32 %v105, %v166
    %v175 = vadd.f32 %v106, %v167
    %v176 = vadd.f32 %v107, %v168
    %v177 = vadd.f32 %v108, %v169
    %v178 = vadd.f32 %v109, %v170
    %v179 = vadd.f32 %v110, %v171
    %v180 = vadd.f32 %v111, %v172
    %v181 = vadd.f32 %v112, %v173
    %182 = vset.pattern.permute.xlu0 1
    %183 = vperm.xlu0 %182, %v49
    %v184 = vpop.permute.xlu0 %183
    %186 = vset.pattern.permute.xlu0 1
    %187 = vperm.xlu0 %186, %v50
    %v188 = vpop.permute.xlu0 %187
    %190 = vset.pattern.permute.xlu0 1
    %191 = vperm.xlu0 %190, %v51
    %v192 = vpop.permute.xlu0 %191
    %194 = vset.pattern.permute.xlu0 1
    %195 = vperm.xlu0 %194, %v52
    %v196 = vpop.permute.xlu0 %195
    %v198 = vmul.f32 %v184, %v142
    %v199 = vmul.f32 %v184, %v143
    %v200 = vmul.f32 %v188, %v144
    %v201 = vmul.f32 %v188, %v145
    %v202 = vmul.f32 %v192, %v146
    %v203 = vmul.f32 %v192, %v147
    %v204 = vmul.f32 %v196, %v148
    %v205 = vmul.f32 %v196, %v149
    %v206 = vadd.f32 %v133, %v198
    %v207 = vadd.f32 %v134, %v199
    %v208 = vadd.f32 %v135, %v200
    %v209 = vadd.f32 %v136, %v201
    %v210 = vadd.f32 %v137, %v202
    %v211 = vadd.f32 %v138, %v203
    %v212 = vadd.f32 %v139, %v204
    %v213 = vadd.f32 %v140, %v205
    %s214 = scalar_lea.vmem [#allocation3], 128
    %v215 = vld [vmem:[%s214] sm:$0xff]
    %v216 = vld [vmem:[%s214 + $0x8] sm:$0xff]
    %v217 = vld [vmem:[%s214 + $0x10] sm:$0xff]
    %v218 = vld [vmem:[%s214 + $0x18] sm:$0xff]
    %v219 = vld [vmem:[%s214 + $0x20] sm:$0xff]
    %v220 = vld [vmem:[%s214 + $0x28] sm:$0xff]
    %v221 = vld [vmem:[%s214 + $0x30] sm:$0xff]
    %v222 = vld [vmem:[%s214 + $0x38] sm:$0xff]
    %223 = vset.pattern.permute.xlu0 2
    %224 = vperm.xlu0 %223, %v45
    %v225 = vpop.permute.xlu0 %224
    %227 = vset.pattern.permute.xlu0 2
    %228 = vperm.xlu0 %227, %v46
    %v229 = vpop.permute.xlu0 %228
    %231 = vset.pattern.permute.xlu0 2
    %232 = vperm.xlu0 %231, %v47
    %v233 = vpop.permute.xlu0 %232
    %235 = vset.pattern.permute.xlu0 2
    %236 = vperm.xlu0 %235, %v48
    %v237 = vpop.permute.xlu0 %236
    %v239 = vmul.f32 %v225, %v215
    %v240 = vmul.f32 %v225, %v216
    %v241 = vmul.f32 %v229, %v217
    %v242 = vmul.f32 %v229, %v218
    %v243 = vmul.f32 %v233, %v219
    %v244 = vmul.f32 %v233, %v220
    %v245 = vmul.f32 %v237, %v221
    %v246 = vmul.f32 %v237, %v222
    %v247 = vadd.f32 %v174, %v239
    %v248 = vadd.f32 %v175, %v240
    %v249 = vadd.f32 %v176, %v241
    %v250 = vadd.f32 %v177, %v242
    %v251 = vadd.f32 %v178, %v243
    %v252 = vadd.f32 %v179, %v244
    %v253 = vadd.f32 %v180, %v245
    %v254 = vadd.f32 %v181, %v246
    %255 = vset.pattern.permute.xlu0 2
    %256 = vperm.xlu0 %255, %v49
    %v257 = vpop.permute.xlu0 %256
    %259 = vset.pattern.permute.xlu0 2
    %260 = vperm.xlu0 %259, %v50
    %v261 = vpop.permute.xlu0 %260
    %263 = vset.pattern.permute.xlu0 2
    %264 = vperm.xlu0 %263, %v51
    %v265 = vpop.permute.xlu0 %264
    %267 = vset.pattern.permute.xlu0 2
    %268 = vperm.xlu0 %267, %v52
    %v269 = vpop.permute.xlu0 %268
    %v271 = vmul.f32 %v257, %v215
    %v272 = vmul.f32 %v257, %v216
    %v273 = vmul.f32 %v261, %v217
    %v274 = vmul.f32 %v261, %v218
    %v275 = vmul.f32 %v265, %v219
    %v276 = vmul.f32 %v265, %v220
    %v277 = vmul.f32 %v269, %v221
    %v278 = vmul.f32 %v269, %v222
    %v279 = vadd.f32 %v206, %v271
    %v280 = vadd.f32 %v207, %v272
    %v281 = vadd.f32 %v208, %v273
    %v282 = vadd.f32 %v209, %v274
    %v283 = vadd.f32 %v210, %v275
    %v284 = vadd.f32 %v211, %v276
    %v285 = vadd.f32 %v212, %v277
    %v286 = vadd.f32 %v213, %v278
    %s287 = scalar_lea.vmem [#allocation3], 192
    %v288 = vld [vmem:[%s287] sm:$0xff]
    %v289 = vld [vmem:[%s287 + $0x8] sm:$0xff]
    %v290 = vld [vmem:[%s287 + $0x10] sm:$0xff]
    %v291 = vld [vmem:[%s287 + $0x18] sm:$0xff]
    %v292 = vld [vmem:[%s287 + $0x20] sm:$0xff]
    %v293 = vld [vmem:[%s287 + $0x28] sm:$0xff]
    %v294 = vld [vmem:[%s287 + $0x30] sm:$0xff]
    %v295 = vld [vmem:[%s287 + $0x38] sm:$0xff]
    %296 = vset.pattern.permute.xlu0 3
    %297 = vperm.xlu0 %296, %v45
    %v298 = vpop.permute.xlu0 %297
    %300 = vset.pattern.permute.xlu0 3
    %301 = vperm.xlu0 %300, %v46
    %v302 = vpop.permute.xlu0 %301
    %304 = vset.pattern.permute.xlu0 3
    %305 = vperm.xlu0 %304, %v47
    %v306 = vpop.permute.xlu0 %305
    %308 = vset.pattern.permute.xlu0 3
    %309 = vperm.xlu0 %308, %v48
    %v310 = vpop.permute.xlu0 %309
    %v312 = vmul.f32 %v298, %v288
    %v313 = vmul.f32 %v298, %v289
    %v314 = vmul.f32 %v302, %v290
    %v315 = vmul.f32 %v302, %v291
    %v316 = vmul.f32 %v306, %v292
    %v317 = vmul.f32 %v306, %v293
    %v318 = vmul.f32 %v310, %v294
    %v319 = vmul.f32 %v310, %v295
    %v320 = vadd.f32 %v247, %v312
    %v321 = vadd.f32 %v248, %v313
    %v322 = vadd.f32 %v249, %v314
    %v323 = vadd.f32 %v250, %v315
    %v324 = vadd.f32 %v251, %v316
    %v325 = vadd.f32 %v252, %v317
    %v326 = vadd.f32 %v253, %v318
    %v327 = vadd.f32 %v254, %v319
    %328 = vset.pattern.permute.xlu0 3
    %329 = vperm.xlu0 %328, %v49
    %v330 = vpop.permute.xlu0 %329
    %332 = vset.pattern.permute.xlu0 3
    %333 = vperm.xlu0 %332, %v50
    %v334 = vpop.permute.xlu0 %333
    %336 = vset.pattern.permute.xlu0 3
    %337 = vperm.xlu0 %336, %v51
    %v338 = vpop.permute.xlu0 %337
    %340 = vset.pattern.permute.xlu0 3
    %341 = vperm.xlu0 %340, %v52
    %v342 = vpop.permute.xlu0 %341
    %v344 = vmul.f32 %v330, %v288
    %v345 = vmul.f32 %v330, %v289
    %v346 = vmul.f32 %v334, %v290
    %v347 = vmul.f32 %v334, %v291
    %v348 = vmul.f32 %v338, %v292
    %v349 = vmul.f32 %v338, %v293
    %v350 = vmul.f32 %v342, %v294
    %v351 = vmul.f32 %v342, %v295
    %v352 = vadd.f32 %v279, %v344
    %v353 = vadd.f32 %v280, %v345
    %v354 = vadd.f32 %v281, %v346
    %v355 = vadd.f32 %v282, %v347
    %v356 = vadd.f32 %v283, %v348
    %v357 = vadd.f32 %v284, %v349
    %v358 = vadd.f32 %v285, %v350
    %v359 = vadd.f32 %v286, %v351
    %s360 = scalar_lea.vmem [#allocation3], 256
    %v361 = vld [vmem:[%s360] sm:$0xff]
    %v362 = vld [vmem:[%s360 + $0x8] sm:$0xff]
    %v363 = vld [vmem:[%s360 + $0x10] sm:$0xff]
    %v364 = vld [vmem:[%s360 + $0x18] sm:$0xff]
    %v365 = vld [vmem:[%s360 + $0x20] sm:$0xff]
    %v366 = vld [vmem:[%s360 + $0x28] sm:$0xff]
    %v367 = vld [vmem:[%s360 + $0x30] sm:$0xff]
    %v368 = vld [vmem:[%s360 + $0x38] sm:$0xff]
    %369 = vset.pattern.permute.xlu0 4
    %370 = vperm.xlu0 %369, %v45
    %v371 = vpop.permute.xlu0 %370
    %373 = vset.pattern.permute.xlu0 4
    %374 = vperm.xlu0 %373, %v46
    %v375 = vpop.permute.xlu0 %374
    %377 = vset.pattern.permute.xlu0 4
    %378 = vperm.xlu0 %377, %v47
    %v379 = vpop.permute.xlu0 %378
    %381 = vset.pattern.permute.xlu0 4
    %382 = vperm.xlu0 %381, %v48
    %v383 = vpop.permute.xlu0 %382
    %v385 = vmul.f32 %v371, %v361
    %v386 = vmul.f32 %v371, %v362
    %v387 = vmul.f32 %v375, %v363
    %v388 = vmul.f32 %v375, %v364
    %v389 = vmul.f32 %v379, %v365
    %v390 = vmul.f32 %v379, %v366
    %v391 = vmul.f32 %v383, %v367
    %v392 = vmul.f32 %v383, %v368
    %v393 = vadd.f32 %v320, %v385
    %v394 = vadd.f32 %v321, %v386
    %v395 = vadd.f32 %v322, %v387
    %v396 = vadd.f32 %v323, %v388
    %v397 = vadd.f32 %v324, %v389
    %v398 = vadd.f32 %v325, %v390
    %v399 = vadd.f32 %v326, %v391
    %v400 = vadd.f32 %v327, %v392
    %401 = vset.pattern.permute.xlu0 4
    %402 = vperm.xlu0 %401, %v49
    %v403 = vpop.permute.xlu0 %402
    %405 = vset.pattern.permute.xlu0 4
    %406 = vperm.xlu0 %405, %v50
    %v407 = vpop.permute.xlu0 %406
    %409 = vset.pattern.permute.xlu0 4
    %410 = vperm.xlu0 %409, %v51
    %v411 = vpop.permute.xlu0 %410
    %413 = vset.pattern.permute.xlu0 4
    %414 = vperm.xlu0 %413, %v52
    %v415 = vpop.permute.xlu0 %414
    %v417 = vmul.f32 %v403, %v361
    %v418 = vmul.f32 %v403, %v362
    %v419 = vmul.f32 %v407, %v363
    %v420 = vmul.f32 %v407, %v364
    %v421 = vmul.f32 %v411, %v365
    %v422 = vmul.f32 %v411, %v366
    %v423 = vmul.f32 %v415, %v367
    %v424 = vmul.f32 %v415, %v368
    %v425 = vadd.f32 %v352, %v417
    %v426 = vadd.f32 %v353, %v418
    %v427 = vadd.f32 %v354, %v419
    %v428 = vadd.f32 %v355, %v420
    %v429 = vadd.f32 %v356, %v421
    %v430 = vadd.f32 %v357, %v422
    %v431 = vadd.f32 %v358, %v423
    %v432 = vadd.f32 %v359, %v424
    %s433 = scalar_lea.vmem [#allocation3], 320
    %v434 = vld [vmem:[%s433] sm:$0xff]
    %v435 = vld [vmem:[%s433 + $0x8] sm:$0xff]
    %v436 = vld [vmem:[%s433 + $0x10] sm:$0xff]
    %v437 = vld [vmem:[%s433 + $0x18] sm:$0xff]
    %v438 = vld [vmem:[%s433 + $0x20] sm:$0xff]
    %v439 = vld [vmem:[%s433 + $0x28] sm:$0xff]
    %v440 = vld [vmem:[%s433 + $0x30] sm:$0xff]
    %v441 = vld [vmem:[%s433 + $0x38] sm:$0xff]
    %442 = vset.pattern.permute.xlu0 5
    %443 = vperm.xlu0 %442, %v45
    %v444 = vpop.permute.xlu0 %443
    %446 = vset.pattern.permute.xlu0 5
    %447 = vperm.xlu0 %446, %v46
    %v448 = vpop.permute.xlu0 %447
    %450 = vset.pattern.permute.xlu0 5
    %451 = vperm.xlu0 %450, %v47
    %v452 = vpop.permute.xlu0 %451
    %454 = vset.pattern.permute.xlu0 5
    %455 = vperm.xlu0 %454, %v48
    %v456 = vpop.permute.xlu0 %455
    %v458 = vmul.f32 %v444, %v434
    %v459 = vmul.f32 %v444, %v435
    %v460 = vmul.f32 %v448, %v436
    %v461 = vmul.f32 %v448, %v437
    %v462 = vmul.f32 %v452, %v438
    %v463 = vmul.f32 %v452, %v439
    %v464 = vmul.f32 %v456, %v440
    %v465 = vmul.f32 %v456, %v441
    %v466 = vadd.f32 %v393, %v458
    %v467 = vadd.f32 %v394, %v459
    %v468 = vadd.f32 %v395, %v460
    %v469 = vadd.f32 %v396, %v461
    %v470 = vadd.f32 %v397, %v462
    %v471 = vadd.f32 %v398, %v463
    %v472 = vadd.f32 %v399, %v464
    %v473 = vadd.f32 %v400, %v465
    %474 = vset.pattern.permute.xlu0 5
    %475 = vperm.xlu0 %474, %v49
    %v476 = vpop.permute.xlu0 %475
    %478 = vset.pattern.permute.xlu0 5
    %479 = vperm.xlu0 %478, %v50
    %v480 = vpop.permute.xlu0 %479
    %482 = vset.pattern.permute.xlu0 5
    %483 = vperm.xlu0 %482, %v51
    %v484 = vpop.permute.xlu0 %483
    %486 = vset.pattern.permute.xlu0 5
    %487 = vperm.xlu0 %486, %v52
    %v488 = vpop.permute.xlu0 %487
    %v490 = vmul.f32 %v476, %v434
    %v491 = vmul.f32 %v476, %v435
    %v492 = vmul.f32 %v480, %v436
    %v493 = vmul.f32 %v480, %v437
    %v494 = vmul.f32 %v484, %v438
    %v495 = vmul.f32 %v484, %v439
    %v496 = vmul.f32 %v488, %v440
    %v497 = vmul.f32 %v488, %v441
    %v498 = vadd.f32 %v425, %v490
    %v499 = vadd.f32 %v426, %v491
    %v500 = vadd.f32 %v427, %v492
    %v501 = vadd.f32 %v428, %v493
    %v502 = vadd.f32 %v429, %v494
    %v503 = vadd.f32 %v430, %v495
    %v504 = vadd.f32 %v431, %v496
    %v505 = vadd.f32 %v432, %v497
    %s506 = scalar_lea.vmem [#allocation3], 384
    %v507 = vld [vmem:[%s506] sm:$0xff]
    %v508 = vld [vmem:[%s506 + $0x8] sm:$0xff]
    %v509 = vld [vmem:[%s506 + $0x10] sm:$0xff]
    %v510 = vld [vmem:[%s506 + $0x18] sm:$0xff]
    %v511 = vld [vmem:[%s506 + $0x20] sm:$0xff]
    %v512 = vld [vmem:[%s506 + $0x28] sm:$0xff]
    %v513 = vld [vmem:[%s506 + $0x30] sm:$0xff]
    %v514 = vld [vmem:[%s506 + $0x38] sm:$0xff]
    %515 = vset.pattern.permute.xlu0 6
    %516 = vperm.xlu0 %515, %v45
    %v517 = vpop.permute.xlu0 %516
    %519 = vset.pattern.permute.xlu0 6
    %520 = vperm.xlu0 %519, %v46
    %v521 = vpop.permute.xlu0 %520
    %523 = vset.pattern.permute.xlu0 6
    %524 = vperm.xlu0 %523, %v47
    %v525 = vpop.permute.xlu0 %524
    %527 = vset.pattern.permute.xlu0 6
    %528 = vperm.xlu0 %527, %v48
    %v529 = vpop.permute.xlu0 %528
    %v531 = vmul.f32 %v517, %v507
    %v532 = vmul.f32 %v517, %v508
    %v533 = vmul.f32 %v521, %v509
    %v534 = vmul.f32 %v521, %v510
    %v535 = vmul.f32 %v525, %v511
    %v536 = vmul.f32 %v525, %v512
    %v537 = vmul.f32 %v529, %v513
    %v538 = vmul.f32 %v529, %v514
    %v539 = vadd.f32 %v466, %v531
    %v540 = vadd.f32 %v467, %v532
    %v541 = vadd.f32 %v468, %v533
    %v542 = vadd.f32 %v469, %v534
    %v543 = vadd.f32 %v470, %v535
    %v544 = vadd.f32 %v471, %v536
    %v545 = vadd.f32 %v472, %v537
    %v546 = vadd.f32 %v473, %v538
    %547 = vset.pattern.permute.xlu0 6
    %548 = vperm.xlu0 %547, %v49
    %v549 = vpop.permute.xlu0 %548
    %551 = vset.pattern.permute.xlu0 6
    %552 = vperm.xlu0 %551, %v50
    %v553 = vpop.permute.xlu0 %552
    %555 = vset.pattern.permute.xlu0 6
    %556 = vperm.xlu0 %555, %v51
    %v557 = vpop.permute.xlu0 %556
    %559 = vset.pattern.permute.xlu0 6
    %560 = vperm.xlu0 %559, %v52
    %v561 = vpop.permute.xlu0 %560
    %v563 = vmul.f32 %v549, %v507
    %v564 = vmul.f32 %v549, %v508
    %v565 = vmul.f32 %v553, %v509
    %v566 = vmul.f32 %v553, %v510
    %v567 = vmul.f32 %v557, %v511
    %v568 = vmul.f32 %v557, %v512
    %v569 = vmul.f32 %v561, %v513
    %v570 = vmul.f32 %v561, %v514
    %v571 = vadd.f32 %v498, %v563
    %v572 = vadd.f32 %v499, %v564
    %v573 = vadd.f32 %v500, %v565
    %v574 = vadd.f32 %v501, %v566
    %v575 = vadd.f32 %v502, %v567
    %v576 = vadd.f32 %v503, %v568
    %v577 = vadd.f32 %v504, %v569
    %v578 = vadd.f32 %v505, %v570
    %s579 = scalar_lea.vmem [#allocation3], 448
    %v580 = vld [vmem:[%s579] sm:$0xff]
    %v581 = vld [vmem:[%s579 + $0x8] sm:$0xff]
    %v582 = vld [vmem:[%s579 + $0x10] sm:$0xff]
    %v583 = vld [vmem:[%s579 + $0x18] sm:$0xff]
    %v584 = vld [vmem:[%s579 + $0x20] sm:$0xff]
    %v585 = vld [vmem:[%s579 + $0x28] sm:$0xff]
    %v586 = vld [vmem:[%s579 + $0x30] sm:$0xff]
    %v587 = vld [vmem:[%s579 + $0x38] sm:$0xff]
    %588 = vset.pattern.permute.xlu0 7
    %589 = vperm.xlu0 %588, %v45
    %v590 = vpop.permute.xlu0 %589
    %592 = vset.pattern.permute.xlu0 7
    %593 = vperm.xlu0 %592, %v46
    %v594 = vpop.permute.xlu0 %593
    %596 = vset.pattern.permute.xlu0 7
    %597 = vperm.xlu0 %596, %v47
    %v598 = vpop.permute.xlu0 %597
    %600 = vset.pattern.permute.xlu0 7
    %601 = vperm.xlu0 %600, %v48
    %v602 = vpop.permute.xlu0 %601
    %v604 = vmul.f32 %v590, %v580
    %v605 = vmul.f32 %v590, %v581
    %v606 = vmul.f32 %v594, %v582
    %v607 = vmul.f32 %v594, %v583
    %v608 = vmul.f32 %v598, %v584
    %v609 = vmul.f32 %v598, %v585
    %v610 = vmul.f32 %v602, %v586
    %v611 = vmul.f32 %v602, %v587
    %v612 = vadd.f32 %v539, %v604
    %v613 = vadd.f32 %v540, %v605
    %v614 = vadd.f32 %v541, %v606
    %v615 = vadd.f32 %v542, %v607
    %v616 = vadd.f32 %v543, %v608
    %v617 = vadd.f32 %v544, %v609
    %v618 = vadd.f32 %v545, %v610
    %v619 = vadd.f32 %v546, %v611
    %620 = vset.pattern.permute.xlu0 7
    %621 = vperm.xlu0 %620, %v49
    %v622 = vpop.permute.xlu0 %621
    %624 = vset.pattern.permute.xlu0 7
    %625 = vperm.xlu0 %624, %v50
    %v626 = vpop.permute.xlu0 %625
    %628 = vset.pattern.permute.xlu0 7
    %629 = vperm.xlu0 %628, %v51
    %v630 = vpop.permute.xlu0 %629
    %632 = vset.pattern.permute.xlu0 7
    %633 = vperm.xlu0 %632, %v52
    %v634 = vpop.permute.xlu0 %633
    %v636 = vmul.f32 %v622, %v580
    %v637 = vmul.f32 %v622, %v581
    %v638 = vmul.f32 %v626, %v582
    %v639 = vmul.f32 %v626, %v583
    %v640 = vmul.f32 %v630, %v584
    %v641 = vmul.f32 %v630, %v585
    %v642 = vmul.f32 %v634, %v586
    %v643 = vmul.f32 %v634, %v587
    %v644 = vadd.f32 %v571, %v636
    %v645 = vadd.f32 %v572, %v637
    %v646 = vadd.f32 %v573, %v638
    %v647 = vadd.f32 %v574, %v639
    %v648 = vadd.f32 %v575, %v640
    %v649 = vadd.f32 %v576, %v641
    %v650 = vadd.f32 %v577, %v642
    %v651 = vadd.f32 %v578, %v643
    %v652 = vmul.f32 %v612, 0.1
    %v653 = vmul.f32 %v613, 0.1
    %v654 = vmul.f32 %v614, 0.1
    %v655 = vmul.f32 %v615, 0.1
    %v656 = vmul.f32 %v616, 0.1
    %v657 = vmul.f32 %v617, 0.1
    %v658 = vmul.f32 %v618, 0.1
    %v659 = vmul.f32 %v619, 0.1
    %v660 = vadd.f32 %v652, %v654
    %v661 = vadd.f32 %v660, %v656
    %v662 = vadd.f32 %v661, %v658
    %v663 = vrot.slane %v662, 4
    %v664 = vadd.f32 %v662, %v663
    %v665 = vrot.slane %v664, 2
    %v666 = vadd.f32 %v664, %v665
    %v667 = vrot.slane %v666, 1
    %v668 = vadd.f32 %v666, %v667
    %vm669 = vcmask 261120
    %v670 = vsel %vm669, %v653, 0.0
    %v671 = vsel %vm669, %v655, 0.0
    %v672 = vadd.f32 %v670, %v671
    %v673 = vsel %vm669, %v657, 0.0
    %v674 = vadd.f32 %v672, %v673
    %v675 = vsel %vm669, %v659, 0.0
    %v676 = vadd.f32 %v674, %v675
    %v677 = vrot.slane %v676, 4
    %v678 = vadd.f32 %v676, %v677
    %v679 = vrot.slane %v678, 2
    %v680 = vadd.f32 %v678, %v679
    %v681 = vrot.slane %v680, 1
    %v682 = vadd.f32 %v680, %v681
    %v685 = vcombine.low %v668, %v682
    %v687 = vunpack.c.l.s4 1966171168
    %v688 = vunpack.c.0.s8 %v687
    %v689 = vlaneseq
    %v690 = vshrl.u32 %v689, 7
    %v691 = vsub.s32 %v688, %v690
    %v692 = vrot.slane %v685, %v691
    %v694 = vunpack.c.l.s4 1966171168
    %v695 = vunpack.c.0.s8 %v694
    %v696 = vlaneseq
    %v697 = vshrl.u32 %v696, 7
    %v698 = vsub.s32 %v695, %v697
    %v699 = vrot.slane %v692, %v698
    %v701 = vlaneseq
    %vm702 = vcmp.ge.s32.totalorder %v701, 0
    %vm703 = vcmp.lt.s32.totalorder %v701, 160
    %vm704 = vmand %vm702, %vm703
    %705 = vst.msk [vmem:[#allocation2] ss:$2 sm:$0x3] %vm704, %v699
    %v706 = vmul.f32 %v644, 0.1
    %v707 = vmul.f32 %v645, 0.1
    %v708 = vmul.f32 %v646, 0.1
    %v709 = vmul.f32 %v647, 0.1
    %v710 = vmul.f32 %v648, 0.1
    %v711 = vmul.f32 %v649, 0.1
    %v712 = vmul.f32 %v650, 0.1
    %v713 = vmul.f32 %v651, 0.1
    %v714 = vadd.f32 %v706, %v708
    %v715 = vadd.f32 %v714, %v710
    %v716 = vadd.f32 %v715, %v712
    %v717 = vrot.slane %v716, 4
    %v718 = vadd.f32 %v716, %v717
    %v719 = vrot.slane %v718, 2
    %v720 = vadd.f32 %v718, %v719
    %v721 = vrot.slane %v720, 1
    %v722 = vadd.f32 %v720, %v721
    %v723 = vsel %vm669, %v707, 0.0
    %v724 = vsel %vm669, %v709, 0.0
    %v725 = vadd.f32 %v723, %v724
    %v726 = vsel %vm669, %v711, 0.0
    %v727 = vadd.f32 %v725, %v726
    %v728 = vsel %vm669, %v713, 0.0
    %v729 = vadd.f32 %v727, %v728
    %v730 = vrot.slane %v729, 4
    %v731 = vadd.f32 %v729, %v730
    %v732 = vrot.slane %v731, 2
    %v733 = vadd.f32 %v731, %v732
    %v734 = vrot.slane %v733, 1
    %v735 = vadd.f32 %v733, %v734
    %v738 = vcombine.low %v722, %v735
    %v740 = vunpack.c.l.s4 1966171168
    %v741 = vunpack.c.0.s8 %v740
    %v742 = vlaneseq
    %v743 = vshrl.u32 %v742, 7
    %v744 = vsub.s32 %v741, %v743
    %v745 = vrot.slane %v738, %v744
    %v747 = vunpack.c.l.s4 1966171168
    %v748 = vunpack.c.0.s8 %v747
    %v749 = vlaneseq
    %v750 = vshrl.u32 %v749, 7
    %v751 = vsub.s32 %v748, %v750
    %v752 = vrot.slane %v745, %v751
    %s754 = scalar_lea.vmem [#allocation2], 1
    %755 = vst.msk [vmem:[%s754] ss:$2 sm:$0x3] %vm704, %v752
    %v756 = vld [vmem:[#allocation2] sm:$0xf]
    %v757 = vmul.f32 %v756, %v756
    %v760 = vunpack.c.l.s4 1983009808
    %v761 = vunpack.c.0.s8 %v760
    %v762 = vlaneseq
    %v763 = vshrl.u32 %v762, 7
    %v764 = vsub.s32 %v761, %v763
    %v765 = vrot.slane %v757, %v764
    %v766 = vcombine.high %v765, %v765
    %v768 = vsel %vm669, %v766, 0
    %770 = vmatprep.subr.mxu0 0.0
    %v771 = vand.u32 %v72, 4294901760
    %772 = vmatpush1.msra.mxu0 %v771
    %773 = vmatprep.subr.mxu0 0.0
    %v774 = vand.u32 %v71, 4294901760
    %775 = vmatpush1.msra.mxu0 %v774
    %776 = vmatprep.subr.mxu0 0.0
    %v777 = vand.u32 %v70, 4294901760
    %778 = vmatpush1.msra.mxu0 %v777
    %779 = vmatprep.subr.mxu0 0.0
    %v780 = vand.u32 %v69, 4294901760
    %781 = vmatpush1.msra.mxu0 %v780
    %782 = vmatprep.subr.mxu0 0.0
    %v783 = vand.u32 %v68, 4294901760
    %784 = vmatpush1.msra.mxu0 %v783
    %785 = vmatprep.subr.mxu0 0.0
    %v786 = vand.u32 %v67, 4294901760
    %787 = vmatpush1.msra.mxu0 %v786
    %788 = vmatprep.subr.mxu0 0.0
    %v789 = vand.u32 %v66, 4294901760
    %790 = vmatpush1.msra.mxu0 %v789
    %791 = vmatprep.subr.mxu0 0.0
    %v792 = vand.u32 %v65, 4294901760
    %793 = vmatpush1.msra.mxu0 %v792
    %794 = vmatprep.subr.mxu0 0.0
    %v795 = vand.u32 %v64, 4294901760
    %796 = vmatpush1.msra.mxu0 %v795
    %797 = vmatprep.subr.mxu0 0.0
    %v798 = vand.u32 %v63, 4294901760
    %799 = vmatpush1.msra.mxu0 %v798
    %800 = vmatprep.subr.mxu0 0.0
    %v801 = vand.u32 %v62, 4294901760
    %802 = vmatpush1.msra.mxu0 %v801
    %803 = vmatprep.subr.mxu0 0.0
    %v804 = vand.u32 %v61, 4294901760
    %805 = vmatpush1.msra.mxu0 %v804
    %806 = vmatprep.subr.mxu0 0.0
    %v807 = vand.u32 %v60, 4294901760
    %808 = vmatpush1.msra.mxu0 %v807
    %809 = vmatprep.subr.mxu0 0.0
    %v810 = vand.u32 %v59, 4294901760
    %811 = vmatpush1.msra.mxu0 %v810
    %812 = vmatprep.subr.mxu0 0.0
    %v813 = vand.u32 %v58, 4294901760
    %814 = vmatpush1.msra.mxu0 %v813
    %815 = vmatprep.subr.mxu0 0.0
    %v816 = vand.u32 %v57, 4294901760
    %817 = vmatpush1.msra.mxu0 %v816
    %818 = vmatprep.subr.mxu0 0.0
    %819 = vmatpush2.msra.mxu0 0.0
    %820 = vmatprep.subr.mxu0 0.0
    %821 = vmatpush2.msra.mxu0 0.0
    %822 = vmatprep.subr.mxu0 0.0
    %823 = vmatpush2.msra.mxu0 0.0
    %824 = vmatprep.subr.mxu0 0.0
    %825 = vmatpush2.msra.mxu0 0.0
    %826 = vmatprep.subr.mxu0 0.0
    %827 = vmatpush2.msra.mxu0 0.0
    %828 = vmatprep.subr.mxu0 0.0
    %829 = vmatpush2.msra.mxu0 0.0
    %830 = vmatprep.subr.mxu0 0.0
    %831 = vmatpush2.msra.mxu0 0.0
    %832 = vmatprep.subr.mxu0 0.0
    %833 = vmatpush2.msra.mxu0 0.0
    %834 = vmatprep.subr.mxu0 0.0
    %835 = vmatpush2.msra.mxu0 0.0
    %836 = vmatprep.subr.mxu0 0.0
    %837 = vmatpush2.msra.mxu0 0.0
    %838 = vmatprep.subr.mxu0 0.0
    %839 = vmatpush2.msra.mxu0 0.0
    %840 = vmatprep.subr.mxu0 0.0
    %841 = vmatpush2.msra.mxu0 0.0
    %842 = vmatprep.subr.mxu0 0.0
    %v843 = vand.u32 %v76, 4294901760
    %844 = vmatpush2.msra.mxu0 %v843
    %845 = vmatprep.subr.mxu0 0.0
    %v846 = vand.u32 %v75, 4294901760
    %847 = vmatpush2.msra.mxu0 %v846
    %848 = vmatprep.subr.mxu0 0.0
    %v849 = vand.u32 %v74, 4294901760
    %850 = vmatpush2.msra.mxu0 %v849
    %851 = vmatprep.subr.mxu0 0.0
    %v852 = vand.u32 %v73, 4294901760
    %853 = vmatpush2.msra.mxu0 %v852
    %v854 = vand.u32 %v768, 4294901760
    %v855 = vsub.f32 %v768, %v854
    %v856 = vand.u32 %v855, 4294901760
    %v857 = vsub.f32 %v855, %v856
    %v858 = vand.u32 %v857, 4294901760
    %859 = vmatprep.mubr.f32.mxu0 %v858
    %v860 = vand.u32 %v765, 4294901760
    %v861 = vsub.f32 %v765, %v860
    %v862 = vand.u32 %v861, 4294901760
    %v863 = vsub.f32 %v861, %v862
    %v864 = vand.u32 %v863, 4294901760
    %865 = vmatmul.mubr.f32.gmra.mxu0 %v864
    %v866 = vpop.f32.mrf.mxu0
    %v867 = vadd.f32 0.0, %v866
    %v868 = vpop.f32.mrf.mxu0
    %869 = vdwg.mxu0
    %870 = vmatprep.subr.mxu0 0.0
    %v871 = vand.u32 %v72, 4294901760
    %v872 = vsub.f32 %v72, %v871
    %v873 = vand.u32 %v872, 4294901760
    %v874 = vsub.f32 %v872, %v873
    %v875 = vand.u32 %v874, 4294901760
    %876 = vmatpush1.msra.mxu0 %v875
    %877 = vmatprep.subr.mxu0 0.0
    %v878 = vand.u32 %v71, 4294901760
    %v879 = vsub.f32 %v71, %v878
    %v880 = vand.u32 %v879, 4294901760
    %v881 = vsub.f32 %v879, %v880
    %v882 = vand.u32 %v881, 4294901760
    %883 = vmatpush1.msra.mxu0 %v882
    %884 = vmatprep.subr.mxu0 0.0
    %v885 = vand.u32 %v70, 4294901760
    %v886 = vsub.f32 %v70, %v885
    %v887 = vand.u32 %v886, 4294901760
    %v888 = vsub.f32 %v886, %v887
    %v889 = vand.u32 %v888, 4294901760
    %890 = vmatpush1.msra.mxu0 %v889
    %891 = vmatprep.subr.mxu0 0.0
    %v892 = vand.u32 %v69, 4294901760
    %v893 = vsub.f32 %v69, %v892
    %v894 = vand.u32 %v893, 4294901760
    %v895 = vsub.f32 %v893, %v894
    %v896 = vand.u32 %v895, 4294901760
    %897 = vmatpush1.msra.mxu0 %v896
    %898 = vmatprep.subr.mxu0 0.0
    %v899 = vand.u32 %v68, 4294901760
    %v900 = vsub.f32 %v68, %v899
    %v901 = vand.u32 %v900, 4294901760
    %v902 = vsub.f32 %v900, %v901
    %v903 = vand.u32 %v902, 4294901760
    %904 = vmatpush1.msra.mxu0 %v903
    %905 = vmatprep.subr.mxu0 0.0
    %v906 = vand.u32 %v67, 4294901760
    %v907 = vsub.f32 %v67, %v906
    %v908 = vand.u32 %v907, 4294901760
    %v909 = vsub.f32 %v907, %v908
    %v910 = vand.u32 %v909, 4294901760
    %911 = vmatpush1.msra.mxu0 %v910
    %912 = vmatprep.subr.mxu0 0.0
    %v913 = vand.u32 %v66, 4294901760
    %v914 = vsub.f32 %v66, %v913
    %v915 = vand.u32 %v914, 4294901760
    %v916 = vsub.f32 %v914, %v915
    %v917 = vand.u32 %v916, 4294901760
    %918 = vmatpush1.msra.mxu0 %v917
    %919 = vmatprep.subr.mxu0 0.0
    %v920 = vand.u32 %v65, 4294901760
    %v921 = vsub.f32 %v65, %v920
    %v922 = vand.u32 %v921, 4294901760
    %v923 = vsub.f32 %v921, %v922
    %v924 = vand.u32 %v923, 4294901760
    %925 = vmatpush1.msra.mxu0 %v924
    %926 = vmatprep.subr.mxu0 0.0
    %v927 = vand.u32 %v64, 4294901760
    %v928 = vsub.f32 %v64, %v927
    %v929 = vand.u32 %v928, 4294901760
    %v930 = vsub.f32 %v928, %v929
    %v931 = vand.u32 %v930, 4294901760
    %932 = vmatpush1.msra.mxu0 %v931
    %933 = vmatprep.subr.mxu0 0.0
    %v934 = vand.u32 %v63, 4294901760
    %v935 = vsub.f32 %v63, %v934
    %v936 = vand.u32 %v935, 4294901760
    %v937 = vsub.f32 %v935, %v936
    %v938 = vand.u32 %v937, 4294901760
    %939 = vmatpush1.msra.mxu0 %v938
    %940 = vmatprep.subr.mxu0 0.0
    %v941 = vand.u32 %v62, 4294901760
    %v942 = vsub.f32 %v62, %v941
    %v943 = vand.u32 %v942, 4294901760
    %v944 = vsub.f32 %v942, %v943
    %v945 = vand.u32 %v944, 4294901760
    %946 = vmatpush1.msra.mxu0 %v945
    %947 = vmatprep.subr.mxu0 0.0
    %v948 = vand.u32 %v61, 4294901760
    %v949 = vsub.f32 %v61, %v948
    %v950 = vand.u32 %v949, 4294901760
    %v951 = vsub.f32 %v949, %v950
    %v952 = vand.u32 %v951, 4294901760
    %953 = vmatpush1.msra.mxu0 %v952
    %954 = vmatprep.subr.mxu0 0.0
    %v955 = vand.u32 %v60, 4294901760
    %v956 = vsub.f32 %v60, %v955
    %v957 = vand.u32 %v956, 4294901760
    %v958 = vsub.f32 %v956, %v957
    %v959 = vand.u32 %v958, 4294901760
    %960 = vmatpush1.msra.mxu0 %v959
    %961 = vmatprep.subr.mxu0 0.0
    %v962 = vand.u32 %v59, 4294901760
    %v963 = vsub.f32 %v59, %v962
    %v964 = vand.u32 %v963, 4294901760
    %v965 = vsub.f32 %v963, %v964
    %v966 = vand.u32 %v965, 4294901760
    %967 = vmatpush1.msra.mxu0 %v966
    %968 = vmatprep.subr.mxu0 0.0
    %v969 = vand.u32 %v58, 4294901760
    %v970 = vsub.f32 %v58, %v969
    %v971 = vand.u32 %v970, 4294901760
    %v972 = vsub.f32 %v970, %v971
    %v973 = vand.u32 %v972, 4294901760
    %974 = vmatpush1.msra.mxu0 %v973
    %975 = vmatprep.subr.mxu0 0.0
    %v976 = vand.u32 %v57, 4294901760
    %v977 = vsub.f32 %v57, %v976
    %v978 = vand.u32 %v977, 4294901760
    %v979 = vsub.f32 %v977, %v978
    %v980 = vand.u32 %v979, 4294901760
    %981 = vmatpush1.msra.mxu0 %v980
    %982 = vmatprep.subr.mxu0 0.0
    %983 = vmatpush2.msra.mxu0 0.0
    %984 = vmatprep.subr.mxu0 0.0
    %985 = vmatpush2.msra.mxu0 0.0
    %986 = vmatprep.subr.mxu0 0.0
    %987 = vmatpush2.msra.mxu0 0.0
    %988 = vmatprep.subr.mxu0 0.0
    %989 = vmatpush2.msra.mxu0 0.0
    %990 = vmatprep.subr.mxu0 0.0
    %991 = vmatpush2.msra.mxu0 0.0
    %992 = vmatprep.subr.mxu0 0.0
    %993 = vmatpush2.msra.mxu0 0.0
    %994 = vmatprep.subr.mxu0 0.0
    %995 = vmatpush2.msra.mxu0 0.0
    %996 = vmatprep.subr.mxu0 0.0
    %997 = vmatpush2.msra.mxu0 0.0
    %998 = vmatprep.subr.mxu0 0.0
    %999 = vmatpush2.msra.mxu0 0.0
    %1000 = vmatprep.subr.mxu0 0.0
    %1001 = vmatpush2.msra.mxu0 0.0
    %1002 = vmatprep.subr.mxu0 0.0
    %1003 = vmatpush2.msra.mxu0 0.0
    %1004 = vmatprep.subr.mxu0 0.0
    %1005 = vmatpush2.msra.mxu0 0.0
    %1006 = vmatprep.subr.mxu0 0.0
    %v1007 = vand.u32 %v76, 4294901760
    %v1008 = vsub.f32 %v76, %v1007
    %v1009 = vand.u32 %v1008, 4294901760
    %v1010 = vsub.f32 %v1008, %v1009
    %v1011 = vand.u32 %v1010, 4294901760
    %1012 = vmatpush2.msra.mxu0 %v1011
    %1013 = vmatprep.subr.mxu0 0.0
    %v1014 = vand.u32 %v75, 4294901760
    %v1015 = vsub.f32 %v75, %v1014
    %v1016 = vand.u32 %v1015, 4294901760
    %v1017 = vsub.f32 %v1015, %v1016
    %v1018 = vand.u32 %v1017, 4294901760
    %1019 = vmatpush2.msra.mxu0 %v1018
    %1020 = vmatprep.subr.mxu0 0.0
    %v1021 = vand.u32 %v74, 4294901760
    %v1022 = vsub.f32 %v74, %v1021
    %v1023 = vand.u32 %v1022, 4294901760
    %v1024 = vsub.f32 %v1022, %v1023
    %v1025 = vand.u32 %v1024, 4294901760
    %1026 = vmatpush2.msra.mxu0 %v1025
    %1027 = vmatprep.subr.mxu0 0.0
    %v1028 = vand.u32 %v73, 4294901760
    %v1029 = vsub.f32 %v73, %v1028
    %v1030 = vand.u32 %v1029, 4294901760
    %v1031 = vsub.f32 %v1029, %v1030
    %v1032 = vand.u32 %v1031, 4294901760
    %1033 = vmatpush2.msra.mxu0 %v1032
    %v1034 = vand.u32 %v768, 4294901760
    %1035 = vmatprep.mubr.f32.mxu0 %v1034
    %v1036 = vand.u32 %v765, 4294901760
    %1037 = vmatmul.mubr.f32.gmra.mxu0 %v1036
    %v1038 = vpop.f32.mrf.mxu0
    %v1039 = vadd.f32 %v867, %v1038
    %v1040 = vpop.f32.mrf.mxu0
    %1041 = vdwg.mxu0
    %1042 = vmatprep.subr.mxu0 0.0
    %v1043 = vand.u32 %v72, 4294901760
    %v1044 = vsub.f32 %v72, %v1043
    %1045 = vmatpush1.msra.mxu0 %v1044
    %1046 = vmatprep.subr.mxu0 0.0
    %v1047 = vand.u32 %v71, 4294901760
    %v1048 = vsub.f32 %v71, %v1047
    %1049 = vmatpush1.msra.mxu0 %v1048
    %1050 = vmatprep.subr.mxu0 0.0
    %v1051 = vand.u32 %v70, 4294901760
    %v1052 = vsub.f32 %v70, %v1051
    %1053 = vmatpush1.msra.mxu0 %v1052
    %1054 = vmatprep.subr.mxu0 0.0
    %v1055 = vand.u32 %v69, 4294901760
    %v1056 = vsub.f32 %v69, %v1055
    %1057 = vmatpush1.msra.mxu0 %v1056
    %1058 = vmatprep.subr.mxu0 0.0
    %v1059 = vand.u32 %v68, 4294901760
    %v1060 = vsub.f32 %v68, %v1059
    %1061 = vmatpush1.msra.mxu0 %v1060
    %1062 = vmatprep.subr.mxu0 0.0
    %v1063 = vand.u32 %v67, 4294901760
    %v1064 = vsub.f32 %v67, %v1063
    %1065 = vmatpush1.msra.mxu0 %v1064
    %1066 = vmatprep.subr.mxu0 0.0
    %v1067 = vand.u32 %v66, 4294901760
    %v1068 = vsub.f32 %v66, %v1067
    %1069 = vmatpush1.msra.mxu0 %v1068
    %1070 = vmatprep.subr.mxu0 0.0
    %v1071 = vand.u32 %v65, 4294901760
    %v1072 = vsub.f32 %v65, %v1071
    %1073 = vmatpush1.msra.mxu0 %v1072
    %1074 = vmatprep.subr.mxu0 0.0
    %v1075 = vand.u32 %v64, 4294901760
    %v1076 = vsub.f32 %v64, %v1075
    %1077 = vmatpush1.msra.mxu0 %v1076
    %1078 = vmatprep.subr.mxu0 0.0
    %v1079 = vand.u32 %v63, 4294901760
    %v1080 = vsub.f32 %v63, %v1079
    %1081 = vmatpush1.msra.mxu0 %v1080
    %1082 = vmatprep.subr.mxu0 0.0
    %v1083 = vand.u32 %v62, 4294901760
    %v1084 = vsub.f32 %v62, %v1083
    %1085 = vmatpush1.msra.mxu0 %v1084
    %1086 = vmatprep.subr.mxu0 0.0
    %v1087 = vand.u32 %v61, 4294901760
    %v1088 = vsub.f32 %v61, %v1087
    %1089 = vmatpush1.msra.mxu0 %v1088
    %1090 = vmatprep.subr.mxu0 0.0
    %v1091 = vand.u32 %v60, 4294901760
    %v1092 = vsub.f32 %v60, %v1091
    %1093 = vmatpush1.msra.mxu0 %v1092
    %1094 = vmatprep.subr.mxu0 0.0
    %v1095 = vand.u32 %v59, 4294901760
    %v1096 = vsub.f32 %v59, %v1095
    %1097 = vmatpush1.msra.mxu0 %v1096
    %1098 = vmatprep.subr.mxu0 0.0
    %v1099 = vand.u32 %v58, 4294901760
    %v1100 = vsub.f32 %v58, %v1099
    %1101 = vmatpush1.msra.mxu0 %v1100
    %1102 = vmatprep.subr.mxu0 0.0
    %v1103 = vand.u32 %v57, 4294901760
    %v1104 = vsub.f32 %v57, %v1103
    %1105 = vmatpush1.msra.mxu0 %v1104
    %1106 = vmatprep.subr.mxu0 0.0
    %1107 = vmatpush2.msra.mxu0 0.0
    %1108 = vmatprep.subr.mxu0 0.0
    %1109 = vmatpush2.msra.mxu0 0.0
    %1110 = vmatprep.subr.mxu0 0.0
    %1111 = vmatpush2.msra.mxu0 0.0
    %1112 = vmatprep.subr.mxu0 0.0
    %1113 = vmatpush2.msra.mxu0 0.0
    %1114 = vmatprep.subr.mxu0 0.0
    %1115 = vmatpush2.msra.mxu0 0.0
    %1116 = vmatprep.subr.mxu0 0.0
    %1117 = vmatpush2.msra.mxu0 0.0
    %1118 = vmatprep.subr.mxu0 0.0
    %1119 = vmatpush2.msra.mxu0 0.0
    %1120 = vmatprep.subr.mxu0 0.0
    %1121 = vmatpush2.msra.mxu0 0.0
    %1122 = vmatprep.subr.mxu0 0.0
    %1123 = vmatpush2.msra.mxu0 0.0
    %1124 = vmatprep.subr.mxu0 0.0
    %1125 = vmatpush2.msra.mxu0 0.0
    %1126 = vmatprep.subr.mxu0 0.0
    %1127 = vmatpush2.msra.mxu0 0.0
    %1128 = vmatprep.subr.mxu0 0.0
    %1129 = vmatpush2.msra.mxu0 0.0
    %1130 = vmatprep.subr.mxu0 0.0
    %v1131 = vand.u32 %v76, 4294901760
    %v1132 = vsub.f32 %v76, %v1131
    %1133 = vmatpush2.msra.mxu0 %v1132
    %1134 = vmatprep.subr.mxu0 0.0
    %v1135 = vand.u32 %v75, 4294901760
    %v1136 = vsub.f32 %v75, %v1135
    %1137 = vmatpush2.msra.mxu0 %v1136
    %1138 = vmatprep.subr.mxu0 0.0
    %v1139 = vand.u32 %v74, 4294901760
    %v1140 = vsub.f32 %v74, %v1139
    %1141 = vmatpush2.msra.mxu0 %v1140
    %1142 = vmatprep.subr.mxu0 0.0
    %v1143 = vand.u32 %v73, 4294901760
    %v1144 = vsub.f32 %v73, %v1143
    %1145 = vmatpush2.msra.mxu0 %v1144
    %v1146 = vand.u32 %v768, 4294901760
    %v1147 = vsub.f32 %v768, %v1146
    %1148 = vmatprep.mubr.f32.mxu0 %v1147
    %v1149 = vand.u32 %v765, 4294901760
    %v1150 = vsub.f32 %v765, %v1149
    %1151 = vmatmul.mubr.f32.gmra.mxu0 %v1150
    %v1152 = vpop.f32.mrf.mxu0
    %v1153 = vadd.f32 %v1039, %v1152
    %v1154 = vpop.f32.mrf.mxu0
    %1155 = vdwg.mxu0
    %1156 = vmatprep.subr.mxu0 0.0
    %v1157 = vand.u32 %v72, 4294901760
    %1158 = vmatpush1.msra.mxu0 %v1157
    %1159 = vmatprep.subr.mxu0 0.0
    %v1160 = vand.u32 %v71, 4294901760
    %1161 = vmatpush1.msra.mxu0 %v1160
    %1162 = vmatprep.subr.mxu0 0.0
    %v1163 = vand.u32 %v70, 4294901760
    %1164 = vmatpush1.msra.mxu0 %v1163
    %1165 = vmatprep.subr.mxu0 0.0
    %v1166 = vand.u32 %v69, 4294901760
    %1167 = vmatpush1.msra.mxu0 %v1166
    %1168 = vmatprep.subr.mxu0 0.0
    %v1169 = vand.u32 %v68, 4294901760
    %1170 = vmatpush1.msra.mxu0 %v1169
    %1171 = vmatprep.subr.mxu0 0.0
    %v1172 = vand.u32 %v67, 4294901760
    %1173 = vmatpush1.msra.mxu0 %v1172
    %1174 = vmatprep.subr.mxu0 0.0
    %v1175 = vand.u32 %v66, 4294901760
    %1176 = vmatpush1.msra.mxu0 %v1175
    %1177 = vmatprep.subr.mxu0 0.0
    %v1178 = vand.u32 %v65, 4294901760
    %1179 = vmatpush1.msra.mxu0 %v1178
    %1180 = vmatprep.subr.mxu0 0.0
    %v1181 = vand.u32 %v64, 4294901760
    %1182 = vmatpush1.msra.mxu0 %v1181
    %1183 = vmatprep.subr.mxu0 0.0
    %v1184 = vand.u32 %v63, 4294901760
    %1185 = vmatpush1.msra.mxu0 %v1184
    %1186 = vmatprep.subr.mxu0 0.0
    %v1187 = vand.u32 %v62, 4294901760
    %1188 = vmatpush1.msra.mxu0 %v1187
    %1189 = vmatprep.subr.mxu0 0.0
    %v1190 = vand.u32 %v61, 4294901760
    %1191 = vmatpush1.msra.mxu0 %v1190
    %1192 = vmatprep.subr.mxu0 0.0
    %v1193 = vand.u32 %v60, 4294901760
    %1194 = vmatpush1.msra.mxu0 %v1193
    %1195 = vmatprep.subr.mxu0 0.0
    %v1196 = vand.u32 %v59, 4294901760
    %1197 = vmatpush1.msra.mxu0 %v1196
    %1198 = vmatprep.subr.mxu0 0.0
    %v1199 = vand.u32 %v58, 4294901760
    %1200 = vmatpush1.msra.mxu0 %v1199
    %1201 = vmatprep.subr.mxu0 0.0
    %v1202 = vand.u32 %v57, 4294901760
    %1203 = vmatpush1.msra.mxu0 %v1202
    %1204 = vmatprep.subr.mxu0 0.0
    %1205 = vmatpush2.msra.mxu0 0.0
    %1206 = vmatprep.subr.mxu0 0.0
    %1207 = vmatpush2.msra.mxu0 0.0
    %1208 = vmatprep.subr.mxu0 0.0
    %1209 = vmatpush2.msra.mxu0 0.0
    %1210 = vmatprep.subr.mxu0 0.0
    %1211 = vmatpush2.msra.mxu0 0.0
    %1212 = vmatprep.subr.mxu0 0.0
    %1213 = vmatpush2.msra.mxu0 0.0
    %1214 = vmatprep.subr.mxu0 0.0
    %1215 = vmatpush2.msra.mxu0 0.0
    %1216 = vmatprep.subr.mxu0 0.0
    %1217 = vmatpush2.msra.mxu0 0.0
    %1218 = vmatprep.subr.mxu0 0.0
    %1219 = vmatpush2.msra.mxu0 0.0
    %1220 = vmatprep.subr.mxu0 0.0
    %1221 = vmatpush2.msra.mxu0 0.0
    %1222 = vmatprep.subr.mxu0 0.0
    %1223 = vmatpush2.msra.mxu0 0.0
    %1224 = vmatprep.subr.mxu0 0.0
    %1225 = vmatpush2.msra.mxu0 0.0
    %1226 = vmatprep.subr.mxu0 0.0
    %1227 = vmatpush2.msra.mxu0 0.0
    %1228 = vmatprep.subr.mxu0 0.0
    %v1229 = vand.u32 %v76, 4294901760
    %1230 = vmatpush2.msra.mxu0 %v1229
    %1231 = vmatprep.subr.mxu0 0.0
    %v1232 = vand.u32 %v75, 4294901760
    %1233 = vmatpush2.msra.mxu0 %v1232
    %1234 = vmatprep.subr.mxu0 0.0
    %v1235 = vand.u32 %v74, 4294901760
    %1236 = vmatpush2.msra.mxu0 %v1235
    %1237 = vmatprep.subr.mxu0 0.0
    %v1238 = vand.u32 %v73, 4294901760
    %1239 = vmatpush2.msra.mxu0 %v1238
    %v1240 = vand.u32 %v768, 4294901760
    %v1241 = vsub.f32 %v768, %v1240
    %v1242 = vand.u32 %v1241, 4294901760
    %1243 = vmatprep.mubr.f32.mxu0 %v1242
    %v1244 = vand.u32 %v765, 4294901760
    %v1245 = vsub.f32 %v765, %v1244
    %v1246 = vand.u32 %v1245, 4294901760
    %1247 = vmatmul.mubr.f32.gmra.mxu0 %v1246
    %v1248 = vpop.f32.mrf.mxu0
    %v1249 = vadd.f32 %v1153, %v1248
    %v1250 = vpop.f32.mrf.mxu0
    %1251 = vdwg.mxu0
    %1252 = vmatprep.subr.mxu0 0.0
    %v1253 = vand.u32 %v72, 4294901760
    %v1254 = vsub.f32 %v72, %v1253
    %v1255 = vand.u32 %v1254, 4294901760
    %1256 = vmatpush1.msra.mxu0 %v1255
    %1257 = vmatprep.subr.mxu0 0.0
    %v1258 = vand.u32 %v71, 4294901760
    %v1259 = vsub.f32 %v71, %v1258
    %v1260 = vand.u32 %v1259, 4294901760
    %1261 = vmatpush1.msra.mxu0 %v1260
    %1262 = vmatprep.subr.mxu0 0.0
    %v1263 = vand.u32 %v70, 4294901760
    %v1264 = vsub.f32 %v70, %v1263
    %v1265 = vand.u32 %v1264, 4294901760
    %1266 = vmatpush1.msra.mxu0 %v1265
    %1267 = vmatprep.subr.mxu0 0.0
    %v1268 = vand.u32 %v69, 4294901760
    %v1269 = vsub.f32 %v69, %v1268
    %v1270 = vand.u32 %v1269, 4294901760
    %1271 = vmatpush1.msra.mxu0 %v1270
    %1272 = vmatprep.subr.mxu0 0.0
    %v1273 = vand.u32 %v68, 4294901760
    %v1274 = vsub.f32 %v68, %v1273
    %v1275 = vand.u32 %v1274, 4294901760
    %1276 = vmatpush1.msra.mxu0 %v1275
    %1277 = vmatprep.subr.mxu0 0.0
    %v1278 = vand.u32 %v67, 4294901760
    %v1279 = vsub.f32 %v67, %v1278
    %v1280 = vand.u32 %v1279, 4294901760
    %1281 = vmatpush1.msra.mxu0 %v1280
    %1282 = vmatprep.subr.mxu0 0.0
    %v1283 = vand.u32 %v66, 4294901760
    %v1284 = vsub.f32 %v66, %v1283
    %v1285 = vand.u32 %v1284, 4294901760
    %1286 = vmatpush1.msra.mxu0 %v1285
    %1287 = vmatprep.subr.mxu0 0.0
    %v1288 = vand.u32 %v65, 4294901760
    %v1289 = vsub.f32 %v65, %v1288
    %v1290 = vand.u32 %v1289, 4294901760
    %1291 = vmatpush1.msra.mxu0 %v1290
    %1292 = vmatprep.subr.mxu0 0.0
    %v1293 = vand.u32 %v64, 4294901760
    %v1294 = vsub.f32 %v64, %v1293
    %v1295 = vand.u32 %v1294, 4294901760
    %1296 = vmatpush1.msra.mxu0 %v1295
    %1297 = vmatprep.subr.mxu0 0.0
    %v1298 = vand.u32 %v63, 4294901760
    %v1299 = vsub.f32 %v63, %v1298
    %v1300 = vand.u32 %v1299, 4294901760
    %1301 = vmatpush1.msra.mxu0 %v1300
    %1302 = vmatprep.subr.mxu0 0.0
    %v1303 = vand.u32 %v62, 4294901760
    %v1304 = vsub.f32 %v62, %v1303
    %v1305 = vand.u32 %v1304, 4294901760
    %1306 = vmatpush1.msra.mxu0 %v1305
    %1307 = vmatprep.subr.mxu0 0.0
    %v1308 = vand.u32 %v61, 4294901760
    %v1309 = vsub.f32 %v61, %v1308
    %v1310 = vand.u32 %v1309, 4294901760
    %1311 = vmatpush1.msra.mxu0 %v1310
    %1312 = vmatprep.subr.mxu0 0.0
    %v1313 = vand.u32 %v60, 4294901760
    %v1314 = vsub.f32 %v60, %v1313
    %v1315 = vand.u32 %v1314, 4294901760
    %1316 = vmatpush1.msra.mxu0 %v1315
    %1317 = vmatprep.subr.mxu0 0.0
    %v1318 = vand.u32 %v59, 4294901760
    %v1319 = vsub.f32 %v59, %v1318
    %v1320 = vand.u32 %v1319, 4294901760
    %1321 = vmatpush1.msra.mxu0 %v1320
    %1322 = vmatprep.subr.mxu0 0.0
    %v1323 = vand.u32 %v58, 4294901760
    %v1324 = vsub.f32 %v58, %v1323
    %v1325 = vand.u32 %v1324, 4294901760
    %1326 = vmatpush1.msra.mxu0 %v1325
    %1327 = vmatprep.subr.mxu0 0.0
    %v1328 = vand.u32 %v57, 4294901760
    %v1329 = vsub.f32 %v57, %v1328
    %v1330 = vand.u32 %v1329, 4294901760
    %1331 = vmatpush1.msra.mxu0 %v1330
    %1332 = vmatprep.subr.mxu0 0.0
    %1333 = vmatpush2.msra.mxu0 0.0
    %1334 = vmatprep.subr.mxu0 0.0
    %1335 = vmatpush2.msra.mxu0 0.0
    %1336 = vmatprep.subr.mxu0 0.0
    %1337 = vmatpush2.msra.mxu0 0.0
    %1338 = vmatprep.subr.mxu0 0.0
    %1339 = vmatpush2.msra.mxu0 0.0
    %1340 = vmatprep.subr.mxu0 0.0
    %1341 = vmatpush2.msra.mxu0 0.0
    %1342 = vmatprep.subr.mxu0 0.0
    %1343 = vmatpush2.msra.mxu0 0.0
    %1344 = vmatprep.subr.mxu0 0.0
    %1345 = vmatpush2.msra.mxu0 0.0
    %1346 = vmatprep.subr.mxu0 0.0
    %1347 = vmatpush2.msra.mxu0 0.0
    %1348 = vmatprep.subr.mxu0 0.0
    %1349 = vmatpush2.msra.mxu0 0.0
    %1350 = vmatprep.subr.mxu0 0.0
    %1351 = vmatpush2.msra.mxu0 0.0
    %1352 = vmatprep.subr.mxu0 0.0
    %1353 = vmatpush2.msra.mxu0 0.0
    %1354 = vmatprep.subr.mxu0 0.0
    %1355 = vmatpush2.msra.mxu0 0.0
    %1356 = vmatprep.subr.mxu0 0.0
    %v1357 = vand.u32 %v76, 4294901760
    %v1358 = vsub.f32 %v76, %v1357
    %v1359 = vand.u32 %v1358, 4294901760
    %1360 = vmatpush2.msra.mxu0 %v1359
    %1361 = vmatprep.subr.mxu0 0.0
    %v1362 = vand.u32 %v75, 4294901760
    %v1363 = vsub.f32 %v75, %v1362
    %v1364 = vand.u32 %v1363, 4294901760
    %1365 = vmatpush2.msra.mxu0 %v1364
    %1366 = vmatprep.subr.mxu0 0.0
    %v1367 = vand.u32 %v74, 4294901760
    %v1368 = vsub.f32 %v74, %v1367
    %v1369 = vand.u32 %v1368, 4294901760
    %1370 = vmatpush2.msra.mxu0 %v1369
    %1371 = vmatprep.subr.mxu0 0.0
    %v1372 = vand.u32 %v73, 4294901760
    %v1373 = vsub.f32 %v73, %v1372
    %v1374 = vand.u32 %v1373, 4294901760
    %1375 = vmatpush2.msra.mxu0 %v1374
    %v1376 = vand.u32 %v768, 4294901760
    %1377 = vmatprep.mubr.f32.mxu0 %v1376
    %v1378 = vand.u32 %v765, 4294901760
    %1379 = vmatmul.mubr.f32.gmra.mxu0 %v1378
    %v1380 = vpop.f32.mrf.mxu0
    %v1381 = vadd.f32 %v1249, %v1380
    %v1382 = vpop.f32.mrf.mxu0
    %1383 = vdwg.mxu0
    %1384 = vmatprep.subr.mxu0 0.0
    %v1385 = vand.u32 %v72, 4294901760
    %1386 = vmatpush1.msra.mxu0 %v1385
    %1387 = vmatprep.subr.mxu0 0.0
    %v1388 = vand.u32 %v71, 4294901760
    %1389 = vmatpush1.msra.mxu0 %v1388
    %1390 = vmatprep.subr.mxu0 0.0
    %v1391 = vand.u32 %v70, 4294901760
    %1392 = vmatpush1.msra.mxu0 %v1391
    %1393 = vmatprep.subr.mxu0 0.0
    %v1394 = vand.u32 %v69, 4294901760
    %1395 = vmatpush1.msra.mxu0 %v1394
    %1396 = vmatprep.subr.mxu0 0.0
    %v1397 = vand.u32 %v68, 4294901760
    %1398 = vmatpush1.msra.mxu0 %v1397
    %1399 = vmatprep.subr.mxu0 0.0
    %v1400 = vand.u32 %v67, 4294901760
    %1401 = vmatpush1.msra.mxu0 %v1400
    %1402 = vmatprep.subr.mxu0 0.0
    %v1403 = vand.u32 %v66, 4294901760
    %1404 = vmatpush1.msra.mxu0 %v1403
    %1405 = vmatprep.subr.mxu0 0.0
    %v1406 = vand.u32 %v65, 4294901760
    %1407 = vmatpush1.msra.mxu0 %v1406
    %1408 = vmatprep.subr.mxu0 0.0
    %v1409 = vand.u32 %v64, 4294901760
    %1410 = vmatpush1.msra.mxu0 %v1409
    %1411 = vmatprep.subr.mxu0 0.0
    %v1412 = vand.u32 %v63, 4294901760
    %1413 = vmatpush1.msra.mxu0 %v1412
    %1414 = vmatprep.subr.mxu0 0.0
    %v1415 = vand.u32 %v62, 4294901760
    %1416 = vmatpush1.msra.mxu0 %v1415
    %1417 = vmatprep.subr.mxu0 0.0
    %v1418 = vand.u32 %v61, 4294901760
    %1419 = vmatpush1.msra.mxu0 %v1418
    %1420 = vmatprep.subr.mxu0 0.0
    %v1421 = vand.u32 %v60, 4294901760
    %1422 = vmatpush1.msra.mxu0 %v1421
    %1423 = vmatprep.subr.mxu0 0.0
    %v1424 = vand.u32 %v59, 4294901760
    %1425 = vmatpush1.msra.mxu0 %v1424
    %1426 = vmatprep.subr.mxu0 0.0
    %v1427 = vand.u32 %v58, 4294901760
    %1428 = vmatpush1.msra.mxu0 %v1427
    %1429 = vmatprep.subr.mxu0 0.0
    %v1430 = vand.u32 %v57, 4294901760
    %1431 = vmatpush1.msra.mxu0 %v1430
    %1432 = vmatprep.subr.mxu0 0.0
    %1433 = vmatpush2.msra.mxu0 0.0
    %1434 = vmatprep.subr.mxu0 0.0
    %1435 = vmatpush2.msra.mxu0 0.0
    %1436 = vmatprep.subr.mxu0 0.0
    %1437 = vmatpush2.msra.mxu0 0.0
    %1438 = vmatprep.subr.mxu0 0.0
    %1439 = vmatpush2.msra.mxu0 0.0
    %1440 = vmatprep.subr.mxu0 0.0
    %1441 = vmatpush2.msra.mxu0 0.0
    %1442 = vmatprep.subr.mxu0 0.0
    %1443 = vmatpush2.msra.mxu0 0.0
    %1444 = vmatprep.subr.mxu0 0.0
    %1445 = vmatpush2.msra.mxu0 0.0
    %1446 = vmatprep.subr.mxu0 0.0
    %1447 = vmatpush2.msra.mxu0 0.0
    %1448 = vmatprep.subr.mxu0 0.0
    %1449 = vmatpush2.msra.mxu0 0.0
    %1450 = vmatprep.subr.mxu0 0.0
    %1451 = vmatpush2.msra.mxu0 0.0
    %1452 = vmatprep.subr.mxu0 0.0
    %1453 = vmatpush2.msra.mxu0 0.0
    %1454 = vmatprep.subr.mxu0 0.0
    %1455 = vmatpush2.msra.mxu0 0.0
    %1456 = vmatprep.subr.mxu0 0.0
    %v1457 = vand.u32 %v76, 4294901760
    %1458 = vmatpush2.msra.mxu0 %v1457
    %1459 = vmatprep.subr.mxu0 0.0
    %v1460 = vand.u32 %v75, 4294901760
    %1461 = vmatpush2.msra.mxu0 %v1460
    %1462 = vmatprep.subr.mxu0 0.0
    %v1463 = vand.u32 %v74, 4294901760
    %1464 = vmatpush2.msra.mxu0 %v1463
    %1465 = vmatprep.subr.mxu0 0.0
    %v1466 = vand.u32 %v73, 4294901760
    %1467 = vmatpush2.msra.mxu0 %v1466
    %v1468 = vand.u32 %v768, 4294901760
    %1469 = vmatprep.mubr.f32.mxu0 %v1468
    %v1470 = vand.u32 %v765, 4294901760
    %1471 = vmatmul.mubr.f32.gmra.mxu0 %v1470
    %v1472 = vpop.f32.mrf.mxu0
    %v1473 = vadd.f32 %v1381, %v1472
    %v1474 = vpop.f32.mrf.mxu0
    %1475 = vdwg.mxu0
    %v1476 = vadd.f32 %v1473, 1.0
    %v1477 = vrcp.pop %v1476
    %v1478 = vmul.f32 %v1473, %v1477
    %v1479 = vrsqrt.pop %v1473
    %v1480 = vmul.f32 %v1478, %v1479
    %vm1481 = vcmask 80896
    %v1483 = vsel %vm1481, %v1480, 0
    %vm1485 = vcmask 1041408
    %v1487 = vsel %vm1485, %v55, 0
    %v1490 = vsel %vm1485, %v56, 0
    %1492 = vmatprep.subr.mxu0 0.0
    %1493 = vmatpush1.msra.mxu0 0.0
    %1494 = vmatprep.subr.mxu0 0.0
    %1495 = vmatpush1.msra.mxu0 0.0
    %1496 = vmatprep.subr.mxu0 0.0
    %1497 = vmatpush1.msra.mxu0 0.0
    %1498 = vmatprep.subr.mxu0 0.0
    %1499 = vmatpush1.msra.mxu0 0.0
    %1500 = vmatprep.subr.mxu0 0.0
    %1501 = vmatpush1.msra.mxu0 0.0
    %1502 = vmatprep.subr.mxu0 0.0
    %1503 = vmatpush1.msra.mxu0 0.0
    %1504 = vmatprep.subr.mxu0 0.0
    %1505 = vmatpush1.msra.mxu0 0.0
    %1506 = vmatprep.subr.mxu0 0.0
    %1507 = vmatpush1.msra.mxu0 0.0
    %1508 = vmatprep.subr.mxu0 0.0
    %1509 = vmatpush1.msra.mxu0 0.0
    %1510 = vmatprep.subr.mxu0 0.0
    %1511 = vmatpush1.msra.mxu0 0.0
    %1512 = vmatprep.subr.mxu0 0.0
    %1513 = vmatpush1.msra.mxu0 0.0
    %1514 = vmatprep.subr.mxu0 0.0
    %1515 = vmatpush1.msra.mxu0 0.0
    %1516 = vmatprep.subr.mxu0 0.0
    %1517 = vmatpush1.msra.mxu0 0.0
    %1518 = vmatprep.subr.mxu0 0.0
    %1519 = vmatpush1.msra.mxu0 0.0
    %1520 = vmatprep.subr.mxu0 %v1490
    %1521 = vmatpush1.msra.mxu0 %v1487
    %1522 = vmatprep.subr.mxu0 %v54
    %1523 = vmatpush1.msra.mxu0 %v53
    %1524 = vmatprep.subr.mxu0 0.0
    %1525 = vmatpush2.msra.mxu0 0.0
    %1526 = vmatprep.subr.mxu0 0.0
    %1527 = vmatpush2.msra.mxu0 0.0
    %1528 = vmatprep.subr.mxu0 0.0
    %1529 = vmatpush2.msra.mxu0 0.0
    %1530 = vmatprep.subr.mxu0 0.0
    %1531 = vmatpush2.msra.mxu0 0.0
    %1532 = vmatprep.subr.mxu0 0.0
    %1533 = vmatpush2.msra.mxu0 0.0
    %1534 = vmatprep.subr.mxu0 0.0
    %1535 = vmatpush2.msra.mxu0 0.0
    %1536 = vmatprep.subr.mxu0 0.0
    %1537 = vmatpush2.msra.mxu0 0.0
    %1538 = vmatprep.subr.mxu0 0.0
    %1539 = vmatpush2.msra.mxu0 0.0
    %1540 = vmatprep.subr.mxu0 0.0
    %1541 = vmatpush2.msra.mxu0 0.0
    %1542 = vmatprep.subr.mxu0 0.0
    %1543 = vmatpush2.msra.mxu0 0.0
    %1544 = vmatprep.subr.mxu0 0.0
    %1545 = vmatpush2.msra.mxu0 0.0
    %1546 = vmatprep.subr.mxu0 0.0
    %1547 = vmatpush2.msra.mxu0 0.0
    %1548 = vmatprep.subr.mxu0 0.0
    %1549 = vmatpush2.msra.mxu0 0.0
    %1550 = vmatprep.subr.mxu0 0.0
    %1551 = vmatpush2.msra.mxu0 0.0
    %1552 = vmatprep.subr.mxu0 0.0
    %1553 = vmatpush2.msra.mxu0 0.0
    %1554 = vmatprep.subr.mxu0 0.0
    %1555 = vmatpush2.msra.mxu0 0.0
    %1556 = vmatprep.mubr.f32.mxu0 0.0
    %1557 = vmatmul.mubr.f32.gmra.mxu0 %v1483
    %v1558 = vpop.f32.mrf.mxu0
    %v1559 = vadd.f32 0.0, %v1558
    %v1560 = vpop.f32.mrf.mxu0
    %v1561 = vadd.f32 0.0, %v1560
    %1562 = vdwg.mxu0
    %v1565 = vcombine.low %v1559, %v1561
    %v1567 = vunpack.c.l.s4 1983009808
    %v1568 = vunpack.c.0.s8 %v1567
    %v1569 = vlaneseq
    %v1570 = vshrl.u32 %v1569, 7
    %v1571 = vsub.s32 %v1568, %v1570
    %v1572 = vrot.slane %v1565, %v1571
    %v1574 = vmul.f32 %v756, %v1572
    %v1576 = vlaneseq
    %v1577 = vshrl.u32 %v1576, 7
    %v1578 = vsub.s32 0, %v1577
    %v1579 = vrot.slane %v1574, %v1578
    %v1580 = vlaneseq
    %v1581 = vshrl.u32 %v1580, 7
    %v1582 = vsub.s32 2, %v1581
    %v1583 = vrot.slane %v1574, %v1582
    %v1586 = vlaneseq
    %v1587 = vshrl.u32 %v1586, 7
    %v1588 = vsub.s32 0, %v1587
    %v1589 = vrot.slane %v1579, %v1588
    %v1590 = vlaneseq
    %v1591 = vshrl.u32 %v1590, 7
    %v1592 = vsub.s32 0, %v1591
    %v1593 = vrot.slane %v1583, %v1592
    %v1594 = vmul.f32 %v612, %v1589
    %v1595 = vmul.f32 %v613, %v1593
    %v1596 = vmul.f32 %v614, %v1589
    %v1597 = vmul.f32 %v615, %v1593
    %v1598 = vmul.f32 %v616, %v1589
    %v1599 = vmul.f32 %v617, %v1593
    %v1600 = vmul.f32 %v618, %v1589
    %v1601 = vmul.f32 %v619, %v1593
    %v1602 = vlaneseq
    %v1603 = vshrl.u32 %v1602, 7
    %v1604 = vsub.s32 1, %v1603
    %v1605 = vrot.slane %v1574, %v1604
    %v1606 = vlaneseq
    %v1607 = vshrl.u32 %v1606, 7
    %v1608 = vsub.s32 3, %v1607
    %v1609 = vrot.slane %v1574, %v1608
    %v1612 = vlaneseq
    %v1613 = vshrl.u32 %v1612, 7
    %v1614 = vsub.s32 1, %v1613
    %v1615 = vrot.slane %v1605, %v1614
    %v1616 = vlaneseq
    %v1617 = vshrl.u32 %v1616, 7
    %v1618 = vsub.s32 1, %v1617
    %v1619 = vrot.slane %v1609, %v1618
    %v1620 = vmul.f32 %v644, %v1615
    %v1621 = vmul.f32 %v645, %v1619
    %v1622 = vmul.f32 %v646, %v1615
    %v1623 = vmul.f32 %v647, %v1619
    %v1624 = vmul.f32 %v648, %v1615
    %v1625 = vmul.f32 %v649, %v1619
    %v1626 = vmul.f32 %v650, %v1615
    %v1627 = vmul.f32 %v651, %v1619
    %v1628 = vadd.f32 %v1594, %v1620
    %v1629 = vadd.f32 %v1595, %v1621
    %v1630 = vadd.f32 %v1596, %v1622
    %v1631 = vadd.f32 %v1597, %v1623
    %v1632 = vadd.f32 %v1598, %v1624
    %v1633 = vadd.f32 %v1599, %v1625
    %v1634 = vadd.f32 %v1600, %v1626
    %v1635 = vadd.f32 %v1601, %v1627
    %v1637 = vsel %vm669, %v1629, 0
    %v1640 = vsel %vm669, %v1631, 0
    %v1643 = vsel %vm669, %v1633, 0
    %v1646 = vsel %vm669, %v1635, 0
    %1648 = vmatprep.subr.mxu0 0.0
    %v1649 = vand.u32 %v72, 4294901760
    %1650 = vmatpush1.msra.mxu0 %v1649
    %1651 = vmatprep.subr.mxu0 0.0
    %v1652 = vand.u32 %v71, 4294901760
    %1653 = vmatpush1.msra.mxu0 %v1652
    %1654 = vmatprep.subr.mxu0 0.0
    %v1655 = vand.u32 %v70, 4294901760
    %1656 = vmatpush1.msra.mxu0 %v1655
    %1657 = vmatprep.subr.mxu0 0.0
    %v1658 = vand.u32 %v69, 4294901760
    %1659 = vmatpush1.msra.mxu0 %v1658
    %1660 = vmatprep.subr.mxu0 0.0
    %v1661 = vand.u32 %v68, 4294901760
    %1662 = vmatpush1.msra.mxu0 %v1661
    %1663 = vmatprep.subr.mxu0 0.0
    %v1664 = vand.u32 %v67, 4294901760
    %1665 = vmatpush1.msra.mxu0 %v1664
    %1666 = vmatprep.subr.mxu0 0.0
    %v1667 = vand.u32 %v66, 4294901760
    %1668 = vmatpush1.msra.mxu0 %v1667
    %1669 = vmatprep.subr.mxu0 0.0
    %v1670 = vand.u32 %v65, 4294901760
    %1671 = vmatpush1.msra.mxu0 %v1670
    %1672 = vmatprep.subr.mxu0 0.0
    %v1673 = vand.u32 %v64, 4294901760
    %1674 = vmatpush1.msra.mxu0 %v1673
    %1675 = vmatprep.subr.mxu0 0.0
    %v1676 = vand.u32 %v63, 4294901760
    %1677 = vmatpush1.msra.mxu0 %v1676
    %1678 = vmatprep.subr.mxu0 0.0
    %v1679 = vand.u32 %v62, 4294901760
    %1680 = vmatpush1.msra.mxu0 %v1679
    %1681 = vmatprep.subr.mxu0 0.0
    %v1682 = vand.u32 %v61, 4294901760
    %1683 = vmatpush1.msra.mxu0 %v1682
    %1684 = vmatprep.subr.mxu0 0.0
    %v1685 = vand.u32 %v60, 4294901760
    %1686 = vmatpush1.msra.mxu0 %v1685
    %1687 = vmatprep.subr.mxu0 0.0
    %v1688 = vand.u32 %v59, 4294901760
    %1689 = vmatpush1.msra.mxu0 %v1688
    %1690 = vmatprep.subr.mxu0 0.0
    %v1691 = vand.u32 %v58, 4294901760
    %1692 = vmatpush1.msra.mxu0 %v1691
    %1693 = vmatprep.subr.mxu0 0.0
    %v1694 = vand.u32 %v57, 4294901760
    %1695 = vmatpush1.msra.mxu0 %v1694
    %1696 = vmatprep.subr.mxu0 0.0
    %1697 = vmatpush2.msra.mxu0 0.0
    %1698 = vmatprep.subr.mxu0 0.0
    %1699 = vmatpush2.msra.mxu0 0.0
    %1700 = vmatprep.subr.mxu0 0.0
    %1701 = vmatpush2.msra.mxu0 0.0
    %1702 = vmatprep.subr.mxu0 0.0
    %1703 = vmatpush2.msra.mxu0 0.0
    %1704 = vmatprep.subr.mxu0 0.0
    %1705 = vmatpush2.msra.mxu0 0.0
    %1706 = vmatprep.subr.mxu0 0.0
    %1707 = vmatpush2.msra.mxu0 0.0
    %1708 = vmatprep.subr.mxu0 0.0
    %1709 = vmatpush2.msra.mxu0 0.0
    %1710 = vmatprep.subr.mxu0 0.0
    %1711 = vmatpush2.msra.mxu0 0.0
    %1712 = vmatprep.subr.mxu0 0.0
    %1713 = vmatpush2.msra.mxu0 0.0
    %1714 = vmatprep.subr.mxu0 0.0
    %1715 = vmatpush2.msra.mxu0 0.0
    %1716 = vmatprep.subr.mxu0 0.0
    %1717 = vmatpush2.msra.mxu0 0.0
    %1718 = vmatprep.subr.mxu0 0.0
    %1719 = vmatpush2.msra.mxu0 0.0
    %1720 = vmatprep.subr.mxu0 0.0
    %v1721 = vand.u32 %v76, 4294901760
    %1722 = vmatpush2.msra.mxu0 %v1721
    %1723 = vmatprep.subr.mxu0 0.0
    %v1724 = vand.u32 %v75, 4294901760
    %1725 = vmatpush2.msra.mxu0 %v1724
    %1726 = vmatprep.subr.mxu0 0.0
    %v1727 = vand.u32 %v74, 4294901760
    %1728 = vmatpush2.msra.mxu0 %v1727
    %1729 = vmatprep.subr.mxu0 0.0
    %v1730 = vand.u32 %v73, 4294901760
    %1731 = vmatpush2.msra.mxu0 %v1730
    %v1732 = vand.u32 %v1637, 4294901760
    %v1733 = vsub.f32 %v1637, %v1732
    %v1734 = vand.u32 %v1733, 4294901760
    %v1735 = vsub.f32 %v1733, %v1734
    %v1736 = vand.u32 %v1735, 4294901760
    %1737 = vmatprep.mubr.f32.mxu0 %v1736
    %v1738 = vand.u32 %v1628, 4294901760
    %v1739 = vsub.f32 %v1628, %v1738
    %v1740 = vand.u32 %v1739, 4294901760
    %v1741 = vsub.f32 %v1739, %v1740
    %v1742 = vand.u32 %v1741, 4294901760
    %1743 = vmatmul.mubr.f32.gmra.mxu0 %v1742
    %v1744 = vpop.f32.mrf.mxu0
    %v1745 = vadd.f32 0.0, %v1744
    %v1746 = vpop.f32.mrf.mxu0
    %v1747 = vand.u32 %v1640, 4294901760
    %v1748 = vsub.f32 %v1640, %v1747
    %v1749 = vand.u32 %v1748, 4294901760
    %v1750 = vsub.f32 %v1748, %v1749
    %v1751 = vand.u32 %v1750, 4294901760
    %1752 = vmatprep.mubr.f32.mxu0 %v1751
    %v1753 = vand.u32 %v1630, 4294901760
    %v1754 = vsub.f32 %v1630, %v1753
    %v1755 = vand.u32 %v1754, 4294901760
    %v1756 = vsub.f32 %v1754, %v1755
    %v1757 = vand.u32 %v1756, 4294901760
    %1758 = vmatmul.mubr.f32.gmra.mxu0 %v1757
    %v1759 = vpop.f32.mrf.mxu0
    %v1760 = vadd.f32 0.0, %v1759
    %v1761 = vpop.f32.mrf.mxu0
    %v1762 = vand.u32 %v1643, 4294901760
    %v1763 = vsub.f32 %v1643, %v1762
    %v1764 = vand.u32 %v1763, 4294901760
    %v1765 = vsub.f32 %v1763, %v1764
    %v1766 = vand.u32 %v1765, 4294901760
    %1767 = vmatprep.mubr.f32.mxu0 %v1766
    %v1768 = vand.u32 %v1632, 4294901760
    %v1769 = vsub.f32 %v1632, %v1768
    %v1770 = vand.u32 %v1769, 4294901760
    %v1771 = vsub.f32 %v1769, %v1770
    %v1772 = vand.u32 %v1771, 4294901760
    %1773 = vmatmul.mubr.f32.gmra.mxu0 %v1772
    %v1774 = vpop.f32.mrf.mxu0
    %v1775 = vadd.f32 0.0, %v1774
    %v1776 = vpop.f32.mrf.mxu0
    %v1777 = vand.u32 %v1646, 4294901760
    %v1778 = vsub.f32 %v1646, %v1777
    %v1779 = vand.u32 %v1778, 4294901760
    %v1780 = vsub.f32 %v1778, %v1779
    %v1781 = vand.u32 %v1780, 4294901760
    %1782 = vmatprep.mubr.f32.mxu0 %v1781
    %v1783 = vand.u32 %v1634, 4294901760
    %v1784 = vsub.f32 %v1634, %v1783
    %v1785 = vand.u32 %v1784, 4294901760
    %v1786 = vsub.f32 %v1784, %v1785
    %v1787 = vand.u32 %v1786, 4294901760
    %1788 = vmatmul.mubr.f32.gmra.mxu0 %v1787
    %v1789 = vpop.f32.mrf.mxu0
    %v1790 = vadd.f32 0.0, %v1789
    %v1791 = vpop.f32.mrf.mxu0
    %1792 = vdwg.mxu0
    %1793 = vmatprep.subr.mxu0 0.0
    %v1794 = vand.u32 %v72, 4294901760
    %v1795 = vsub.f32 %v72, %v1794
    %v1796 = vand.u32 %v1795, 4294901760
    %v1797 = vsub.f32 %v1795, %v1796
    %v1798 = vand.u32 %v1797, 4294901760
    %1799 = vmatpush1.msra.mxu0 %v1798
    %1800 = vmatprep.subr.mxu0 0.0
    %v1801 = vand.u32 %v71, 4294901760
    %v1802 = vsub.f32 %v71, %v1801
    %v1803 = vand.u32 %v1802, 4294901760
    %v1804 = vsub.f32 %v1802, %v1803
    %v1805 = vand.u32 %v1804, 4294901760
    %1806 = vmatpush1.msra.mxu0 %v1805
    %1807 = vmatprep.subr.mxu0 0.0
    %v1808 = vand.u32 %v70, 4294901760
    %v1809 = vsub.f32 %v70, %v1808
    %v1810 = vand.u32 %v1809, 4294901760
    %v1811 = vsub.f32 %v1809, %v1810
    %v1812 = vand.u32 %v1811, 4294901760
    %1813 = vmatpush1.msra.mxu0 %v1812
    %1814 = vmatprep.subr.mxu0 0.0
    %v1815 = vand.u32 %v69, 4294901760
    %v1816 = vsub.f32 %v69, %v1815
    %v1817 = vand.u32 %v1816, 4294901760
    %v1818 = vsub.f32 %v1816, %v1817
    %v1819 = vand.u32 %v1818, 4294901760
    %1820 = vmatpush1.msra.mxu0 %v1819
    %1821 = vmatprep.subr.mxu0 0.0
    %v1822 = vand.u32 %v68, 4294901760
    %v1823 = vsub.f32 %v68, %v1822
    %v1824 = vand.u32 %v1823, 4294901760
    %v1825 = vsub.f32 %v1823, %v1824
    %v1826 = vand.u32 %v1825, 4294901760
    %1827 = vmatpush1.msra.mxu0 %v1826
    %1828 = vmatprep.subr.mxu0 0.0
    %v1829 = vand.u32 %v67, 4294901760
    %v1830 = vsub.f32 %v67, %v1829
    %v1831 = vand.u32 %v1830, 4294901760
    %v1832 = vsub.f32 %v1830, %v1831
    %v1833 = vand.u32 %v1832, 4294901760
    %1834 = vmatpush1.msra.mxu0 %v1833
    %1835 = vmatprep.subr.mxu0 0.0
    %v1836 = vand.u32 %v66, 4294901760
    %v1837 = vsub.f32 %v66, %v1836
    %v1838 = vand.u32 %v1837, 4294901760
    %v1839 = vsub.f32 %v1837, %v1838
    %v1840 = vand.u32 %v1839, 4294901760
    %1841 = vmatpush1.msra.mxu0 %v1840
    %1842 = vmatprep.subr.mxu0 0.0
    %v1843 = vand.u32 %v65, 4294901760
    %v1844 = vsub.f32 %v65, %v1843
    %v1845 = vand.u32 %v1844, 4294901760
    %v1846 = vsub.f32 %v1844, %v1845
    %v1847 = vand.u32 %v1846, 4294901760
    %1848 = vmatpush1.msra.mxu0 %v1847
    %1849 = vmatprep.subr.mxu0 0.0
    %v1850 = vand.u32 %v64, 4294901760
    %v1851 = vsub.f32 %v64, %v1850
    %v1852 = vand.u32 %v1851, 4294901760
    %v1853 = vsub.f32 %v1851, %v1852
    %v1854 = vand.u32 %v1853, 4294901760
    %1855 = vmatpush1.msra.mxu0 %v1854
    %1856 = vmatprep.subr.mxu0 0.0
    %v1857 = vand.u32 %v63, 4294901760
    %v1858 = vsub.f32 %v63, %v1857
    %v1859 = vand.u32 %v1858, 4294901760
    %v1860 = vsub.f32 %v1858, %v1859
    %v1861 = vand.u32 %v1860, 4294901760
    %1862 = vmatpush1.msra.mxu0 %v1861
    %1863 = vmatprep.subr.mxu0 0.0
    %v1864 = vand.u32 %v62, 4294901760
    %v1865 = vsub.f32 %v62, %v1864
    %v1866 = vand.u32 %v1865, 4294901760
    %v1867 = vsub.f32 %v1865, %v1866
    %v1868 = vand.u32 %v1867, 4294901760
    %1869 = vmatpush1.msra.mxu0 %v1868
    %1870 = vmatprep.subr.mxu0 0.0
    %v1871 = vand.u32 %v61, 4294901760
    %v1872 = vsub.f32 %v61, %v1871
    %v1873 = vand.u32 %v1872, 4294901760
    %v1874 = vsub.f32 %v1872, %v1873
    %v1875 = vand.u32 %v1874, 4294901760
    %1876 = vmatpush1.msra.mxu0 %v1875
    %1877 = vmatprep.subr.mxu0 0.0
    %v1878 = vand.u32 %v60, 4294901760
    %v1879 = vsub.f32 %v60, %v1878
    %v1880 = vand.u32 %v1879, 4294901760
    %v1881 = vsub.f32 %v1879, %v1880
    %v1882 = vand.u32 %v1881, 4294901760
    %1883 = vmatpush1.msra.mxu0 %v1882
    %1884 = vmatprep.subr.mxu0 0.0
    %v1885 = vand.u32 %v59, 4294901760
    %v1886 = vsub.f32 %v59, %v1885
    %v1887 = vand.u32 %v1886, 4294901760
    %v1888 = vsub.f32 %v1886, %v1887
    %v1889 = vand.u32 %v1888, 4294901760
    %1890 = vmatpush1.msra.mxu0 %v1889
    %1891 = vmatprep.subr.mxu0 0.0
    %v1892 = vand.u32 %v58, 4294901760
    %v1893 = vsub.f32 %v58, %v1892
    %v1894 = vand.u32 %v1893, 4294901760
    %v1895 = vsub.f32 %v1893, %v1894
    %v1896 = vand.u32 %v1895, 4294901760
    %1897 = vmatpush1.msra.mxu0 %v1896
    %1898 = vmatprep.subr.mxu0 0.0
    %v1899 = vand.u32 %v57, 4294901760
    %v1900 = vsub.f32 %v57, %v1899
    %v1901 = vand.u32 %v1900, 4294901760
    %v1902 = vsub.f32 %v1900, %v1901
    %v1903 = vand.u32 %v1902, 4294901760
    %1904 = vmatpush1.msra.mxu0 %v1903
    %1905 = vmatprep.subr.mxu0 0.0
    %1906 = vmatpush2.msra.mxu0 0.0
    %1907 = vmatprep.subr.mxu0 0.0
    %1908 = vmatpush2.msra.mxu0 0.0
    %1909 = vmatprep.subr.mxu0 0.0
    %1910 = vmatpush2.msra.mxu0 0.0
    %1911 = vmatprep.subr.mxu0 0.0
    %1912 = vmatpush2.msra.mxu0 0.0
    %1913 = vmatprep.subr.mxu0 0.0
    %1914 = vmatpush2.msra.mxu0 0.0
    %1915 = vmatprep.subr.mxu0 0.0
    %1916 = vmatpush2.msra.mxu0 0.0
    %1917 = vmatprep.subr.mxu0 0.0
    %1918 = vmatpush2.msra.mxu0 0.0
    %1919 = vmatprep.subr.mxu0 0.0
    %1920 = vmatpush2.msra.mxu0 0.0
    %1921 = vmatprep.subr.mxu0 0.0
    %1922 = vmatpush2.msra.mxu0 0.0
    %1923 = vmatprep.subr.mxu0 0.0
    %1924 = vmatpush2.msra.mxu0 0.0
    %1925 = vmatprep.subr.mxu0 0.0
    %1926 = vmatpush2.msra.mxu0 0.0
    %1927 = vmatprep.subr.mxu0 0.0
    %1928 = vmatpush2.msra.mxu0 0.0
    %1929 = vmatprep.subr.mxu0 0.0
    %v1930 = vand.u32 %v76, 4294901760
    %v1931 = vsub.f32 %v76, %v1930
    %v1932 = vand.u32 %v1931, 4294901760
    %v1933 = vsub.f32 %v1931, %v1932
    %v1934 = vand.u32 %v1933, 4294901760
    %1935 = vmatpush2.msra.mxu0 %v1934
    %1936 = vmatprep.subr.mxu0 0.0
    %v1937 = vand.u32 %v75, 4294901760
    %v1938 = vsub.f32 %v75, %v1937
    %v1939 = vand.u32 %v1938, 4294901760
    %v1940 = vsub.f32 %v1938, %v1939
    %v1941 = vand.u32 %v1940, 4294901760
    %1942 = vmatpush2.msra.mxu0 %v1941
    %1943 = vmatprep.subr.mxu0 0.0
    %v1944 = vand.u32 %v74, 4294901760
    %v1945 = vsub.f32 %v74, %v1944
    %v1946 = vand.u32 %v1945, 4294901760
    %v1947 = vsub.f32 %v1945, %v1946
    %v1948 = vand.u32 %v1947, 4294901760
    %1949 = vmatpush2.msra.mxu0 %v1948
    %1950 = vmatprep.subr.mxu0 0.0
    %v1951 = vand.u32 %v73, 4294901760
    %v1952 = vsub.f32 %v73, %v1951
    %v1953 = vand.u32 %v1952, 4294901760
    %v1954 = vsub.f32 %v1952, %v1953
    %v1955 = vand.u32 %v1954, 4294901760
    %1956 = vmatpush2.msra.mxu0 %v1955
    %v1957 = vand.u32 %v1637, 4294901760
    %1958 = vmatprep.mubr.f32.mxu0 %v1957
    %v1959 = vand.u32 %v1628, 4294901760
    %1960 = vmatmul.mubr.f32.gmra.mxu0 %v1959
    %v1961 = vpop.f32.mrf.mxu0
    %v1962 = vadd.f32 %v1745, %v1961
    %v1963 = vpop.f32.mrf.mxu0
    %v1964 = vand.u32 %v1640, 4294901760
    %1965 = vmatprep.mubr.f32.mxu0 %v1964
    %v1966 = vand.u32 %v1630, 4294901760
    %1967 = vmatmul.mubr.f32.gmra.mxu0 %v1966
    %v1968 = vpop.f32.mrf.mxu0
    %v1969 = vadd.f32 %v1760, %v1968
    %v1970 = vpop.f32.mrf.mxu0
    %v1971 = vand.u32 %v1643, 4294901760
    %1972 = vmatprep.mubr.f32.mxu0 %v1971
    %v1973 = vand.u32 %v1632, 4294901760
    %1974 = vmatmul.mubr.f32.gmra.mxu0 %v1973
    %v1975 = vpop.f32.mrf.mxu0
    %v1976 = vadd.f32 %v1775, %v1975
    %v1977 = vpop.f32.mrf.mxu0
    %v1978 = vand.u32 %v1646, 4294901760
    %1979 = vmatprep.mubr.f32.mxu0 %v1978
    %v1980 = vand.u32 %v1634, 4294901760
    %1981 = vmatmul.mubr.f32.gmra.mxu0 %v1980
    %v1982 = vpop.f32.mrf.mxu0
    %v1983 = vadd.f32 %v1790, %v1982
    %v1984 = vpop.f32.mrf.mxu0
    %1985 = vdwg.mxu0
    %1986 = vmatprep.subr.mxu0 0.0
    %v1987 = vand.u32 %v72, 4294901760
    %v1988 = vsub.f32 %v72, %v1987
    %1989 = vmatpush1.msra.mxu0 %v1988
    %1990 = vmatprep.subr.mxu0 0.0
    %v1991 = vand.u32 %v71, 4294901760
    %v1992 = vsub.f32 %v71, %v1991
    %1993 = vmatpush1.msra.mxu0 %v1992
    %1994 = vmatprep.subr.mxu0 0.0
    %v1995 = vand.u32 %v70, 4294901760
    %v1996 = vsub.f32 %v70, %v1995
    %1997 = vmatpush1.msra.mxu0 %v1996
    %1998 = vmatprep.subr.mxu0 0.0
    %v1999 = vand.u32 %v69, 4294901760
    %v2000 = vsub.f32 %v69, %v1999
    %2001 = vmatpush1.msra.mxu0 %v2000
    %2002 = vmatprep.subr.mxu0 0.0
    %v2003 = vand.u32 %v68, 4294901760
    %v2004 = vsub.f32 %v68, %v2003
    %2005 = vmatpush1.msra.mxu0 %v2004
    %2006 = vmatprep.subr.mxu0 0.0
    %v2007 = vand.u32 %v67, 4294901760
    %v2008 = vsub.f32 %v67, %v2007
    %2009 = vmatpush1.msra.mxu0 %v2008
    %2010 = vmatprep.subr.mxu0 0.0
    %v2011 = vand.u32 %v66, 4294901760
    %v2012 = vsub.f32 %v66, %v2011
    %2013 = vmatpush1.msra.mxu0 %v2012
    %2014 = vmatprep.subr.mxu0 0.0
    %v2015 = vand.u32 %v65, 4294901760
    %v2016 = vsub.f32 %v65, %v2015
    %2017 = vmatpush1.msra.mxu0 %v2016
    %2018 = vmatprep.subr.mxu0 0.0
    %v2019 = vand.u32 %v64, 4294901760
    %v2020 = vsub.f32 %v64, %v2019
    %2021 = vmatpush1.msra.mxu0 %v2020
    %2022 = vmatprep.subr.mxu0 0.0
    %v2023 = vand.u32 %v63, 4294901760
    %v2024 = vsub.f32 %v63, %v2023
    %2025 = vmatpush1.msra.mxu0 %v2024
    %2026 = vmatprep.subr.mxu0 0.0
    %v2027 = vand.u32 %v62, 4294901760
    %v2028 = vsub.f32 %v62, %v2027
    %2029 = vmatpush1.msra.mxu0 %v2028
    %2030 = vmatprep.subr.mxu0 0.0
    %v2031 = vand.u32 %v61, 4294901760
    %v2032 = vsub.f32 %v61, %v2031
    %2033 = vmatpush1.msra.mxu0 %v2032
    %2034 = vmatprep.subr.mxu0 0.0
    %v2035 = vand.u32 %v60, 4294901760
    %v2036 = vsub.f32 %v60, %v2035
    %2037 = vmatpush1.msra.mxu0 %v2036
    %2038 = vmatprep.subr.mxu0 0.0
    %v2039 = vand.u32 %v59, 4294901760
    %v2040 = vsub.f32 %v59, %v2039
    %2041 = vmatpush1.msra.mxu0 %v2040
    %2042 = vmatprep.subr.mxu0 0.0
    %v2043 = vand.u32 %v58, 4294901760
    %v2044 = vsub.f32 %v58, %v2043
    %2045 = vmatpush1.msra.mxu0 %v2044
    %2046 = vmatprep.subr.mxu0 0.0
    %v2047 = vand.u32 %v57, 4294901760
    %v2048 = vsub.f32 %v57, %v2047
    %2049 = vmatpush1.msra.mxu0 %v2048
    %2050 = vmatprep.subr.mxu0 0.0
    %2051 = vmatpush2.msra.mxu0 0.0
    %2052 = vmatprep.subr.mxu0 0.0
    %2053 = vmatpush2.msra.mxu0 0.0
    %2054 = vmatprep.subr.mxu0 0.0
    %2055 = vmatpush2.msra.mxu0 0.0
    %2056 = vmatprep.subr.mxu0 0.0
    %2057 = vmatpush2.msra.mxu0 0.0
    %2058 = vmatprep.subr.mxu0 0.0
    %2059 = vmatpush2.msra.mxu0 0.0
    %2060 = vmatprep.subr.mxu0 0.0
    %2061 = vmatpush2.msra.mxu0 0.0
    %2062 = vmatprep.subr.mxu0 0.0
    %2063 = vmatpush2.msra.mxu0 0.0
    %2064 = vmatprep.subr.mxu0 0.0
    %2065 = vmatpush2.msra.mxu0 0.0
    %2066 = vmatprep.subr.mxu0 0.0
    %2067 = vmatpush2.msra.mxu0 0.0
    %2068 = vmatprep.subr.mxu0 0.0
    %2069 = vmatpush2.msra.mxu0 0.0
    %2070 = vmatprep.subr.mxu0 0.0
    %2071 = vmatpush2.msra.mxu0 0.0
    %2072 = vmatprep.subr.mxu0 0.0
    %2073 = vmatpush2.msra.mxu0 0.0
    %2074 = vmatprep.subr.mxu0 0.0
    %v2075 = vand.u32 %v76, 4294901760
    %v2076 = vsub.f32 %v76, %v2075
    %2077 = vmatpush2.msra.mxu0 %v2076
    %2078 = vmatprep.subr.mxu0 0.0
    %v2079 = vand.u32 %v75, 4294901760
    %v2080 = vsub.f32 %v75, %v2079
    %2081 = vmatpush2.msra.mxu0 %v2080
    %2082 = vmatprep.subr.mxu0 0.0
    %v2083 = vand.u32 %v74, 4294901760
    %v2084 = vsub.f32 %v74, %v2083
    %2085 = vmatpush2.msra.mxu0 %v2084
    %2086 = vmatprep.subr.mxu0 0.0
    %v2087 = vand.u32 %v73, 4294901760
    %v2088 = vsub.f32 %v73, %v2087
    %2089 = vmatpush2.msra.mxu0 %v2088
    %v2090 = vand.u32 %v1637, 4294901760
    %v2091 = vsub.f32 %v1637, %v2090
    %2092 = vmatprep.mubr.f32.mxu0 %v2091
    %v2093 = vand.u32 %v1628, 4294901760
    %v2094 = vsub.f32 %v1628, %v2093
    %2095 = vmatmul.mubr.f32.gmra.mxu0 %v2094
    %v2096 = vpop.f32.mrf.mxu0
    %v2097 = vadd.f32 %v1962, %v2096
    %v2098 = vpop.f32.mrf.mxu0
    %v2099 = vand.u32 %v1640, 4294901760
    %v2100 = vsub.f32 %v1640, %v2099
    %2101 = vmatprep.mubr.f32.mxu0 %v2100
    %v2102 = vand.u32 %v1630, 4294901760
    %v2103 = vsub.f32 %v1630, %v2102
    %2104 = vmatmul.mubr.f32.gmra.mxu0 %v2103
    %v2105 = vpop.f32.mrf.mxu0
    %v2106 = vadd.f32 %v1969, %v2105
    %v2107 = vpop.f32.mrf.mxu0
    %v2108 = vand.u32 %v1643, 4294901760
    %v2109 = vsub.f32 %v1643, %v2108
    %2110 = vmatprep.mubr.f32.mxu0 %v2109
    %v2111 = vand.u32 %v1632, 4294901760
    %v2112 = vsub.f32 %v1632, %v2111
    %2113 = vmatmul.mubr.f32.gmra.mxu0 %v2112
    %v2114 = vpop.f32.mrf.mxu0
    %v2115 = vadd.f32 %v1976, %v2114
    %v2116 = vpop.f32.mrf.mxu0
    %v2117 = vand.u32 %v1646, 4294901760
    %v2118 = vsub.f32 %v1646, %v2117
    %2119 = vmatprep.mubr.f32.mxu0 %v2118
    %v2120 = vand.u32 %v1634, 4294901760
    %v2121 = vsub.f32 %v1634, %v2120
    %2122 = vmatmul.mubr.f32.gmra.mxu0 %v2121
    %v2123 = vpop.f32.mrf.mxu0
    %v2124 = vadd.f32 %v1983, %v2123
    %v2125 = vpop.f32.mrf.mxu0
    %2126 = vdwg.mxu0
    %2127 = vmatprep.subr.mxu0 0.0
    %v2128 = vand.u32 %v72, 4294901760
    %2129 = vmatpush1.msra.mxu0 %v2128
    %2130 = vmatprep.subr.mxu0 0.0
    %v2131 = vand.u32 %v71, 4294901760
    %2132 = vmatpush1.msra.mxu0 %v2131
    %2133 = vmatprep.subr.mxu0 0.0
    %v2134 = vand.u32 %v70, 4294901760
    %2135 = vmatpush1.msra.mxu0 %v2134
    %2136 = vmatprep.subr.mxu0 0.0
    %v2137 = vand.u32 %v69, 4294901760
    %2138 = vmatpush1.msra.mxu0 %v2137
    %2139 = vmatprep.subr.mxu0 0.0
    %v2140 = vand.u32 %v68, 4294901760
    %2141 = vmatpush1.msra.mxu0 %v2140
    %2142 = vmatprep.subr.mxu0 0.0
    %v2143 = vand.u32 %v67, 4294901760
    %2144 = vmatpush1.msra.mxu0 %v2143
    %2145 = vmatprep.subr.mxu0 0.0
    %v2146 = vand.u32 %v66, 4294901760
    %2147 = vmatpush1.msra.mxu0 %v2146
    %2148 = vmatprep.subr.mxu0 0.0
    %v2149 = vand.u32 %v65, 4294901760
    %2150 = vmatpush1.msra.mxu0 %v2149
    %2151 = vmatprep.subr.mxu0 0.0
    %v2152 = vand.u32 %v64, 4294901760
    %2153 = vmatpush1.msra.mxu0 %v2152
    %2154 = vmatprep.subr.mxu0 0.0
    %v2155 = vand.u32 %v63, 4294901760
    %2156 = vmatpush1.msra.mxu0 %v2155
    %2157 = vmatprep.subr.mxu0 0.0
    %v2158 = vand.u32 %v62, 4294901760
    %2159 = vmatpush1.msra.mxu0 %v2158
    %2160 = vmatprep.subr.mxu0 0.0
    %v2161 = vand.u32 %v61, 4294901760
    %2162 = vmatpush1.msra.mxu0 %v2161
    %2163 = vmatprep.subr.mxu0 0.0
    %v2164 = vand.u32 %v60, 4294901760
    %2165 = vmatpush1.msra.mxu0 %v2164
    %2166 = vmatprep.subr.mxu0 0.0
    %v2167 = vand.u32 %v59, 4294901760
    %2168 = vmatpush1.msra.mxu0 %v2167
    %2169 = vmatprep.subr.mxu0 0.0
    %v2170 = vand.u32 %v58, 4294901760
    %2171 = vmatpush1.msra.mxu0 %v2170
    %2172 = vmatprep.subr.mxu0 0.0
    %v2173 = vand.u32 %v57, 4294901760
    %2174 = vmatpush1.msra.mxu0 %v2173
    %2175 = vmatprep.subr.mxu0 0.0
    %2176 = vmatpush2.msra.mxu0 0.0
    %2177 = vmatprep.subr.mxu0 0.0
    %2178 = vmatpush2.msra.mxu0 0.0
    %2179 = vmatprep.subr.mxu0 0.0
    %2180 = vmatpush2.msra.mxu0 0.0
    %2181 = vmatprep.subr.mxu0 0.0
    %2182 = vmatpush2.msra.mxu0 0.0
    %2183 = vmatprep.subr.mxu0 0.0
    %2184 = vmatpush2.msra.mxu0 0.0
    %2185 = vmatprep.subr.mxu0 0.0
    %2186 = vmatpush2.msra.mxu0 0.0
    %2187 = vmatprep.subr.mxu0 0.0
    %2188 = vmatpush2.msra.mxu0 0.0
    %2189 = vmatprep.subr.mxu0 0.0
    %2190 = vmatpush2.msra.mxu0 0.0
    %2191 = vmatprep.subr.mxu0 0.0
    %2192 = vmatpush2.msra.mxu0 0.0
    %2193 = vmatprep.subr.mxu0 0.0
    %2194 = vmatpush2.msra.mxu0 0.0
    %2195 = vmatprep.subr.mxu0 0.0
    %2196 = vmatpush2.msra.mxu0 0.0
    %2197 = vmatprep.subr.mxu0 0.0
    %2198 = vmatpush2.msra.mxu0 0.0
    %2199 = vmatprep.subr.mxu0 0.0
    %v2200 = vand.u32 %v76, 4294901760
    %2201 = vmatpush2.msra.mxu0 %v2200
    %2202 = vmatprep.subr.mxu0 0.0
    %v2203 = vand.u32 %v75, 4294901760
    %2204 = vmatpush2.msra.mxu0 %v2203
    %2205 = vmatprep.subr.mxu0 0.0
    %v2206 = vand.u32 %v74, 4294901760
    %2207 = vmatpush2.msra.mxu0 %v2206
    %2208 = vmatprep.subr.mxu0 0.0
    %v2209 = vand.u32 %v73, 4294901760
    %2210 = vmatpush2.msra.mxu0 %v2209
    %v2211 = vand.u32 %v1637, 4294901760
    %v2212 = vsub.f32 %v1637, %v2211
    %v2213 = vand.u32 %v2212, 4294901760
    %2214 = vmatprep.mubr.f32.mxu0 %v2213
    %v2215 = vand.u32 %v1628, 4294901760
    %v2216 = vsub.f32 %v1628, %v2215
    %v2217 = vand.u32 %v2216, 4294901760
    %2218 = vmatmul.mubr.f32.gmra.mxu0 %v2217
    %v2219 = vpop.f32.mrf.mxu0
    %v2220 = vadd.f32 %v2097, %v2219
    %v2221 = vpop.f32.mrf.mxu0
    %v2222 = vand.u32 %v1640, 4294901760
    %v2223 = vsub.f32 %v1640, %v2222
    %v2224 = vand.u32 %v2223, 4294901760
    %2225 = vmatprep.mubr.f32.mxu0 %v2224
    %v2226 = vand.u32 %v1630, 4294901760
    %v2227 = vsub.f32 %v1630, %v2226
    %v2228 = vand.u32 %v2227, 4294901760
    %2229 = vmatmul.mubr.f32.gmra.mxu0 %v2228
    %v2230 = vpop.f32.mrf.mxu0
    %v2231 = vadd.f32 %v2106, %v2230
    %v2232 = vpop.f32.mrf.mxu0
    %v2233 = vand.u32 %v1643, 4294901760
    %v2234 = vsub.f32 %v1643, %v2233
    %v2235 = vand.u32 %v2234, 4294901760
    %2236 = vmatprep.mubr.f32.mxu0 %v2235
    %v2237 = vand.u32 %v1632, 4294901760
    %v2238 = vsub.f32 %v1632, %v2237
    %v2239 = vand.u32 %v2238, 4294901760
    %2240 = vmatmul.mubr.f32.gmra.mxu0 %v2239
    %v2241 = vpop.f32.mrf.mxu0
    %v2242 = vadd.f32 %v2115, %v2241
    %v2243 = vpop.f32.mrf.mxu0
    %v2244 = vand.u32 %v1646, 4294901760
    %v2245 = vsub.f32 %v1646, %v2244
    %v2246 = vand.u32 %v2245, 4294901760
    %2247 = vmatprep.mubr.f32.mxu0 %v2246
    %v2248 = vand.u32 %v1634, 4294901760
    %v2249 = vsub.f32 %v1634, %v2248
    %v2250 = vand.u32 %v2249, 4294901760
    %2251 = vmatmul.mubr.f32.gmra.mxu0 %v2250
    %v2252 = vpop.f32.mrf.mxu0
    %v2253 = vadd.f32 %v2124, %v2252
    %v2254 = vpop.f32.mrf.mxu0
    %2255 = vdwg.mxu0
    %2256 = vmatprep.subr.mxu0 0.0
    %v2257 = vand.u32 %v72, 4294901760
    %v2258 = vsub.f32 %v72, %v2257
    %v2259 = vand.u32 %v2258, 4294901760
    %2260 = vmatpush1.msra.mxu0 %v2259
    %2261 = vmatprep.subr.mxu0 0.0
    %v2262 = vand.u32 %v71, 4294901760
    %v2263 = vsub.f32 %v71, %v2262
    %v2264 = vand.u32 %v2263, 4294901760
    %2265 = vmatpush1.msra.mxu0 %v2264
    %2266 = vmatprep.subr.mxu0 0.0
    %v2267 = vand.u32 %v70, 4294901760
    %v2268 = vsub.f32 %v70, %v2267
    %v2269 = vand.u32 %v2268, 4294901760
    %2270 = vmatpush1.msra.mxu0 %v2269
    %2271 = vmatprep.subr.mxu0 0.0
    %v2272 = vand.u32 %v69, 4294901760
    %v2273 = vsub.f32 %v69, %v2272
    %v2274 = vand.u32 %v2273, 4294901760
    %2275 = vmatpush1.msra.mxu0 %v2274
    %2276 = vmatprep.subr.mxu0 0.0
    %v2277 = vand.u32 %v68, 4294901760
    %v2278 = vsub.f32 %v68, %v2277
    %v2279 = vand.u32 %v2278, 4294901760
    %2280 = vmatpush1.msra.mxu0 %v2279
    %2281 = vmatprep.subr.mxu0 0.0
    %v2282 = vand.u32 %v67, 4294901760
    %v2283 = vsub.f32 %v67, %v2282
    %v2284 = vand.u32 %v2283, 4294901760
    %2285 = vmatpush1.msra.mxu0 %v2284
    %2286 = vmatprep.subr.mxu0 0.0
    %v2287 = vand.u32 %v66, 4294901760
    %v2288 = vsub.f32 %v66, %v2287
    %v2289 = vand.u32 %v2288, 4294901760
    %2290 = vmatpush1.msra.mxu0 %v2289
    %2291 = vmatprep.subr.mxu0 0.0
    %v2292 = vand.u32 %v65, 4294901760
    %v2293 = vsub.f32 %v65, %v2292
    %v2294 = vand.u32 %v2293, 4294901760
    %2295 = vmatpush1.msra.mxu0 %v2294
    %2296 = vmatprep.subr.mxu0 0.0
    %v2297 = vand.u32 %v64, 4294901760
    %v2298 = vsub.f32 %v64, %v2297
    %v2299 = vand.u32 %v2298, 4294901760
    %2300 = vmatpush1.msra.mxu0 %v2299
    %2301 = vmatprep.subr.mxu0 0.0
    %v2302 = vand.u32 %v63, 4294901760
    %v2303 = vsub.f32 %v63, %v2302
    %v2304 = vand.u32 %v2303, 4294901760
    %2305 = vmatpush1.msra.mxu0 %v2304
    %2306 = vmatprep.subr.mxu0 0.0
    %v2307 = vand.u32 %v62, 4294901760
    %v2308 = vsub.f32 %v62, %v2307
    %v2309 = vand.u32 %v2308, 4294901760
    %2310 = vmatpush1.msra.mxu0 %v2309
    %2311 = vmatprep.subr.mxu0 0.0
    %v2312 = vand.u32 %v61, 4294901760
    %v2313 = vsub.f32 %v61, %v2312
    %v2314 = vand.u32 %v2313, 4294901760
    %2315 = vmatpush1.msra.mxu0 %v2314
    %2316 = vmatprep.subr.mxu0 0.0
    %v2317 = vand.u32 %v60, 4294901760
    %v2318 = vsub.f32 %v60, %v2317
    %v2319 = vand.u32 %v2318, 4294901760
    %2320 = vmatpush1.msra.mxu0 %v2319
    %2321 = vmatprep.subr.mxu0 0.0
    %v2322 = vand.u32 %v59, 4294901760
    %v2323 = vsub.f32 %v59, %v2322
    %v2324 = vand.u32 %v2323, 4294901760
    %2325 = vmatpush1.msra.mxu0 %v2324
    %2326 = vmatprep.subr.mxu0 0.0
    %v2327 = vand.u32 %v58, 4294901760
    %v2328 = vsub.f32 %v58, %v2327
    %v2329 = vand.u32 %v2328, 4294901760
    %2330 = vmatpush1.msra.mxu0 %v2329
    %2331 = vmatprep.subr.mxu0 0.0
    %v2332 = vand.u32 %v57, 4294901760
    %v2333 = vsub.f32 %v57, %v2332
    %v2334 = vand.u32 %v2333, 4294901760
    %2335 = vmatpush1.msra.mxu0 %v2334
    %2336 = vmatprep.subr.mxu0 0.0
    %2337 = vmatpush2.msra.mxu0 0.0
    %2338 = vmatprep.subr.mxu0 0.0
    %2339 = vmatpush2.msra.mxu0 0.0
    %2340 = vmatprep.subr.mxu0 0.0
    %2341 = vmatpush2.msra.mxu0 0.0
    %2342 = vmatprep.subr.mxu0 0.0
    %2343 = vmatpush2.msra.mxu0 0.0
    %2344 = vmatprep.subr.mxu0 0.0
    %2345 = vmatpush2.msra.mxu0 0.0
    %2346 = vmatprep.subr.mxu0 0.0
    %2347 = vmatpush2.msra.mxu0 0.0
    %2348 = vmatprep.subr.mxu0 0.0
    %2349 = vmatpush2.msra.mxu0 0.0
    %2350 = vmatprep.subr.mxu0 0.0
    %2351 = vmatpush2.msra.mxu0 0.0
    %2352 = vmatprep.subr.mxu0 0.0
    %2353 = vmatpush2.msra.mxu0 0.0
    %2354 = vmatprep.subr.mxu0 0.0
    %2355 = vmatpush2.msra.mxu0 0.0
    %2356 = vmatprep.subr.mxu0 0.0
    %2357 = vmatpush2.msra.mxu0 0.0
    %2358 = vmatprep.subr.mxu0 0.0
    %2359 = vmatpush2.msra.mxu0 0.0
    %2360 = vmatprep.subr.mxu0 0.0
    %v2361 = vand.u32 %v76, 4294901760
    %v2362 = vsub.f32 %v76, %v2361
    %v2363 = vand.u32 %v2362, 4294901760
    %2364 = vmatpush2.msra.mxu0 %v2363
    %2365 = vmatprep.subr.mxu0 0.0
    %v2366 = vand.u32 %v75, 4294901760
    %v2367 = vsub.f32 %v75, %v2366
    %v2368 = vand.u32 %v2367, 4294901760
    %2369 = vmatpush2.msra.mxu0 %v2368
    %2370 = vmatprep.subr.mxu0 0.0
    %v2371 = vand.u32 %v74, 4294901760
    %v2372 = vsub.f32 %v74, %v2371
    %v2373 = vand.u32 %v2372, 4294901760
    %2374 = vmatpush2.msra.mxu0 %v2373
    %2375 = vmatprep.subr.mxu0 0.0
    %v2376 = vand.u32 %v73, 4294901760
    %v2377 = vsub.f32 %v73, %v2376
    %v2378 = vand.u32 %v2377, 4294901760
    %2379 = vmatpush2.msra.mxu0 %v2378
    %v2380 = vand.u32 %v1637, 4294901760
    %2381 = vmatprep.mubr.f32.mxu0 %v2380
    %v2382 = vand.u32 %v1628, 4294901760
    %2383 = vmatmul.mubr.f32.gmra.mxu0 %v2382
    %v2384 = vpop.f32.mrf.mxu0
    %v2385 = vadd.f32 %v2220, %v2384
    %v2386 = vpop.f32.mrf.mxu0
    %v2387 = vand.u32 %v1640, 4294901760
    %2388 = vmatprep.mubr.f32.mxu0 %v2387
    %v2389 = vand.u32 %v1630, 4294901760
    %2390 = vmatmul.mubr.f32.gmra.mxu0 %v2389
    %v2391 = vpop.f32.mrf.mxu0
    %v2392 = vadd.f32 %v2231, %v2391
    %v2393 = vpop.f32.mrf.mxu0
    %v2394 = vand.u32 %v1643, 4294901760
    %2395 = vmatprep.mubr.f32.mxu0 %v2394
    %v2396 = vand.u32 %v1632, 4294901760
    %2397 = vmatmul.mubr.f32.gmra.mxu0 %v2396
    %v2398 = vpop.f32.mrf.mxu0
    %v2399 = vadd.f32 %v2242, %v2398
    %v2400 = vpop.f32.mrf.mxu0
    %v2401 = vand.u32 %v1646, 4294901760
    %2402 = vmatprep.mubr.f32.mxu0 %v2401
    %v2403 = vand.u32 %v1634, 4294901760
    %2404 = vmatmul.mubr.f32.gmra.mxu0 %v2403
    %v2405 = vpop.f32.mrf.mxu0
    %v2406 = vadd.f32 %v2253, %v2405
    %v2407 = vpop.f32.mrf.mxu0
    %2408 = vdwg.mxu0
    %2409 = vmatprep.subr.mxu0 0.0
    %v2410 = vand.u32 %v72, 4294901760
    %2411 = vmatpush1.msra.mxu0 %v2410
    %2412 = vmatprep.subr.mxu0 0.0
    %v2413 = vand.u32 %v71, 4294901760
    %2414 = vmatpush1.msra.mxu0 %v2413
    %2415 = vmatprep.subr.mxu0 0.0
    %v2416 = vand.u32 %v70, 4294901760
    %2417 = vmatpush1.msra.mxu0 %v2416
    %2418 = vmatprep.subr.mxu0 0.0
    %v2419 = vand.u32 %v69, 4294901760
    %2420 = vmatpush1.msra.mxu0 %v2419
    %2421 = vmatprep.subr.mxu0 0.0
    %v2422 = vand.u32 %v68, 4294901760
    %2423 = vmatpush1.msra.mxu0 %v2422
    %2424 = vmatprep.subr.mxu0 0.0
    %v2425 = vand.u32 %v67, 4294901760
    %2426 = vmatpush1.msra.mxu0 %v2425
    %2427 = vmatprep.subr.mxu0 0.0
    %v2428 = vand.u32 %v66, 4294901760
    %2429 = vmatpush1.msra.mxu0 %v2428
    %2430 = vmatprep.subr.mxu0 0.0
    %v2431 = vand.u32 %v65, 4294901760
    %2432 = vmatpush1.msra.mxu0 %v2431
    %2433 = vmatprep.subr.mxu0 0.0
    %v2434 = vand.u32 %v64, 4294901760
    %2435 = vmatpush1.msra.mxu0 %v2434
    %2436 = vmatprep.subr.mxu0 0.0
    %v2437 = vand.u32 %v63, 4294901760
    %2438 = vmatpush1.msra.mxu0 %v2437
    %2439 = vmatprep.subr.mxu0 0.0
    %v2440 = vand.u32 %v62, 4294901760
    %2441 = vmatpush1.msra.mxu0 %v2440
    %2442 = vmatprep.subr.mxu0 0.0
    %v2443 = vand.u32 %v61, 4294901760
    %2444 = vmatpush1.msra.mxu0 %v2443
    %2445 = vmatprep.subr.mxu0 0.0
    %v2446 = vand.u32 %v60, 4294901760
    %2447 = vmatpush1.msra.mxu0 %v2446
    %2448 = vmatprep.subr.mxu0 0.0
    %v2449 = vand.u32 %v59, 4294901760
    %2450 = vmatpush1.msra.mxu0 %v2449
    %2451 = vmatprep.subr.mxu0 0.0
    %v2452 = vand.u32 %v58, 4294901760
    %2453 = vmatpush1.msra.mxu0 %v2452
    %2454 = vmatprep.subr.mxu0 0.0
    %v2455 = vand.u32 %v57, 4294901760
    %2456 = vmatpush1.msra.mxu0 %v2455
    %2457 = vmatprep.subr.mxu0 0.0
    %2458 = vmatpush2.msra.mxu0 0.0
    %2459 = vmatprep.subr.mxu0 0.0
    %2460 = vmatpush2.msra.mxu0 0.0
    %2461 = vmatprep.subr.mxu0 0.0
    %2462 = vmatpush2.msra.mxu0 0.0
    %2463 = vmatprep.subr.mxu0 0.0
    %2464 = vmatpush2.msra.mxu0 0.0
    %2465 = vmatprep.subr.mxu0 0.0
    %2466 = vmatpush2.msra.mxu0 0.0
    %2467 = vmatprep.subr.mxu0 0.0
    %2468 = vmatpush2.msra.mxu0 0.0
    %2469 = vmatprep.subr.mxu0 0.0
    %2470 = vmatpush2.msra.mxu0 0.0
    %2471 = vmatprep.subr.mxu0 0.0
    %2472 = vmatpush2.msra.mxu0 0.0
    %2473 = vmatprep.subr.mxu0 0.0
    %2474 = vmatpush2.msra.mxu0 0.0
    %2475 = vmatprep.subr.mxu0 0.0
    %2476 = vmatpush2.msra.mxu0 0.0
    %2477 = vmatprep.subr.mxu0 0.0
    %2478 = vmatpush2.msra.mxu0 0.0
    %2479 = vmatprep.subr.mxu0 0.0
    %2480 = vmatpush2.msra.mxu0 0.0
    %2481 = vmatprep.subr.mxu0 0.0
    %v2482 = vand.u32 %v76, 4294901760
    %2483 = vmatpush2.msra.mxu0 %v2482
    %2484 = vmatprep.subr.mxu0 0.0
    %v2485 = vand.u32 %v75, 4294901760
    %2486 = vmatpush2.msra.mxu0 %v2485
    %2487 = vmatprep.subr.mxu0 0.0
    %v2488 = vand.u32 %v74, 4294901760
    %2489 = vmatpush2.msra.mxu0 %v2488
    %2490 = vmatprep.subr.mxu0 0.0
    %v2491 = vand.u32 %v73, 4294901760
    %2492 = vmatpush2.msra.mxu0 %v2491
    %v2493 = vand.u32 %v1637, 4294901760
    %2494 = vmatprep.mubr.f32.mxu0 %v2493
    %v2495 = vand.u32 %v1628, 4294901760
    %2496 = vmatmul.mubr.f32.gmra.mxu0 %v2495
    %v2497 = vpop.f32.mrf.mxu0
    %v2498 = vadd.f32 %v2385, %v2497
    %v2499 = vpop.f32.mrf.mxu0
    %v2500 = vand.u32 %v1640, 4294901760
    %2501 = vmatprep.mubr.f32.mxu0 %v2500
    %v2502 = vand.u32 %v1630, 4294901760
    %2503 = vmatmul.mubr.f32.gmra.mxu0 %v2502
    %v2504 = vpop.f32.mrf.mxu0
    %v2505 = vadd.f32 %v2392, %v2504
    %v2506 = vpop.f32.mrf.mxu0
    %v2507 = vand.u32 %v1643, 4294901760
    %2508 = vmatprep.mubr.f32.mxu0 %v2507
    %v2509 = vand.u32 %v1632, 4294901760
    %2510 = vmatmul.mubr.f32.gmra.mxu0 %v2509
    %v2511 = vpop.f32.mrf.mxu0
    %v2512 = vadd.f32 %v2399, %v2511
    %v2513 = vpop.f32.mrf.mxu0
    %v2514 = vand.u32 %v1646, 4294901760
    %2515 = vmatprep.mubr.f32.mxu0 %v2514
    %v2516 = vand.u32 %v1634, 4294901760
    %2517 = vmatmul.mubr.f32.gmra.mxu0 %v2516
    %v2518 = vpop.f32.mrf.mxu0
    %v2519 = vadd.f32 %v2406, %v2518
    %v2520 = vpop.f32.mrf.mxu0
    %2521 = vdwg.mxu0
    %v2522 = vmul.f32 %v2498, 0.5
    %v2523 = vmul.f32 %v2505, 0.5
    %v2524 = vmul.f32 %v2512, 0.5
    %v2525 = vmul.f32 %v2519, 0.5
    %v2526 = vadd.f32 %v2522, 0.0
    %v2527 = vadd.f32 %v2523, 0.0
    %v2528 = vadd.f32 %v2524, 0.0
    %v2529 = vadd.f32 %v2525, 0.0
    %v2530 = vsel %vm1481, %v2526, -inf
    %2531 = vmax.xlane.f32.xlu0 %v2530
    %v2532 = vpop.xlane.xlu0 %2531
    %v2533 = vsel %vm1481, %v2527, -inf
    %2534 = vmax.xlane.f32.xlu0 %v2533
    %v2535 = vpop.xlane.xlu0 %2534
    %v2536 = vsel %vm1481, %v2528, -inf
    %2537 = vmax.xlane.f32.xlu0 %v2536
    %v2538 = vpop.xlane.xlu0 %2537
    %v2539 = vsel %vm1481, %v2529, -inf
    %2540 = vmax.xlane.f32.xlu0 %v2539
    %v2541 = vpop.xlane.xlu0 %2540
    %v2542 = vsub.f32 %v2526, %v2532
    %v2543 = vsub.f32 %v2527, %v2535
    %v2544 = vsub.f32 %v2528, %v2538
    %v2545 = vsub.f32 %v2529, %v2541
    %v2546 = vmul.f32 %v2542, 1.442695
    %v2547 = vpow.pop %v2546
    %v2548 = vmul.f32 %v2543, 1.442695
    %v2549 = vpow.pop %v2548
    %v2550 = vmul.f32 %v2544, 1.442695
    %v2551 = vpow.pop %v2550
    %v2552 = vmul.f32 %v2545, 1.442695
    %v2553 = vpow.pop %v2552
    %v2554 = vsel %vm1481, %v2547, 0.0
    %2555 = vadd.xlane.f32.xlu0 %v2554
    %v2556 = vpop.xlane.xlu0 %2555
    %v2557 = vsel %vm1481, %v2549, 0.0
    %2558 = vadd.xlane.f32.xlu0 %v2557
    %v2559 = vpop.xlane.xlu0 %2558
    %v2560 = vsel %vm1481, %v2551, 0.0
    %2561 = vadd.xlane.f32.xlu0 %v2560
    %v2562 = vpop.xlane.xlu0 %2561
    %v2563 = vsel %vm1481, %v2553, 0.0
    %2564 = vadd.xlane.f32.xlu0 %v2563
    %v2565 = vpop.xlane.xlu0 %2564
    %v2566 = vrcp.pop %v2556
    %v2567 = vmul.f32 %v2547, %v2566
    %v2568 = vrcp.pop %v2559
    %v2569 = vmul.f32 %v2549, %v2568
    %v2570 = vrcp.pop %v2562
    %v2571 = vmul.f32 %v2551, %v2570
    %v2572 = vrcp.pop %v2565
    %v2573 = vmul.f32 %v2553, %v2572
    %v2575 = vsel %vm1481, %v2567, 0
    %v2578 = vsel %vm1481, %v2569, 0
    %v2581 = vsel %vm1481, %v2571, 0
    %v2584 = vsel %vm1481, %v2573, 0
    %2586 = vmatprep.subr.mxu0 0.0
    %2587 = vmatpush1.msra.mxu0 0.0
    %2588 = vmatprep.subr.mxu0 0.0
    %2589 = vmatpush1.msra.mxu0 0.0
    %2590 = vmatprep.subr.mxu0 0.0
    %2591 = vmatpush1.msra.mxu0 0.0
    %2592 = vmatprep.subr.mxu0 0.0
    %2593 = vmatpush1.msra.mxu0 0.0
    %2594 = vmatprep.subr.mxu0 0.0
    %2595 = vmatpush1.msra.mxu0 0.0
    %2596 = vmatprep.subr.mxu0 0.0
    %2597 = vmatpush1.msra.mxu0 0.0
    %2598 = vmatprep.subr.mxu0 0.0
    %2599 = vmatpush1.msra.mxu0 0.0
    %2600 = vmatprep.subr.mxu0 0.0
    %2601 = vmatpush1.msra.mxu0 0.0
    %2602 = vmatprep.subr.mxu0 0.0
    %2603 = vmatpush1.msra.mxu0 0.0
    %2604 = vmatprep.subr.mxu0 0.0
    %2605 = vmatpush1.msra.mxu0 0.0
    %2606 = vmatprep.subr.mxu0 0.0
    %2607 = vmatpush1.msra.mxu0 0.0
    %2608 = vmatprep.subr.mxu0 0.0
    %2609 = vmatpush1.msra.mxu0 0.0
    %2610 = vmatprep.subr.mxu0 0.0
    %2611 = vmatpush1.msra.mxu0 0.0
    %2612 = vmatprep.subr.mxu0 0.0
    %2613 = vmatpush1.msra.mxu0 0.0
    %2614 = vmatprep.subr.mxu0 %v1490
    %2615 = vmatpush1.msra.mxu0 %v1487
    %2616 = vmatprep.subr.mxu0 %v54
    %2617 = vmatpush1.msra.mxu0 %v53
    %2618 = vmatprep.subr.mxu0 0.0
    %2619 = vmatpush2.msra.mxu0 0.0
    %2620 = vmatprep.subr.mxu0 0.0
    %2621 = vmatpush2.msra.mxu0 0.0
    %2622 = vmatprep.subr.mxu0 0.0
    %2623 = vmatpush2.msra.mxu0 0.0
    %2624 = vmatprep.subr.mxu0 0.0
    %2625 = vmatpush2.msra.mxu0 0.0
    %2626 = vmatprep.subr.mxu0 0.0
    %2627 = vmatpush2.msra.mxu0 0.0
    %2628 = vmatprep.subr.mxu0 0.0
    %2629 = vmatpush2.msra.mxu0 0.0
    %2630 = vmatprep.subr.mxu0 0.0
    %2631 = vmatpush2.msra.mxu0 0.0
    %2632 = vmatprep.subr.mxu0 0.0
    %2633 = vmatpush2.msra.mxu0 0.0
    %2634 = vmatprep.subr.mxu0 0.0
    %2635 = vmatpush2.msra.mxu0 0.0
    %2636 = vmatprep.subr.mxu0 0.0
    %2637 = vmatpush2.msra.mxu0 0.0
    %2638 = vmatprep.subr.mxu0 0.0
    %2639 = vmatpush2.msra.mxu0 0.0
    %2640 = vmatprep.subr.mxu0 0.0
    %2641 = vmatpush2.msra.mxu0 0.0
    %2642 = vmatprep.subr.mxu0 0.0
    %2643 = vmatpush2.msra.mxu0 0.0
    %2644 = vmatprep.subr.mxu0 0.0
    %2645 = vmatpush2.msra.mxu0 0.0
    %2646 = vmatprep.subr.mxu0 0.0
    %2647 = vmatpush2.msra.mxu0 0.0
    %2648 = vmatprep.subr.mxu0 0.0
    %2649 = vmatpush2.msra.mxu0 0.0
    %2650 = vmatprep.mubr.f32.mxu0 0.0
    %2651 = vmatmul.mubr.f32.gmra.mxu0 %v2575
    %v2652 = vpop.f32.mrf.mxu0
    %v2653 = vadd.f32 0.0, %v2652
    %v2654 = vpop.f32.mrf.mxu0
    %v2655 = vadd.f32 0.0, %v2654
    %2656 = vmatprep.mubr.f32.mxu0 0.0
    %2657 = vmatmul.mubr.f32.gmra.mxu0 %v2578
    %v2658 = vpop.f32.mrf.mxu0
    %v2659 = vadd.f32 0.0, %v2658
    %v2660 = vpop.f32.mrf.mxu0
    %v2661 = vadd.f32 0.0, %v2660
    %2662 = vmatprep.mubr.f32.mxu0 0.0
    %2663 = vmatmul.mubr.f32.gmra.mxu0 %v2581
    %v2664 = vpop.f32.mrf.mxu0
    %v2665 = vadd.f32 0.0, %v2664
    %v2666 = vpop.f32.mrf.mxu0
    %v2667 = vadd.f32 0.0, %v2666
    %2668 = vmatprep.mubr.f32.mxu0 0.0
    %2669 = vmatmul.mubr.f32.gmra.mxu0 %v2584
    %v2670 = vpop.f32.mrf.mxu0
    %v2671 = vadd.f32 0.0, %v2670
    %v2672 = vpop.f32.mrf.mxu0
    %v2673 = vadd.f32 0.0, %v2672
    %2674 = vdwg.mxu0
    %v2675 = vmul.f32 %v2653, %v612
    %v2676 = vmul.f32 %v2655, %v613
    %v2677 = vmul.f32 %v2659, %v614
    %v2678 = vmul.f32 %v2661, %v615
    %v2679 = vmul.f32 %v2665, %v616
    %v2680 = vmul.f32 %v2667, %v617
    %v2681 = vmul.f32 %v2671, %v618
    %v2682 = vmul.f32 %v2673, %v619
    %v2683 = vadd.f32 %v2675, %v2677
    %v2684 = vadd.f32 %v2683, %v2679
    %v2685 = vadd.f32 %v2684, %v2681
    %v2686 = vrot.slane %v2685, 4
    %v2687 = vadd.f32 %v2685, %v2686
    %v2688 = vrot.slane %v2687, 2
    %v2689 = vadd.f32 %v2687, %v2688
    %v2690 = vrot.slane %v2689, 1
    %v2691 = vadd.f32 %v2689, %v2690
    %v2692 = vsel %vm669, %v2676, 0.0
    %v2693 = vsel %vm669, %v2678, 0.0
    %v2694 = vadd.f32 %v2692, %v2693
    %v2695 = vsel %vm669, %v2680, 0.0
    %v2696 = vadd.f32 %v2694, %v2695
    %v2697 = vsel %vm669, %v2682, 0.0
    %v2698 = vadd.f32 %v2696, %v2697
    %v2699 = vrot.slane %v2698, 4
    %v2700 = vadd.f32 %v2698, %v2699
    %v2701 = vrot.slane %v2700, 2
    %v2702 = vadd.f32 %v2700, %v2701
    %v2703 = vrot.slane %v2702, 1
    %v2704 = vadd.f32 %v2702, %v2703
    %v2707 = vcombine.low %v2691, %v2704
    %v2709 = vunpack.c.l.s4 1966171168
    %v2710 = vunpack.c.0.s8 %v2709
    %v2711 = vlaneseq
    %v2712 = vshrl.u32 %v2711, 7
    %v2713 = vsub.s32 %v2710, %v2712
    %v2714 = vrot.slane %v2707, %v2713
    %v2716 = vunpack.c.l.s4 1966171168
    %v2717 = vunpack.c.0.s8 %v2716
    %v2718 = vlaneseq
    %v2719 = vshrl.u32 %v2718, 7
    %v2720 = vsub.s32 %v2717, %v2719
    %v2721 = vrot.slane %v2714, %v2720
    %2723 = vst.msk [vmem:[#allocation2] ss:$2 sm:$0x3] %vm704, %v2721
    %v2724 = vmul.f32 %v2653, %v644
    %v2725 = vmul.f32 %v2655, %v645
    %v2726 = vmul.f32 %v2659, %v646
    %v2727 = vmul.f32 %v2661, %v647
    %v2728 = vmul.f32 %v2665, %v648
    %v2729 = vmul.f32 %v2667, %v649
    %v2730 = vmul.f32 %v2671, %v650
    %v2731 = vmul.f32 %v2673, %v651
    %v2732 = vadd.f32 %v2724, %v2726
    %v2733 = vadd.f32 %v2732, %v2728
    %v2734 = vadd.f32 %v2733, %v2730
    %v2735 = vrot.slane %v2734, 4
    %v2736 = vadd.f32 %v2734, %v2735
    %v2737 = vrot.slane %v2736, 2
    %v2738 = vadd.f32 %v2736, %v2737
    %v2739 = vrot.slane %v2738, 1
    %v2740 = vadd.f32 %v2738, %v2739
    %v2741 = vsel %vm669, %v2725, 0.0
    %v2742 = vsel %vm669, %v2727, 0.0
    %v2743 = vadd.f32 %v2741, %v2742
    %v2744 = vsel %vm669, %v2729, 0.0
    %v2745 = vadd.f32 %v2743, %v2744
    %v2746 = vsel %vm669, %v2731, 0.0
    %v2747 = vadd.f32 %v2745, %v2746
    %v2748 = vrot.slane %v2747, 4
    %v2749 = vadd.f32 %v2747, %v2748
    %v2750 = vrot.slane %v2749, 2
    %v2751 = vadd.f32 %v2749, %v2750
    %v2752 = vrot.slane %v2751, 1
    %v2753 = vadd.f32 %v2751, %v2752
    %v2756 = vcombine.low %v2740, %v2753
    %v2758 = vunpack.c.l.s4 1966171168
    %v2759 = vunpack.c.0.s8 %v2758
    %v2760 = vlaneseq
    %v2761 = vshrl.u32 %v2760, 7
    %v2762 = vsub.s32 %v2759, %v2761
    %v2763 = vrot.slane %v2756, %v2762
    %v2765 = vunpack.c.l.s4 1966171168
    %v2766 = vunpack.c.0.s8 %v2765
    %v2767 = vlaneseq
    %v2768 = vshrl.u32 %v2767, 7
    %v2769 = vsub.s32 %v2766, %v2768
    %v2770 = vrot.slane %v2763, %v2769
    %2772 = vst.msk [vmem:[%s754] ss:$2 sm:$0x3] %vm704, %v2770
    %v2773 = vld [vmem:[#allocation2] sm:$0xf]
    %v2774 = vmul.f32 %v2773, %v2773
    %v2777 = vunpack.c.l.s4 1983009808
    %v2778 = vunpack.c.0.s8 %v2777
    %v2779 = vlaneseq
    %v2780 = vshrl.u32 %v2779, 7
    %v2781 = vsub.s32 %v2778, %v2780
    %v2782 = vrot.slane %v2774, %v2781
    %v2783 = vcombine.high %v2782, %v2782
    %v2785 = vsel %vm669, %v2783, 0
    %2787 = vmatprep.subr.mxu0 0.0
    %v2788 = vand.u32 %v72, 4294901760
    %2789 = vmatpush1.msra.mxu0 %v2788
    %2790 = vmatprep.subr.mxu0 0.0
    %v2791 = vand.u32 %v71, 4294901760
    %2792 = vmatpush1.msra.mxu0 %v2791
    %2793 = vmatprep.subr.mxu0 0.0
    %v2794 = vand.u32 %v70, 4294901760
    %2795 = vmatpush1.msra.mxu0 %v2794
    %2796 = vmatprep.subr.mxu0 0.0
    %v2797 = vand.u32 %v69, 4294901760
    %2798 = vmatpush1.msra.mxu0 %v2797
    %2799 = vmatprep.subr.mxu0 0.0
    %v2800 = vand.u32 %v68, 4294901760
    %2801 = vmatpush1.msra.mxu0 %v2800
    %2802 = vmatprep.subr.mxu0 0.0
    %v2803 = vand.u32 %v67, 4294901760
    %2804 = vmatpush1.msra.mxu0 %v2803
    %2805 = vmatprep.subr.mxu0 0.0
    %v2806 = vand.u32 %v66, 4294901760
    %2807 = vmatpush1.msra.mxu0 %v2806
    %2808 = vmatprep.subr.mxu0 0.0
    %v2809 = vand.u32 %v65, 4294901760
    %2810 = vmatpush1.msra.mxu0 %v2809
    %2811 = vmatprep.subr.mxu0 0.0
    %v2812 = vand.u32 %v64, 4294901760
    %2813 = vmatpush1.msra.mxu0 %v2812
    %2814 = vmatprep.subr.mxu0 0.0
    %v2815 = vand.u32 %v63, 4294901760
    %2816 = vmatpush1.msra.mxu0 %v2815
    %2817 = vmatprep.subr.mxu0 0.0
    %v2818 = vand.u32 %v62, 4294901760
    %2819 = vmatpush1.msra.mxu0 %v2818
    %2820 = vmatprep.subr.mxu0 0.0
    %v2821 = vand.u32 %v61, 4294901760
    %2822 = vmatpush1.msra.mxu0 %v2821
    %2823 = vmatprep.subr.mxu0 0.0
    %v2824 = vand.u32 %v60, 4294901760
    %2825 = vmatpush1.msra.mxu0 %v2824
    %2826 = vmatprep.subr.mxu0 0.0
    %v2827 = vand.u32 %v59, 4294901760
    %2828 = vmatpush1.msra.mxu0 %v2827
    %2829 = vmatprep.subr.mxu0 0.0
    %v2830 = vand.u32 %v58, 4294901760
    %2831 = vmatpush1.msra.mxu0 %v2830
    %2832 = vmatprep.subr.mxu0 0.0
    %v2833 = vand.u32 %v57, 4294901760
    %2834 = vmatpush1.msra.mxu0 %v2833
    %2835 = vmatprep.subr.mxu0 0.0
    %2836 = vmatpush2.msra.mxu0 0.0
    %2837 = vmatprep.subr.mxu0 0.0
    %2838 = vmatpush2.msra.mxu0 0.0
    %2839 = vmatprep.subr.mxu0 0.0
    %2840 = vmatpush2.msra.mxu0 0.0
    %2841 = vmatprep.subr.mxu0 0.0
    %2842 = vmatpush2.msra.mxu0 0.0
    %2843 = vmatprep.subr.mxu0 0.0
    %2844 = vmatpush2.msra.mxu0 0.0
    %2845 = vmatprep.subr.mxu0 0.0
    %2846 = vmatpush2.msra.mxu0 0.0
    %2847 = vmatprep.subr.mxu0 0.0
    %2848 = vmatpush2.msra.mxu0 0.0
    %2849 = vmatprep.subr.mxu0 0.0
    %2850 = vmatpush2.msra.mxu0 0.0
    %2851 = vmatprep.subr.mxu0 0.0
    %2852 = vmatpush2.msra.mxu0 0.0
    %2853 = vmatprep.subr.mxu0 0.0
    %2854 = vmatpush2.msra.mxu0 0.0
    %2855 = vmatprep.subr.mxu0 0.0
    %2856 = vmatpush2.msra.mxu0 0.0
    %2857 = vmatprep.subr.mxu0 0.0
    %2858 = vmatpush2.msra.mxu0 0.0
    %2859 = vmatprep.subr.mxu0 0.0
    %v2860 = vand.u32 %v76, 4294901760
    %2861 = vmatpush2.msra.mxu0 %v2860
    %2862 = vmatprep.subr.mxu0 0.0
    %v2863 = vand.u32 %v75, 4294901760
    %2864 = vmatpush2.msra.mxu0 %v2863
    %2865 = vmatprep.subr.mxu0 0.0
    %v2866 = vand.u32 %v74, 4294901760
    %2867 = vmatpush2.msra.mxu0 %v2866
    %2868 = vmatprep.subr.mxu0 0.0
    %v2869 = vand.u32 %v73, 4294901760
    %2870 = vmatpush2.msra.mxu0 %v2869
    %v2871 = vand.u32 %v2785, 4294901760
    %v2872 = vsub.f32 %v2785, %v2871
    %v2873 = vand.u32 %v2872, 4294901760
    %v2874 = vsub.f32 %v2872, %v2873
    %v2875 = vand.u32 %v2874, 4294901760
    %2876 = vmatprep.mubr.f32.mxu0 %v2875
    %v2877 = vand.u32 %v2782, 4294901760
    %v2878 = vsub.f32 %v2782, %v2877
    %v2879 = vand.u32 %v2878, 4294901760
    %v2880 = vsub.f32 %v2878, %v2879
    %v2881 = vand.u32 %v2880, 4294901760
    %2882 = vmatmul.mubr.f32.gmra.mxu0 %v2881
    %v2883 = vpop.f32.mrf.mxu0
    %v2884 = vadd.f32 0.0, %v2883
    %v2885 = vpop.f32.mrf.mxu0
    %2886 = vdwg.mxu0
    %2887 = vmatprep.subr.mxu0 0.0
    %v2888 = vand.u32 %v72, 4294901760
    %v2889 = vsub.f32 %v72, %v2888
    %v2890 = vand.u32 %v2889, 4294901760
    %v2891 = vsub.f32 %v2889, %v2890
    %v2892 = vand.u32 %v2891, 4294901760
    %2893 = vmatpush1.msra.mxu0 %v2892
    %2894 = vmatprep.subr.mxu0 0.0
    %v2895 = vand.u32 %v71, 4294901760
    %v2896 = vsub.f32 %v71, %v2895
    %v2897 = vand.u32 %v2896, 4294901760
    %v2898 = vsub.f32 %v2896, %v2897
    %v2899 = vand.u32 %v2898, 4294901760
    %2900 = vmatpush1.msra.mxu0 %v2899
    %2901 = vmatprep.subr.mxu0 0.0
    %v2902 = vand.u32 %v70, 4294901760
    %v2903 = vsub.f32 %v70, %v2902
    %v2904 = vand.u32 %v2903, 4294901760
    %v2905 = vsub.f32 %v2903, %v2904
    %v2906 = vand.u32 %v2905, 4294901760
    %2907 = vmatpush1.msra.mxu0 %v2906
    %2908 = vmatprep.subr.mxu0 0.0
    %v2909 = vand.u32 %v69, 4294901760
    %v2910 = vsub.f32 %v69, %v2909
    %v2911 = vand.u32 %v2910, 4294901760
    %v2912 = vsub.f32 %v2910, %v2911
    %v2913 = vand.u32 %v2912, 4294901760
    %2914 = vmatpush1.msra.mxu0 %v2913
    %2915 = vmatprep.subr.mxu0 0.0
    %v2916 = vand.u32 %v68, 4294901760
    %v2917 = vsub.f32 %v68, %v2916
    %v2918 = vand.u32 %v2917, 4294901760
    %v2919 = vsub.f32 %v2917, %v2918
    %v2920 = vand.u32 %v2919, 4294901760
    %2921 = vmatpush1.msra.mxu0 %v2920
    %2922 = vmatprep.subr.mxu0 0.0
    %v2923 = vand.u32 %v67, 4294901760
    %v2924 = vsub.f32 %v67, %v2923
    %v2925 = vand.u32 %v2924, 4294901760
    %v2926 = vsub.f32 %v2924, %v2925
    %v2927 = vand.u32 %v2926, 4294901760
    %2928 = vmatpush1.msra.mxu0 %v2927
    %2929 = vmatprep.subr.mxu0 0.0
    %v2930 = vand.u32 %v66, 4294901760
    %v2931 = vsub.f32 %v66, %v2930
    %v2932 = vand.u32 %v2931, 4294901760
    %v2933 = vsub.f32 %v2931, %v2932
    %v2934 = vand.u32 %v2933, 4294901760
    %2935 = vmatpush1.msra.mxu0 %v2934
    %2936 = vmatprep.subr.mxu0 0.0
    %v2937 = vand.u32 %v65, 4294901760
    %v2938 = vsub.f32 %v65, %v2937
    %v2939 = vand.u32 %v2938, 4294901760
    %v2940 = vsub.f32 %v2938, %v2939
    %v2941 = vand.u32 %v2940, 4294901760
    %2942 = vmatpush1.msra.mxu0 %v2941
    %2943 = vmatprep.subr.mxu0 0.0
    %v2944 = vand.u32 %v64, 4294901760
    %v2945 = vsub.f32 %v64, %v2944
    %v2946 = vand.u32 %v2945, 4294901760
    %v2947 = vsub.f32 %v2945, %v2946
    %v2948 = vand.u32 %v2947, 4294901760
    %2949 = vmatpush1.msra.mxu0 %v2948
    %2950 = vmatprep.subr.mxu0 0.0
    %v2951 = vand.u32 %v63, 4294901760
    %v2952 = vsub.f32 %v63, %v2951
    %v2953 = vand.u32 %v2952, 4294901760
    %v2954 = vsub.f32 %v2952, %v2953
    %v2955 = vand.u32 %v2954, 4294901760
    %2956 = vmatpush1.msra.mxu0 %v2955
    %2957 = vmatprep.subr.mxu0 0.0
    %v2958 = vand.u32 %v62, 4294901760
    %v2959 = vsub.f32 %v62, %v2958
    %v2960 = vand.u32 %v2959, 4294901760
    %v2961 = vsub.f32 %v2959, %v2960
    %v2962 = vand.u32 %v2961, 4294901760
    %2963 = vmatpush1.msra.mxu0 %v2962
    %2964 = vmatprep.subr.mxu0 0.0
    %v2965 = vand.u32 %v61, 4294901760
    %v2966 = vsub.f32 %v61, %v2965
    %v2967 = vand.u32 %v2966, 4294901760
    %v2968 = vsub.f32 %v2966, %v2967
    %v2969 = vand.u32 %v2968, 4294901760
    %2970 = vmatpush1.msra.mxu0 %v2969
    %2971 = vmatprep.subr.mxu0 0.0
    %v2972 = vand.u32 %v60, 4294901760
    %v2973 = vsub.f32 %v60, %v2972
    %v2974 = vand.u32 %v2973, 4294901760
    %v2975 = vsub.f32 %v2973, %v2974
    %v2976 = vand.u32 %v2975, 4294901760
    %2977 = vmatpush1.msra.mxu0 %v2976
    %2978 = vmatprep.subr.mxu0 0.0
    %v2979 = vand.u32 %v59, 4294901760
    %v2980 = vsub.f32 %v59, %v2979
    %v2981 = vand.u32 %v2980, 4294901760
    %v2982 = vsub.f32 %v2980, %v2981
    %v2983 = vand.u32 %v2982, 4294901760
    %2984 = vmatpush1.msra.mxu0 %v2983
    %2985 = vmatprep.subr.mxu0 0.0
    %v2986 = vand.u32 %v58, 4294901760
    %v2987 = vsub.f32 %v58, %v2986
    %v2988 = vand.u32 %v2987, 4294901760
    %v2989 = vsub.f32 %v2987, %v2988
    %v2990 = vand.u32 %v2989, 4294901760
    %2991 = vmatpush1.msra.mxu0 %v2990
    %2992 = vmatprep.subr.mxu0 0.0
    %v2993 = vand.u32 %v57, 4294901760
    %v2994 = vsub.f32 %v57, %v2993
    %v2995 = vand.u32 %v2994, 4294901760
    %v2996 = vsub.f32 %v2994, %v2995
    %v2997 = vand.u32 %v2996, 4294901760
    %2998 = vmatpush1.msra.mxu0 %v2997
    %2999 = vmatprep.subr.mxu0 0.0
    %3000 = vmatpush2.msra.mxu0 0.0
    %3001 = vmatprep.subr.mxu0 0.0
    %3002 = vmatpush2.msra.mxu0 0.0
    %3003 = vmatprep.subr.mxu0 0.0
    %3004 = vmatpush2.msra.mxu0 0.0
    %3005 = vmatprep.subr.mxu0 0.0
    %3006 = vmatpush2.msra.mxu0 0.0
    %3007 = vmatprep.subr.mxu0 0.0
    %3008 = vmatpush2.msra.mxu0 0.0
    %3009 = vmatprep.subr.mxu0 0.0
    %3010 = vmatpush2.msra.mxu0 0.0
    %3011 = vmatprep.subr.mxu0 0.0
    %3012 = vmatpush2.msra.mxu0 0.0
    %3013 = vmatprep.subr.mxu0 0.0
    %3014 = vmatpush2.msra.mxu0 0.0
    %3015 = vmatprep.subr.mxu0 0.0
    %3016 = vmatpush2.msra.mxu0 0.0
    %3017 = vmatprep.subr.mxu0 0.0
    %3018 = vmatpush2.msra.mxu0 0.0
    %3019 = vmatprep.subr.mxu0 0.0
    %3020 = vmatpush2.msra.mxu0 0.0
    %3021 = vmatprep.subr.mxu0 0.0
    %3022 = vmatpush2.msra.mxu0 0.0
    %3023 = vmatprep.subr.mxu0 0.0
    %v3024 = vand.u32 %v76, 4294901760
    %v3025 = vsub.f32 %v76, %v3024
    %v3026 = vand.u32 %v3025, 4294901760
    %v3027 = vsub.f32 %v3025, %v3026
    %v3028 = vand.u32 %v3027, 4294901760
    %3029 = vmatpush2.msra.mxu0 %v3028
    %3030 = vmatprep.subr.mxu0 0.0
    %v3031 = vand.u32 %v75, 4294901760
    %v3032 = vsub.f32 %v75, %v3031
    %v3033 = vand.u32 %v3032, 4294901760
    %v3034 = vsub.f32 %v3032, %v3033
    %v3035 = vand.u32 %v3034, 4294901760
    %3036 = vmatpush2.msra.mxu0 %v3035
    %3037 = vmatprep.subr.mxu0 0.0
    %v3038 = vand.u32 %v74, 4294901760
    %v3039 = vsub.f32 %v74, %v3038
    %v3040 = vand.u32 %v3039, 4294901760
    %v3041 = vsub.f32 %v3039, %v3040
    %v3042 = vand.u32 %v3041, 4294901760
    %3043 = vmatpush2.msra.mxu0 %v3042
    %3044 = vmatprep.subr.mxu0 0.0
    %v3045 = vand.u32 %v73, 4294901760
    %v3046 = vsub.f32 %v73, %v3045
    %v3047 = vand.u32 %v3046, 4294901760
    %v3048 = vsub.f32 %v3046, %v3047
    %v3049 = vand.u32 %v3048, 4294901760
    %3050 = vmatpush2.msra.mxu0 %v3049
    %v3051 = vand.u32 %v2785, 4294901760
    %3052 = vmatprep.mubr.f32.mxu0 %v3051
    %v3053 = vand.u32 %v2782, 4294901760
    %3054 = vmatmul.mubr.f32.gmra.mxu0 %v3053
    %v3055 = vpop.f32.mrf.mxu0
    %v3056 = vadd.f32 %v2884, %v3055
    %v3057 = vpop.f32.mrf.mxu0
    %3058 = vdwg.mxu0
    %3059 = vmatprep.subr.mxu0 0.0
    %v3060 = vand.u32 %v72, 4294901760
    %v3061 = vsub.f32 %v72, %v3060
    %3062 = vmatpush1.msra.mxu0 %v3061
    %3063 = vmatprep.subr.mxu0 0.0
    %v3064 = vand.u32 %v71, 4294901760
    %v3065 = vsub.f32 %v71, %v3064
    %3066 = vmatpush1.msra.mxu0 %v3065
    %3067 = vmatprep.subr.mxu0 0.0
    %v3068 = vand.u32 %v70, 4294901760
    %v3069 = vsub.f32 %v70, %v3068
    %3070 = vmatpush1.msra.mxu0 %v3069
    %3071 = vmatprep.subr.mxu0 0.0
    %v3072 = vand.u32 %v69, 4294901760
    %v3073 = vsub.f32 %v69, %v3072
    %3074 = vmatpush1.msra.mxu0 %v3073
    %3075 = vmatprep.subr.mxu0 0.0
    %v3076 = vand.u32 %v68, 4294901760
    %v3077 = vsub.f32 %v68, %v3076
    %3078 = vmatpush1.msra.mxu0 %v3077
    %3079 = vmatprep.subr.mxu0 0.0
    %v3080 = vand.u32 %v67, 4294901760
    %v3081 = vsub.f32 %v67, %v3080
    %3082 = vmatpush1.msra.mxu0 %v3081
    %3083 = vmatprep.subr.mxu0 0.0
    %v3084 = vand.u32 %v66, 4294901760
    %v3085 = vsub.f32 %v66, %v3084
    %3086 = vmatpush1.msra.mxu0 %v3085
    %3087 = vmatprep.subr.mxu0 0.0
    %v3088 = vand.u32 %v65, 4294901760
    %v3089 = vsub.f32 %v65, %v3088
    %3090 = vmatpush1.msra.mxu0 %v3089
    %3091 = vmatprep.subr.mxu0 0.0
    %v3092 = vand.u32 %v64, 4294901760
    %v3093 = vsub.f32 %v64, %v3092
    %3094 = vmatpush1.msra.mxu0 %v3093
    %3095 = vmatprep.subr.mxu0 0.0
    %v3096 = vand.u32 %v63, 4294901760
    %v3097 = vsub.f32 %v63, %v3096
    %3098 = vmatpush1.msra.mxu0 %v3097
    %3099 = vmatprep.subr.mxu0 0.0
    %v3100 = vand.u32 %v62, 4294901760
    %v3101 = vsub.f32 %v62, %v3100
    %3102 = vmatpush1.msra.mxu0 %v3101
    %3103 = vmatprep.subr.mxu0 0.0
    %v3104 = vand.u32 %v61, 4294901760
    %v3105 = vsub.f32 %v61, %v3104
    %3106 = vmatpush1.msra.mxu0 %v3105
    %3107 = vmatprep.subr.mxu0 0.0
    %v3108 = vand.u32 %v60, 4294901760
    %v3109 = vsub.f32 %v60, %v3108
    %3110 = vmatpush1.msra.mxu0 %v3109
    %3111 = vmatprep.subr.mxu0 0.0
    %v3112 = vand.u32 %v59, 4294901760
    %v3113 = vsub.f32 %v59, %v3112
    %3114 = vmatpush1.msra.mxu0 %v3113
    %3115 = vmatprep.subr.mxu0 0.0
    %v3116 = vand.u32 %v58, 4294901760
    %v3117 = vsub.f32 %v58, %v3116
    %3118 = vmatpush1.msra.mxu0 %v3117
    %3119 = vmatprep.subr.mxu0 0.0
    %v3120 = vand.u32 %v57, 4294901760
    %v3121 = vsub.f32 %v57, %v3120
    %3122 = vmatpush1.msra.mxu0 %v3121
    %3123 = vmatprep.subr.mxu0 0.0
    %3124 = vmatpush2.msra.mxu0 0.0
    %3125 = vmatprep.subr.mxu0 0.0
    %3126 = vmatpush2.msra.mxu0 0.0
    %3127 = vmatprep.subr.mxu0 0.0
    %3128 = vmatpush2.msra.mxu0 0.0
    %3129 = vmatprep.subr.mxu0 0.0
    %3130 = vmatpush2.msra.mxu0 0.0
    %3131 = vmatprep.subr.mxu0 0.0
    %3132 = vmatpush2.msra.mxu0 0.0
    %3133 = vmatprep.subr.mxu0 0.0
    %3134 = vmatpush2.msra.mxu0 0.0
    %3135 = vmatprep.subr.mxu0 0.0
    %3136 = vmatpush2.msra.mxu0 0.0
    %3137 = vmatprep.subr.mxu0 0.0
    %3138 = vmatpush2.msra.mxu0 0.0
    %3139 = vmatprep.subr.mxu0 0.0
    %3140 = vmatpush2.msra.mxu0 0.0
    %3141 = vmatprep.subr.mxu0 0.0
    %3142 = vmatpush2.msra.mxu0 0.0
    %3143 = vmatprep.subr.mxu0 0.0
    %3144 = vmatpush2.msra.mxu0 0.0
    %3145 = vmatprep.subr.mxu0 0.0
    %3146 = vmatpush2.msra.mxu0 0.0
    %3147 = vmatprep.subr.mxu0 0.0
    %v3148 = vand.u32 %v76, 4294901760
    %v3149 = vsub.f32 %v76, %v3148
    %3150 = vmatpush2.msra.mxu0 %v3149
    %3151 = vmatprep.subr.mxu0 0.0
    %v3152 = vand.u32 %v75, 4294901760
    %v3153 = vsub.f32 %v75, %v3152
    %3154 = vmatpush2.msra.mxu0 %v3153
    %3155 = vmatprep.subr.mxu0 0.0
    %v3156 = vand.u32 %v74, 4294901760
    %v3157 = vsub.f32 %v74, %v3156
    %3158 = vmatpush2.msra.mxu0 %v3157
    %3159 = vmatprep.subr.mxu0 0.0
    %v3160 = vand.u32 %v73, 4294901760
    %v3161 = vsub.f32 %v73, %v3160
    %3162 = vmatpush2.msra.mxu0 %v3161
    %v3163 = vand.u32 %v2785, 4294901760
    %v3164 = vsub.f32 %v2785, %v3163
    %3165 = vmatprep.mubr.f32.mxu0 %v3164
    %v3166 = vand.u32 %v2782, 4294901760
    %v3167 = vsub.f32 %v2782, %v3166
    %3168 = vmatmul.mubr.f32.gmra.mxu0 %v3167
    %v3169 = vpop.f32.mrf.mxu0
    %v3170 = vadd.f32 %v3056, %v3169
    %v3171 = vpop.f32.mrf.mxu0
    %3172 = vdwg.mxu0
    %3173 = vmatprep.subr.mxu0 0.0
    %v3174 = vand.u32 %v72, 4294901760
    %3175 = vmatpush1.msra.mxu0 %v3174
    %3176 = vmatprep.subr.mxu0 0.0
    %v3177 = vand.u32 %v71, 4294901760
    %3178 = vmatpush1.msra.mxu0 %v3177
    %3179 = vmatprep.subr.mxu0 0.0
    %v3180 = vand.u32 %v70, 4294901760
    %3181 = vmatpush1.msra.mxu0 %v3180
    %3182 = vmatprep.subr.mxu0 0.0
    %v3183 = vand.u32 %v69, 4294901760
    %3184 = vmatpush1.msra.mxu0 %v3183
    %3185 = vmatprep.subr.mxu0 0.0
    %v3186 = vand.u32 %v68, 4294901760
    %3187 = vmatpush1.msra.mxu0 %v3186
    %3188 = vmatprep.subr.mxu0 0.0
    %v3189 = vand.u32 %v67, 4294901760
    %3190 = vmatpush1.msra.mxu0 %v3189
    %3191 = vmatprep.subr.mxu0 0.0
    %v3192 = vand.u32 %v66, 4294901760
    %3193 = vmatpush1.msra.mxu0 %v3192
    %3194 = vmatprep.subr.mxu0 0.0
    %v3195 = vand.u32 %v65, 4294901760
    %3196 = vmatpush1.msra.mxu0 %v3195
    %3197 = vmatprep.subr.mxu0 0.0
    %v3198 = vand.u32 %v64, 4294901760
    %3199 = vmatpush1.msra.mxu0 %v3198
    %3200 = vmatprep.subr.mxu0 0.0
    %v3201 = vand.u32 %v63, 4294901760
    %3202 = vmatpush1.msra.mxu0 %v3201
    %3203 = vmatprep.subr.mxu0 0.0
    %v3204 = vand.u32 %v62, 4294901760
    %3205 = vmatpush1.msra.mxu0 %v3204
    %3206 = vmatprep.subr.mxu0 0.0
    %v3207 = vand.u32 %v61, 4294901760
    %3208 = vmatpush1.msra.mxu0 %v3207
    %3209 = vmatprep.subr.mxu0 0.0
    %v3210 = vand.u32 %v60, 4294901760
    %3211 = vmatpush1.msra.mxu0 %v3210
    %3212 = vmatprep.subr.mxu0 0.0
    %v3213 = vand.u32 %v59, 4294901760
    %3214 = vmatpush1.msra.mxu0 %v3213
    %3215 = vmatprep.subr.mxu0 0.0
    %v3216 = vand.u32 %v58, 4294901760
    %3217 = vmatpush1.msra.mxu0 %v3216
    %3218 = vmatprep.subr.mxu0 0.0
    %v3219 = vand.u32 %v57, 4294901760
    %3220 = vmatpush1.msra.mxu0 %v3219
    %3221 = vmatprep.subr.mxu0 0.0
    %3222 = vmatpush2.msra.mxu0 0.0
    %3223 = vmatprep.subr.mxu0 0.0
    %3224 = vmatpush2.msra.mxu0 0.0
    %3225 = vmatprep.subr.mxu0 0.0
    %3226 = vmatpush2.msra.mxu0 0.0
    %3227 = vmatprep.subr.mxu0 0.0
    %3228 = vmatpush2.msra.mxu0 0.0
    %3229 = vmatprep.subr.mxu0 0.0
    %3230 = vmatpush2.msra.mxu0 0.0
    %3231 = vmatprep.subr.mxu0 0.0
    %3232 = vmatpush2.msra.mxu0 0.0
    %3233 = vmatprep.subr.mxu0 0.0
    %3234 = vmatpush2.msra.mxu0 0.0
    %3235 = vmatprep.subr.mxu0 0.0
    %3236 = vmatpush2.msra.mxu0 0.0
    %3237 = vmatprep.subr.mxu0 0.0
    %3238 = vmatpush2.msra.mxu0 0.0
    %3239 = vmatprep.subr.mxu0 0.0
    %3240 = vmatpush2.msra.mxu0 0.0
    %3241 = vmatprep.subr.mxu0 0.0
    %3242 = vmatpush2.msra.mxu0 0.0
    %3243 = vmatprep.subr.mxu0 0.0
    %3244 = vmatpush2.msra.mxu0 0.0
    %3245 = vmatprep.subr.mxu0 0.0
    %v3246 = vand.u32 %v76, 4294901760
    %3247 = vmatpush2.msra.mxu0 %v3246
    %3248 = vmatprep.subr.mxu0 0.0
    %v3249 = vand.u32 %v75, 4294901760
    %3250 = vmatpush2.msra.mxu0 %v3249
    %3251 = vmatprep.subr.mxu0 0.0
    %v3252 = vand.u32 %v74, 4294901760
    %3253 = vmatpush2.msra.mxu0 %v3252
    %3254 = vmatprep.subr.mxu0 0.0
    %v3255 = vand.u32 %v73, 4294901760
    %3256 = vmatpush2.msra.mxu0 %v3255
    %v3257 = vand.u32 %v2785, 4294901760
    %v3258 = vsub.f32 %v2785, %v3257
    %v3259 = vand.u32 %v3258, 4294901760
    %3260 = vmatprep.mubr.f32.mxu0 %v3259
    %v3261 = vand.u32 %v2782, 4294901760
    %v3262 = vsub.f32 %v2782, %v3261
    %v3263 = vand.u32 %v3262, 4294901760
    %3264 = vmatmul.mubr.f32.gmra.mxu0 %v3263
    %v3265 = vpop.f32.mrf.mxu0
    %v3266 = vadd.f32 %v3170, %v3265
    %v3267 = vpop.f32.mrf.mxu0
    %3268 = vdwg.mxu0
    %3269 = vmatprep.subr.mxu0 0.0
    %v3270 = vand.u32 %v72, 4294901760
    %v3271 = vsub.f32 %v72, %v3270
    %v3272 = vand.u32 %v3271, 4294901760
    %3273 = vmatpush1.msra.mxu0 %v3272
    %3274 = vmatprep.subr.mxu0 0.0
    %v3275 = vand.u32 %v71, 4294901760
    %v3276 = vsub.f32 %v71, %v3275
    %v3277 = vand.u32 %v3276, 4294901760
    %3278 = vmatpush1.msra.mxu0 %v3277
    %3279 = vmatprep.subr.mxu0 0.0
    %v3280 = vand.u32 %v70, 4294901760
    %v3281 = vsub.f32 %v70, %v3280
    %v3282 = vand.u32 %v3281, 4294901760
    %3283 = vmatpush1.msra.mxu0 %v3282
    %3284 = vmatprep.subr.mxu0 0.0
    %v3285 = vand.u32 %v69, 4294901760
    %v3286 = vsub.f32 %v69, %v3285
    %v3287 = vand.u32 %v3286, 4294901760
    %3288 = vmatpush1.msra.mxu0 %v3287
    %3289 = vmatprep.subr.mxu0 0.0
    %v3290 = vand.u32 %v68, 4294901760
    %v3291 = vsub.f32 %v68, %v3290
    %v3292 = vand.u32 %v3291, 4294901760
    %3293 = vmatpush1.msra.mxu0 %v3292
    %3294 = vmatprep.subr.mxu0 0.0
    %v3295 = vand.u32 %v67, 4294901760
    %v3296 = vsub.f32 %v67, %v3295
    %v3297 = vand.u32 %v3296, 4294901760
    %3298 = vmatpush1.msra.mxu0 %v3297
    %3299 = vmatprep.subr.mxu0 0.0
    %v3300 = vand.u32 %v66, 4294901760
    %v3301 = vsub.f32 %v66, %v3300
    %v3302 = vand.u32 %v3301, 4294901760
    %3303 = vmatpush1.msra.mxu0 %v3302
    %3304 = vmatprep.subr.mxu0 0.0
    %v3305 = vand.u32 %v65, 4294901760
    %v3306 = vsub.f32 %v65, %v3305
    %v3307 = vand.u32 %v3306, 4294901760
    %3308 = vmatpush1.msra.mxu0 %v3307
    %3309 = vmatprep.subr.mxu0 0.0
    %v3310 = vand.u32 %v64, 4294901760
    %v3311 = vsub.f32 %v64, %v3310
    %v3312 = vand.u32 %v3311, 4294901760
    %3313 = vmatpush1.msra.mxu0 %v3312
    %3314 = vmatprep.subr.mxu0 0.0
    %v3315 = vand.u32 %v63, 4294901760
    %v3316 = vsub.f32 %v63, %v3315
    %v3317 = vand.u32 %v3316, 4294901760
    %3318 = vmatpush1.msra.mxu0 %v3317
    %3319 = vmatprep.subr.mxu0 0.0
    %v3320 = vand.u32 %v62, 4294901760
    %v3321 = vsub.f32 %v62, %v3320
    %v3322 = vand.u32 %v3321, 4294901760
    %3323 = vmatpush1.msra.mxu0 %v3322
    %3324 = vmatprep.subr.mxu0 0.0
    %v3325 = vand.u32 %v61, 4294901760
    %v3326 = vsub.f32 %v61, %v3325
    %v3327 = vand.u32 %v3326, 4294901760
    %3328 = vmatpush1.msra.mxu0 %v3327
    %3329 = vmatprep.subr.mxu0 0.0
    %v3330 = vand.u32 %v60, 4294901760
    %v3331 = vsub.f32 %v60, %v3330
    %v3332 = vand.u32 %v3331, 4294901760
    %3333 = vmatpush1.msra.mxu0 %v3332
    %3334 = vmatprep.subr.mxu0 0.0
    %v3335 = vand.u32 %v59, 4294901760
    %v3336 = vsub.f32 %v59, %v3335
    %v3337 = vand.u32 %v3336, 4294901760
    %3338 = vmatpush1.msra.mxu0 %v3337
    %3339 = vmatprep.subr.mxu0 0.0
    %v3340 = vand.u32 %v58, 4294901760
    %v3341 = vsub.f32 %v58, %v3340
    %v3342 = vand.u32 %v3341, 4294901760
    %3343 = vmatpush1.msra.mxu0 %v3342
    %3344 = vmatprep.subr.mxu0 0.0
    %v3345 = vand.u32 %v57, 4294901760
    %v3346 = vsub.f32 %v57, %v3345
    %v3347 = vand.u32 %v3346, 4294901760
    %3348 = vmatpush1.msra.mxu0 %v3347
    %3349 = vmatprep.subr.mxu0 0.0
    %3350 = vmatpush2.msra.mxu0 0.0
    %3351 = vmatprep.subr.mxu0 0.0
    %3352 = vmatpush2.msra.mxu0 0.0
    %3353 = vmatprep.subr.mxu0 0.0
    %3354 = vmatpush2.msra.mxu0 0.0
    %3355 = vmatprep.subr.mxu0 0.0
    %3356 = vmatpush2.msra.mxu0 0.0
    %3357 = vmatprep.subr.mxu0 0.0
    %3358 = vmatpush2.msra.mxu0 0.0
    %3359 = vmatprep.subr.mxu0 0.0
    %3360 = vmatpush2.msra.mxu0 0.0
    %3361 = vmatprep.subr.mxu0 0.0
    %3362 = vmatpush2.msra.mxu0 0.0
    %3363 = vmatprep.subr.mxu0 0.0
    %3364 = vmatpush2.msra.mxu0 0.0
    %3365 = vmatprep.subr.mxu0 0.0
    %3366 = vmatpush2.msra.mxu0 0.0
    %3367 = vmatprep.subr.mxu0 0.0
    %3368 = vmatpush2.msra.mxu0 0.0
    %3369 = vmatprep.subr.mxu0 0.0
    %3370 = vmatpush2.msra.mxu0 0.0
    %3371 = vmatprep.subr.mxu0 0.0
    %3372 = vmatpush2.msra.mxu0 0.0
    %3373 = vmatprep.subr.mxu0 0.0
    %v3374 = vand.u32 %v76, 4294901760
    %v3375 = vsub.f32 %v76, %v3374
    %v3376 = vand.u32 %v3375, 4294901760
    %3377 = vmatpush2.msra.mxu0 %v3376
    %3378 = vmatprep.subr.mxu0 0.0
    %v3379 = vand.u32 %v75, 4294901760
    %v3380 = vsub.f32 %v75, %v3379
    %v3381 = vand.u32 %v3380, 4294901760
    %3382 = vmatpush2.msra.mxu0 %v3381
    %3383 = vmatprep.subr.mxu0 0.0
    %v3384 = vand.u32 %v74, 4294901760
    %v3385 = vsub.f32 %v74, %v3384
    %v3386 = vand.u32 %v3385, 4294901760
    %3387 = vmatpush2.msra.mxu0 %v3386
    %3388 = vmatprep.subr.mxu0 0.0
    %v3389 = vand.u32 %v73, 4294901760
    %v3390 = vsub.f32 %v73, %v3389
    %v3391 = vand.u32 %v3390, 4294901760
    %3392 = vmatpush2.msra.mxu0 %v3391
    %v3393 = vand.u32 %v2785, 4294901760
    %3394 = vmatprep.mubr.f32.mxu0 %v3393
    %v3395 = vand.u32 %v2782, 4294901760
    %3396 = vmatmul.mubr.f32.gmra.mxu0 %v3395
    %v3397 = vpop.f32.mrf.mxu0
    %v3398 = vadd.f32 %v3266, %v3397
    %v3399 = vpop.f32.mrf.mxu0
    %3400 = vdwg.mxu0
    %3401 = vmatprep.subr.mxu0 0.0
    %v3402 = vand.u32 %v72, 4294901760
    %3403 = vmatpush1.msra.mxu0 %v3402
    %3404 = vmatprep.subr.mxu0 0.0
    %v3405 = vand.u32 %v71, 4294901760
    %3406 = vmatpush1.msra.mxu0 %v3405
    %3407 = vmatprep.subr.mxu0 0.0
    %v3408 = vand.u32 %v70, 4294901760
    %3409 = vmatpush1.msra.mxu0 %v3408
    %3410 = vmatprep.subr.mxu0 0.0
    %v3411 = vand.u32 %v69, 4294901760
    %3412 = vmatpush1.msra.mxu0 %v3411
    %3413 = vmatprep.subr.mxu0 0.0
    %v3414 = vand.u32 %v68, 4294901760
    %3415 = vmatpush1.msra.mxu0 %v3414
    %3416 = vmatprep.subr.mxu0 0.0
    %v3417 = vand.u32 %v67, 4294901760
    %3418 = vmatpush1.msra.mxu0 %v3417
    %3419 = vmatprep.subr.mxu0 0.0
    %v3420 = vand.u32 %v66, 4294901760
    %3421 = vmatpush1.msra.mxu0 %v3420
    %3422 = vmatprep.subr.mxu0 0.0
    %v3423 = vand.u32 %v65, 4294901760
    %3424 = vmatpush1.msra.mxu0 %v3423
    %3425 = vmatprep.subr.mxu0 0.0
    %v3426 = vand.u32 %v64, 4294901760
    %3427 = vmatpush1.msra.mxu0 %v3426
    %3428 = vmatprep.subr.mxu0 0.0
    %v3429 = vand.u32 %v63, 4294901760
    %3430 = vmatpush1.msra.mxu0 %v3429
    %3431 = vmatprep.subr.mxu0 0.0
    %v3432 = vand.u32 %v62, 4294901760
    %3433 = vmatpush1.msra.mxu0 %v3432
    %3434 = vmatprep.subr.mxu0 0.0
    %v3435 = vand.u32 %v61, 4294901760
    %3436 = vmatpush1.msra.mxu0 %v3435
    %3437 = vmatprep.subr.mxu0 0.0
    %v3438 = vand.u32 %v60, 4294901760
    %3439 = vmatpush1.msra.mxu0 %v3438
    %3440 = vmatprep.subr.mxu0 0.0
    %v3441 = vand.u32 %v59, 4294901760
    %3442 = vmatpush1.msra.mxu0 %v3441
    %3443 = vmatprep.subr.mxu0 0.0
    %v3444 = vand.u32 %v58, 4294901760
    %3445 = vmatpush1.msra.mxu0 %v3444
    %3446 = vmatprep.subr.mxu0 0.0
    %v3447 = vand.u32 %v57, 4294901760
    %3448 = vmatpush1.msra.mxu0 %v3447
    %3449 = vmatprep.subr.mxu0 0.0
    %3450 = vmatpush2.msra.mxu0 0.0
    %3451 = vmatprep.subr.mxu0 0.0
    %3452 = vmatpush2.msra.mxu0 0.0
    %3453 = vmatprep.subr.mxu0 0.0
    %3454 = vmatpush2.msra.mxu0 0.0
    %3455 = vmatprep.subr.mxu0 0.0
    %3456 = vmatpush2.msra.mxu0 0.0
    %3457 = vmatprep.subr.mxu0 0.0
    %3458 = vmatpush2.msra.mxu0 0.0
    %3459 = vmatprep.subr.mxu0 0.0
    %3460 = vmatpush2.msra.mxu0 0.0
    %3461 = vmatprep.subr.mxu0 0.0
    %3462 = vmatpush2.msra.mxu0 0.0
    %3463 = vmatprep.subr.mxu0 0.0
    %3464 = vmatpush2.msra.mxu0 0.0
    %3465 = vmatprep.subr.mxu0 0.0
    %3466 = vmatpush2.msra.mxu0 0.0
    %3467 = vmatprep.subr.mxu0 0.0
    %3468 = vmatpush2.msra.mxu0 0.0
    %3469 = vmatprep.subr.mxu0 0.0
    %3470 = vmatpush2.msra.mxu0 0.0
    %3471 = vmatprep.subr.mxu0 0.0
    %3472 = vmatpush2.msra.mxu0 0.0
    %3473 = vmatprep.subr.mxu0 0.0
    %v3474 = vand.u32 %v76, 4294901760
    %3475 = vmatpush2.msra.mxu0 %v3474
    %3476 = vmatprep.subr.mxu0 0.0
    %v3477 = vand.u32 %v75, 4294901760
    %3478 = vmatpush2.msra.mxu0 %v3477
    %3479 = vmatprep.subr.mxu0 0.0
    %v3480 = vand.u32 %v74, 4294901760
    %3481 = vmatpush2.msra.mxu0 %v3480
    %3482 = vmatprep.subr.mxu0 0.0
    %v3483 = vand.u32 %v73, 4294901760
    %3484 = vmatpush2.msra.mxu0 %v3483
    %v3485 = vand.u32 %v2785, 4294901760
    %3486 = vmatprep.mubr.f32.mxu0 %v3485
    %v3487 = vand.u32 %v2782, 4294901760
    %3488 = vmatmul.mubr.f32.gmra.mxu0 %v3487
    %v3489 = vpop.f32.mrf.mxu0
    %v3490 = vadd.f32 %v3398, %v3489
    %v3491 = vpop.f32.mrf.mxu0
    %3492 = vdwg.mxu0
    %v3493 = vadd.f32 %v3490, 1.0
    %v3494 = vrcp.pop %v3493
    %v3495 = vmul.f32 %v3490, %v3494
    %v3496 = vrsqrt.pop %v3490
    %v3497 = vmul.f32 %v3495, %v3496
    %v3499 = vsel %vm1481, %v3497, 0
    %3501 = vmatprep.subr.mxu0 0.0
    %3502 = vmatpush1.msra.mxu0 0.0
    %3503 = vmatprep.subr.mxu0 0.0
    %3504 = vmatpush1.msra.mxu0 0.0
    %3505 = vmatprep.subr.mxu0 0.0
    %3506 = vmatpush1.msra.mxu0 0.0
    %3507 = vmatprep.subr.mxu0 0.0
    %3508 = vmatpush1.msra.mxu0 0.0
    %3509 = vmatprep.subr.mxu0 0.0
    %3510 = vmatpush1.msra.mxu0 0.0
    %3511 = vmatprep.subr.mxu0 0.0
    %3512 = vmatpush1.msra.mxu0 0.0
    %3513 = vmatprep.subr.mxu0 0.0
    %3514 = vmatpush1.msra.mxu0 0.0
    %3515 = vmatprep.subr.mxu0 0.0
    %3516 = vmatpush1.msra.mxu0 0.0
    %3517 = vmatprep.subr.mxu0 0.0
    %3518 = vmatpush1.msra.mxu0 0.0
    %3519 = vmatprep.subr.mxu0 0.0
    %3520 = vmatpush1.msra.mxu0 0.0
    %3521 = vmatprep.subr.mxu0 0.0
    %3522 = vmatpush1.msra.mxu0 0.0
    %3523 = vmatprep.subr.mxu0 0.0
    %3524 = vmatpush1.msra.mxu0 0.0
    %3525 = vmatprep.subr.mxu0 0.0
    %3526 = vmatpush1.msra.mxu0 0.0
    %3527 = vmatprep.subr.mxu0 0.0
    %3528 = vmatpush1.msra.mxu0 0.0
    %3529 = vmatprep.subr.mxu0 %v1490
    %3530 = vmatpush1.msra.mxu0 %v1487
    %3531 = vmatprep.subr.mxu0 %v54
    %3532 = vmatpush1.msra.mxu0 %v53
    %3533 = vmatprep.subr.mxu0 0.0
    %3534 = vmatpush2.msra.mxu0 0.0
    %3535 = vmatprep.subr.mxu0 0.0
    %3536 = vmatpush2.msra.mxu0 0.0
    %3537 = vmatprep.subr.mxu0 0.0
    %3538 = vmatpush2.msra.mxu0 0.0
    %3539 = vmatprep.subr.mxu0 0.0
    %3540 = vmatpush2.msra.mxu0 0.0
    %3541 = vmatprep.subr.mxu0 0.0
    %3542 = vmatpush2.msra.mxu0 0.0
    %3543 = vmatprep.subr.mxu0 0.0
    %3544 = vmatpush2.msra.mxu0 0.0
    %3545 = vmatprep.subr.mxu0 0.0
    %3546 = vmatpush2.msra.mxu0 0.0
    %3547 = vmatprep.subr.mxu0 0.0
    %3548 = vmatpush2.msra.mxu0 0.0
    %3549 = vmatprep.subr.mxu0 0.0
    %3550 = vmatpush2.msra.mxu0 0.0
    %3551 = vmatprep.subr.mxu0 0.0
    %3552 = vmatpush2.msra.mxu0 0.0
    %3553 = vmatprep.subr.mxu0 0.0
    %3554 = vmatpush2.msra.mxu0 0.0
    %3555 = vmatprep.subr.mxu0 0.0
    %3556 = vmatpush2.msra.mxu0 0.0
    %3557 = vmatprep.subr.mxu0 0.0
    %3558 = vmatpush2.msra.mxu0 0.0
    %3559 = vmatprep.subr.mxu0 0.0
    %3560 = vmatpush2.msra.mxu0 0.0
    %3561 = vmatprep.subr.mxu0 0.0
    %3562 = vmatpush2.msra.mxu0 0.0
    %3563 = vmatprep.subr.mxu0 0.0
    %3564 = vmatpush2.msra.mxu0 0.0
    %3565 = vmatprep.mubr.f32.mxu0 0.0
    %3566 = vmatmul.mubr.f32.gmra.mxu0 %v3499
    %v3567 = vpop.f32.mrf.mxu0
    %v3568 = vadd.f32 0.0, %v3567
    %v3569 = vpop.f32.mrf.mxu0
    %v3570 = vadd.f32 0.0, %v3569
    %3571 = vdwg.mxu0
    %v3574 = vcombine.low %v3568, %v3570
    %v3576 = vunpack.c.l.s4 1983009808
    %v3577 = vunpack.c.0.s8 %v3576
    %v3578 = vlaneseq
    %v3579 = vshrl.u32 %v3578, 7
    %v3580 = vsub.s32 %v3577, %v3579
    %v3581 = vrot.slane %v3574, %v3580
    %v3583 = vmul.f32 %v2773, %v3581
    %v3585 = vlaneseq
    %v3586 = vshrl.u32 %v3585, 7
    %v3587 = vsub.s32 0, %v3586
    %v3588 = vrot.slane %v3583, %v3587
    %v3589 = vlaneseq
    %v3590 = vshrl.u32 %v3589, 7
    %v3591 = vsub.s32 2, %v3590
    %v3592 = vrot.slane %v3583, %v3591
    %v3595 = vlaneseq
    %v3596 = vshrl.u32 %v3595, 7
    %v3597 = vsub.s32 0, %v3596
    %v3598 = vrot.slane %v3588, %v3597
    %v3599 = vlaneseq
    %v3600 = vshrl.u32 %v3599, 7
    %v3601 = vsub.s32 0, %v3600
    %v3602 = vrot.slane %v3592, %v3601
    %v3603 = vmul.f32 %v612, %v3598
    %v3604 = vmul.f32 %v613, %v3602
    %v3605 = vmul.f32 %v614, %v3598
    %v3606 = vmul.f32 %v615, %v3602
    %v3607 = vmul.f32 %v616, %v3598
    %v3608 = vmul.f32 %v617, %v3602
    %v3609 = vmul.f32 %v618, %v3598
    %v3610 = vmul.f32 %v619, %v3602
    %v3611 = vlaneseq
    %v3612 = vshrl.u32 %v3611, 7
    %v3613 = vsub.s32 1, %v3612
    %v3614 = vrot.slane %v3583, %v3613
    %v3615 = vlaneseq
    %v3616 = vshrl.u32 %v3615, 7
    %v3617 = vsub.s32 3, %v3616
    %v3618 = vrot.slane %v3583, %v3617
    %v3621 = vlaneseq
    %v3622 = vshrl.u32 %v3621, 7
    %v3623 = vsub.s32 1, %v3622
    %v3624 = vrot.slane %v3614, %v3623
    %v3625 = vlaneseq
    %v3626 = vshrl.u32 %v3625, 7
    %v3627 = vsub.s32 1, %v3626
    %v3628 = vrot.slane %v3618, %v3627
    %v3629 = vmul.f32 %v644, %v3624
    %v3630 = vmul.f32 %v645, %v3628
    %v3631 = vmul.f32 %v646, %v3624
    %v3632 = vmul.f32 %v647, %v3628
    %v3633 = vmul.f32 %v648, %v3624
    %v3634 = vmul.f32 %v649, %v3628
    %v3635 = vmul.f32 %v650, %v3624
    %v3636 = vmul.f32 %v651, %v3628
    %v3637 = vadd.f32 %v3603, %v3629
    %v3638 = vadd.f32 %v3604, %v3630
    %v3639 = vadd.f32 %v3605, %v3631
    %v3640 = vadd.f32 %v3606, %v3632
    %v3641 = vadd.f32 %v3607, %v3633
    %v3642 = vadd.f32 %v3608, %v3634
    %v3643 = vadd.f32 %v3609, %v3635
    %v3644 = vadd.f32 %v3610, %v3636
    %v3646 = vsel %vm669, %v3638, 0
    %v3649 = vsel %vm669, %v3640, 0
    %v3652 = vsel %vm669, %v3642, 0
    %v3655 = vsel %vm669, %v3644, 0
    %3657 = vmatprep.subr.mxu0 0.0
    %v3658 = vand.u32 %v72, 4294901760
    %3659 = vmatpush1.msra.mxu0 %v3658
    %3660 = vmatprep.subr.mxu0 0.0
    %v3661 = vand.u32 %v71, 4294901760
    %3662 = vmatpush1.msra.mxu0 %v3661
    %3663 = vmatprep.subr.mxu0 0.0
    %v3664 = vand.u32 %v70, 4294901760
    %3665 = vmatpush1.msra.mxu0 %v3664
    %3666 = vmatprep.subr.mxu0 0.0
    %v3667 = vand.u32 %v69, 4294901760
    %3668 = vmatpush1.msra.mxu0 %v3667
    %3669 = vmatprep.subr.mxu0 0.0
    %v3670 = vand.u32 %v68, 4294901760
    %3671 = vmatpush1.msra.mxu0 %v3670
    %3672 = vmatprep.subr.mxu0 0.0
    %v3673 = vand.u32 %v67, 4294901760
    %3674 = vmatpush1.msra.mxu0 %v3673
    %3675 = vmatprep.subr.mxu0 0.0
    %v3676 = vand.u32 %v66, 4294901760
    %3677 = vmatpush1.msra.mxu0 %v3676
    %3678 = vmatprep.subr.mxu0 0.0
    %v3679 = vand.u32 %v65, 4294901760
    %3680 = vmatpush1.msra.mxu0 %v3679
    %3681 = vmatprep.subr.mxu0 0.0
    %v3682 = vand.u32 %v64, 4294901760
    %3683 = vmatpush1.msra.mxu0 %v3682
    %3684 = vmatprep.subr.mxu0 0.0
    %v3685 = vand.u32 %v63, 4294901760
    %3686 = vmatpush1.msra.mxu0 %v3685
    %3687 = vmatprep.subr.mxu0 0.0
    %v3688 = vand.u32 %v62, 4294901760
    %3689 = vmatpush1.msra.mxu0 %v3688
    %3690 = vmatprep.subr.mxu0 0.0
    %v3691 = vand.u32 %v61, 4294901760
    %3692 = vmatpush1.msra.mxu0 %v3691
    %3693 = vmatprep.subr.mxu0 0.0
    %v3694 = vand.u32 %v60, 4294901760
    %3695 = vmatpush1.msra.mxu0 %v3694
    %3696 = vmatprep.subr.mxu0 0.0
    %v3697 = vand.u32 %v59, 4294901760
    %3698 = vmatpush1.msra.mxu0 %v3697
    %3699 = vmatprep.subr.mxu0 0.0
    %v3700 = vand.u32 %v58, 4294901760
    %3701 = vmatpush1.msra.mxu0 %v3700
    %3702 = vmatprep.subr.mxu0 0.0
    %v3703 = vand.u32 %v57, 4294901760
    %3704 = vmatpush1.msra.mxu0 %v3703
    %3705 = vmatprep.subr.mxu0 0.0
    %3706 = vmatpush2.msra.mxu0 0.0
    %3707 = vmatprep.subr.mxu0 0.0
    %3708 = vmatpush2.msra.mxu0 0.0
    %3709 = vmatprep.subr.mxu0 0.0
    %3710 = vmatpush2.msra.mxu0 0.0
    %3711 = vmatprep.subr.mxu0 0.0
    %3712 = vmatpush2.msra.mxu0 0.0
    %3713 = vmatprep.subr.mxu0 0.0
    %3714 = vmatpush2.msra.mxu0 0.0
    %3715 = vmatprep.subr.mxu0 0.0
    %3716 = vmatpush2.msra.mxu0 0.0
    %3717 = vmatprep.subr.mxu0 0.0
    %3718 = vmatpush2.msra.mxu0 0.0
    %3719 = vmatprep.subr.mxu0 0.0
    %3720 = vmatpush2.msra.mxu0 0.0
    %3721 = vmatprep.subr.mxu0 0.0
    %3722 = vmatpush2.msra.mxu0 0.0
    %3723 = vmatprep.subr.mxu0 0.0
    %3724 = vmatpush2.msra.mxu0 0.0
    %3725 = vmatprep.subr.mxu0 0.0
    %3726 = vmatpush2.msra.mxu0 0.0
    %3727 = vmatprep.subr.mxu0 0.0
    %3728 = vmatpush2.msra.mxu0 0.0
    %3729 = vmatprep.subr.mxu0 0.0
    %v3730 = vand.u32 %v76, 4294901760
    %3731 = vmatpush2.msra.mxu0 %v3730
    %3732 = vmatprep.subr.mxu0 0.0
    %v3733 = vand.u32 %v75, 4294901760
    %3734 = vmatpush2.msra.mxu0 %v3733
    %3735 = vmatprep.subr.mxu0 0.0
    %v3736 = vand.u32 %v74, 4294901760
    %3737 = vmatpush2.msra.mxu0 %v3736
    %3738 = vmatprep.subr.mxu0 0.0
    %v3739 = vand.u32 %v73, 4294901760
    %3740 = vmatpush2.msra.mxu0 %v3739
    %v3741 = vand.u32 %v3646, 4294901760
    %v3742 = vsub.f32 %v3646, %v3741
    %v3743 = vand.u32 %v3742, 4294901760
    %v3744 = vsub.f32 %v3742, %v3743
    %v3745 = vand.u32 %v3744, 4294901760
    %3746 = vmatprep.mubr.f32.mxu0 %v3745
    %v3747 = vand.u32 %v3637, 4294901760
    %v3748 = vsub.f32 %v3637, %v3747
    %v3749 = vand.u32 %v3748, 4294901760
    %v3750 = vsub.f32 %v3748, %v3749
    %v3751 = vand.u32 %v3750, 4294901760
    %3752 = vmatmul.mubr.f32.gmra.mxu0 %v3751
    %v3753 = vpop.f32.mrf.mxu0
    %v3754 = vadd.f32 0.0, %v3753
    %v3755 = vpop.f32.mrf.mxu0
    %v3756 = vand.u32 %v3649, 4294901760
    %v3757 = vsub.f32 %v3649, %v3756
    %v3758 = vand.u32 %v3757, 4294901760
    %v3759 = vsub.f32 %v3757, %v3758
    %v3760 = vand.u32 %v3759, 4294901760
    %3761 = vmatprep.mubr.f32.mxu0 %v3760
    %v3762 = vand.u32 %v3639, 4294901760
    %v3763 = vsub.f32 %v3639, %v3762
    %v3764 = vand.u32 %v3763, 4294901760
    %v3765 = vsub.f32 %v3763, %v3764
    %v3766 = vand.u32 %v3765, 4294901760
    %3767 = vmatmul.mubr.f32.gmra.mxu0 %v3766
    %v3768 = vpop.f32.mrf.mxu0
    %v3769 = vadd.f32 0.0, %v3768
    %v3770 = vpop.f32.mrf.mxu0
    %v3771 = vand.u32 %v3652, 4294901760
    %v3772 = vsub.f32 %v3652, %v3771
    %v3773 = vand.u32 %v3772, 4294901760
    %v3774 = vsub.f32 %v3772, %v3773
    %v3775 = vand.u32 %v3774, 4294901760
    %3776 = vmatprep.mubr.f32.mxu0 %v3775
    %v3777 = vand.u32 %v3641, 4294901760
    %v3778 = vsub.f32 %v3641, %v3777
    %v3779 = vand.u32 %v3778, 4294901760
    %v3780 = vsub.f32 %v3778, %v3779
    %v3781 = vand.u32 %v3780, 4294901760
    %3782 = vmatmul.mubr.f32.gmra.mxu0 %v3781
    %v3783 = vpop.f32.mrf.mxu0
    %v3784 = vadd.f32 0.0, %v3783
    %v3785 = vpop.f32.mrf.mxu0
    %v3786 = vand.u32 %v3655, 4294901760
    %v3787 = vsub.f32 %v3655, %v3786
    %v3788 = vand.u32 %v3787, 4294901760
    %v3789 = vsub.f32 %v3787, %v3788
    %v3790 = vand.u32 %v3789, 4294901760
    %3791 = vmatprep.mubr.f32.mxu0 %v3790
    %v3792 = vand.u32 %v3643, 4294901760
    %v3793 = vsub.f32 %v3643, %v3792
    %v3794 = vand.u32 %v3793, 4294901760
    %v3795 = vsub.f32 %v3793, %v3794
    %v3796 = vand.u32 %v3795, 4294901760
    %3797 = vmatmul.mubr.f32.gmra.mxu0 %v3796
    %v3798 = vpop.f32.mrf.mxu0
    %v3799 = vadd.f32 0.0, %v3798
    %v3800 = vpop.f32.mrf.mxu0
    %3801 = vdwg.mxu0
    %3802 = vmatprep.subr.mxu0 0.0
    %v3803 = vand.u32 %v72, 4294901760
    %v3804 = vsub.f32 %v72, %v3803
    %v3805 = vand.u32 %v3804, 4294901760
    %v3806 = vsub.f32 %v3804, %v3805
    %v3807 = vand.u32 %v3806, 4294901760
    %3808 = vmatpush1.msra.mxu0 %v3807
    %3809 = vmatprep.subr.mxu0 0.0
    %v3810 = vand.u32 %v71, 4294901760
    %v3811 = vsub.f32 %v71, %v3810
    %v3812 = vand.u32 %v3811, 4294901760
    %v3813 = vsub.f32 %v3811, %v3812
    %v3814 = vand.u32 %v3813, 4294901760
    %3815 = vmatpush1.msra.mxu0 %v3814
    %3816 = vmatprep.subr.mxu0 0.0
    %v3817 = vand.u32 %v70, 4294901760
    %v3818 = vsub.f32 %v70, %v3817
    %v3819 = vand.u32 %v3818, 4294901760
    %v3820 = vsub.f32 %v3818, %v3819
    %v3821 = vand.u32 %v3820, 4294901760
    %3822 = vmatpush1.msra.mxu0 %v3821
    %3823 = vmatprep.subr.mxu0 0.0
    %v3824 = vand.u32 %v69, 4294901760
    %v3825 = vsub.f32 %v69, %v3824
    %v3826 = vand.u32 %v3825, 4294901760
    %v3827 = vsub.f32 %v3825, %v3826
    %v3828 = vand.u32 %v3827, 4294901760
    %3829 = vmatpush1.msra.mxu0 %v3828
    %3830 = vmatprep.subr.mxu0 0.0
    %v3831 = vand.u32 %v68, 4294901760
    %v3832 = vsub.f32 %v68, %v3831
    %v3833 = vand.u32 %v3832, 4294901760
    %v3834 = vsub.f32 %v3832, %v3833
    %v3835 = vand.u32 %v3834, 4294901760
    %3836 = vmatpush1.msra.mxu0 %v3835
    %3837 = vmatprep.subr.mxu0 0.0
    %v3838 = vand.u32 %v67, 4294901760
    %v3839 = vsub.f32 %v67, %v3838
    %v3840 = vand.u32 %v3839, 4294901760
    %v3841 = vsub.f32 %v3839, %v3840
    %v3842 = vand.u32 %v3841, 4294901760
    %3843 = vmatpush1.msra.mxu0 %v3842
    %3844 = vmatprep.subr.mxu0 0.0
    %v3845 = vand.u32 %v66, 4294901760
    %v3846 = vsub.f32 %v66, %v3845
    %v3847 = vand.u32 %v3846, 4294901760
    %v3848 = vsub.f32 %v3846, %v3847
    %v3849 = vand.u32 %v3848, 4294901760
    %3850 = vmatpush1.msra.mxu0 %v3849
    %3851 = vmatprep.subr.mxu0 0.0
    %v3852 = vand.u32 %v65, 4294901760
    %v3853 = vsub.f32 %v65, %v3852
    %v3854 = vand.u32 %v3853, 4294901760
    %v3855 = vsub.f32 %v3853, %v3854
    %v3856 = vand.u32 %v3855, 4294901760
    %3857 = vmatpush1.msra.mxu0 %v3856
    %3858 = vmatprep.subr.mxu0 0.0
    %v3859 = vand.u32 %v64, 4294901760
    %v3860 = vsub.f32 %v64, %v3859
    %v3861 = vand.u32 %v3860, 4294901760
    %v3862 = vsub.f32 %v3860, %v3861
    %v3863 = vand.u32 %v3862, 4294901760
    %3864 = vmatpush1.msra.mxu0 %v3863
    %3865 = vmatprep.subr.mxu0 0.0
    %v3866 = vand.u32 %v63, 4294901760
    %v3867 = vsub.f32 %v63, %v3866
    %v3868 = vand.u32 %v3867, 4294901760
    %v3869 = vsub.f32 %v3867, %v3868
    %v3870 = vand.u32 %v3869, 4294901760
    %3871 = vmatpush1.msra.mxu0 %v3870
    %3872 = vmatprep.subr.mxu0 0.0
    %v3873 = vand.u32 %v62, 4294901760
    %v3874 = vsub.f32 %v62, %v3873
    %v3875 = vand.u32 %v3874, 4294901760
    %v3876 = vsub.f32 %v3874, %v3875
    %v3877 = vand.u32 %v3876, 4294901760
    %3878 = vmatpush1.msra.mxu0 %v3877
    %3879 = vmatprep.subr.mxu0 0.0
    %v3880 = vand.u32 %v61, 4294901760
    %v3881 = vsub.f32 %v61, %v3880
    %v3882 = vand.u32 %v3881, 4294901760
    %v3883 = vsub.f32 %v3881, %v3882
    %v3884 = vand.u32 %v3883, 4294901760
    %3885 = vmatpush1.msra.mxu0 %v3884
    %3886 = vmatprep.subr.mxu0 0.0
    %v3887 = vand.u32 %v60, 4294901760
    %v3888 = vsub.f32 %v60, %v3887
    %v3889 = vand.u32 %v3888, 4294901760
    %v3890 = vsub.f32 %v3888, %v3889
    %v3891 = vand.u32 %v3890, 4294901760
    %3892 = vmatpush1.msra.mxu0 %v3891
    %3893 = vmatprep.subr.mxu0 0.0
    %v3894 = vand.u32 %v59, 4294901760
    %v3895 = vsub.f32 %v59, %v3894
    %v3896 = vand.u32 %v3895, 4294901760
    %v3897 = vsub.f32 %v3895, %v3896
    %v3898 = vand.u32 %v3897, 4294901760
    %3899 = vmatpush1.msra.mxu0 %v3898
    %3900 = vmatprep.subr.mxu0 0.0
    %v3901 = vand.u32 %v58, 4294901760
    %v3902 = vsub.f32 %v58, %v3901
    %v3903 = vand.u32 %v3902, 4294901760
    %v3904 = vsub.f32 %v3902, %v3903
    %v3905 = vand.u32 %v3904, 4294901760
    %3906 = vmatpush1.msra.mxu0 %v3905
    %3907 = vmatprep.subr.mxu0 0.0
    %v3908 = vand.u32 %v57, 4294901760
    %v3909 = vsub.f32 %v57, %v3908
    %v3910 = vand.u32 %v3909, 4294901760
    %v3911 = vsub.f32 %v3909, %v3910
    %v3912 = vand.u32 %v3911, 4294901760
    %3913 = vmatpush1.msra.mxu0 %v3912
    %3914 = vmatprep.subr.mxu0 0.0
    %3915 = vmatpush2.msra.mxu0 0.0
    %3916 = vmatprep.subr.mxu0 0.0
    %3917 = vmatpush2.msra.mxu0 0.0
    %3918 = vmatprep.subr.mxu0 0.0
    %3919 = vmatpush2.msra.mxu0 0.0
    %3920 = vmatprep.subr.mxu0 0.0
    %3921 = vmatpush2.msra.mxu0 0.0
    %3922 = vmatprep.subr.mxu0 0.0
    %3923 = vmatpush2.msra.mxu0 0.0
    %3924 = vmatprep.subr.mxu0 0.0
    %3925 = vmatpush2.msra.mxu0 0.0
    %3926 = vmatprep.subr.mxu0 0.0
    %3927 = vmatpush2.msra.mxu0 0.0
    %3928 = vmatprep.subr.mxu0 0.0
    %3929 = vmatpush2.msra.mxu0 0.0
    %3930 = vmatprep.subr.mxu0 0.0
    %3931 = vmatpush2.msra.mxu0 0.0
    %3932 = vmatprep.subr.mxu0 0.0
    %3933 = vmatpush2.msra.mxu0 0.0
    %3934 = vmatprep.subr.mxu0 0.0
    %3935 = vmatpush2.msra.mxu0 0.0
    %3936 = vmatprep.subr.mxu0 0.0
    %3937 = vmatpush2.msra.mxu0 0.0
    %3938 = vmatprep.subr.mxu0 0.0
    %v3939 = vand.u32 %v76, 4294901760
    %v3940 = vsub.f32 %v76, %v3939
    %v3941 = vand.u32 %v3940, 4294901760
    %v3942 = vsub.f32 %v3940, %v3941
    %v3943 = vand.u32 %v3942, 4294901760
    %3944 = vmatpush2.msra.mxu0 %v3943
    %3945 = vmatprep.subr.mxu0 0.0
    %v3946 = vand.u32 %v75, 4294901760
    %v3947 = vsub.f32 %v75, %v3946
    %v3948 = vand.u32 %v3947, 4294901760
    %v3949 = vsub.f32 %v3947, %v3948
    %v3950 = vand.u32 %v3949, 4294901760
    %3951 = vmatpush2.msra.mxu0 %v3950
    %3952 = vmatprep.subr.mxu0 0.0
    %v3953 = vand.u32 %v74, 4294901760
    %v3954 = vsub.f32 %v74, %v3953
    %v3955 = vand.u32 %v3954, 4294901760
    %v3956 = vsub.f32 %v3954, %v3955
    %v3957 = vand.u32 %v3956, 4294901760
    %3958 = vmatpush2.msra.mxu0 %v3957
    %3959 = vmatprep.subr.mxu0 0.0
    %v3960 = vand.u32 %v73, 4294901760
    %v3961 = vsub.f32 %v73, %v3960
    %v3962 = vand.u32 %v3961, 4294901760
    %v3963 = vsub.f32 %v3961, %v3962
    %v3964 = vand.u32 %v3963, 4294901760
    %3965 = vmatpush2.msra.mxu0 %v3964
    %v3966 = vand.u32 %v3646, 4294901760
    %3967 = vmatprep.mubr.f32.mxu0 %v3966
    %v3968 = vand.u32 %v3637, 4294901760
    %3969 = vmatmul.mubr.f32.gmra.mxu0 %v3968
    %v3970 = vpop.f32.mrf.mxu0
    %v3971 = vadd.f32 %v3754, %v3970
    %v3972 = vpop.f32.mrf.mxu0
    %v3973 = vand.u32 %v3649, 4294901760
    %3974 = vmatprep.mubr.f32.mxu0 %v3973
    %v3975 = vand.u32 %v3639, 4294901760
    %3976 = vmatmul.mubr.f32.gmra.mxu0 %v3975
    %v3977 = vpop.f32.mrf.mxu0
    %v3978 = vadd.f32 %v3769, %v3977
    %v3979 = vpop.f32.mrf.mxu0
    %v3980 = vand.u32 %v3652, 4294901760
    %3981 = vmatprep.mubr.f32.mxu0 %v3980
    %v3982 = vand.u32 %v3641, 4294901760
    %3983 = vmatmul.mubr.f32.gmra.mxu0 %v3982
    %v3984 = vpop.f32.mrf.mxu0
    %v3985 = vadd.f32 %v3784, %v3984
    %v3986 = vpop.f32.mrf.mxu0
    %v3987 = vand.u32 %v3655, 4294901760
    %3988 = vmatprep.mubr.f32.mxu0 %v3987
    %v3989 = vand.u32 %v3643, 4294901760
    %3990 = vmatmul.mubr.f32.gmra.mxu0 %v3989
    %v3991 = vpop.f32.mrf.mxu0
    %v3992 = vadd.f32 %v3799, %v3991
    %v3993 = vpop.f32.mrf.mxu0
    %3994 = vdwg.mxu0
    %3995 = vmatprep.subr.mxu0 0.0
    %v3996 = vand.u32 %v72, 4294901760
    %v3997 = vsub.f32 %v72, %v3996
    %3998 = vmatpush1.msra.mxu0 %v3997
    %3999 = vmatprep.subr.mxu0 0.0
    %v4000 = vand.u32 %v71, 4294901760
    %v4001 = vsub.f32 %v71, %v4000
    %4002 = vmatpush1.msra.mxu0 %v4001
    %4003 = vmatprep.subr.mxu0 0.0
    %v4004 = vand.u32 %v70, 4294901760
    %v4005 = vsub.f32 %v70, %v4004
    %4006 = vmatpush1.msra.mxu0 %v4005
    %4007 = vmatprep.subr.mxu0 0.0
    %v4008 = vand.u32 %v69, 4294901760
    %v4009 = vsub.f32 %v69, %v4008
    %4010 = vmatpush1.msra.mxu0 %v4009
    %4011 = vmatprep.subr.mxu0 0.0
    %v4012 = vand.u32 %v68, 4294901760
    %v4013 = vsub.f32 %v68, %v4012
    %4014 = vmatpush1.msra.mxu0 %v4013
    %4015 = vmatprep.subr.mxu0 0.0
    %v4016 = vand.u32 %v67, 4294901760
    %v4017 = vsub.f32 %v67, %v4016
    %4018 = vmatpush1.msra.mxu0 %v4017
    %4019 = vmatprep.subr.mxu0 0.0
    %v4020 = vand.u32 %v66, 4294901760
    %v4021 = vsub.f32 %v66, %v4020
    %4022 = vmatpush1.msra.mxu0 %v4021
    %4023 = vmatprep.subr.mxu0 0.0
    %v4024 = vand.u32 %v65, 4294901760
    %v4025 = vsub.f32 %v65, %v4024
    %4026 = vmatpush1.msra.mxu0 %v4025
    %4027 = vmatprep.subr.mxu0 0.0
    %v4028 = vand.u32 %v64, 4294901760
    %v4029 = vsub.f32 %v64, %v4028
    %4030 = vmatpush1.msra.mxu0 %v4029
    %4031 = vmatprep.subr.mxu0 0.0
    %v4032 = vand.u32 %v63, 4294901760
    %v4033 = vsub.f32 %v63, %v4032
    %4034 = vmatpush1.msra.mxu0 %v4033
    %4035 = vmatprep.subr.mxu0 0.0
    %v4036 = vand.u32 %v62, 4294901760
    %v4037 = vsub.f32 %v62, %v4036
    %4038 = vmatpush1.msra.mxu0 %v4037
    %4039 = vmatprep.subr.mxu0 0.0
    %v4040 = vand.u32 %v61, 4294901760
    %v4041 = vsub.f32 %v61, %v4040
    %4042 = vmatpush1.msra.mxu0 %v4041
    %4043 = vmatprep.subr.mxu0 0.0
    %v4044 = vand.u32 %v60, 4294901760
    %v4045 = vsub.f32 %v60, %v4044
    %4046 = vmatpush1.msra.mxu0 %v4045
    %4047 = vmatprep.subr.mxu0 0.0
    %v4048 = vand.u32 %v59, 4294901760
    %v4049 = vsub.f32 %v59, %v4048
    %4050 = vmatpush1.msra.mxu0 %v4049
    %4051 = vmatprep.subr.mxu0 0.0
    %v4052 = vand.u32 %v58, 4294901760
    %v4053 = vsub.f32 %v58, %v4052
    %4054 = vmatpush1.msra.mxu0 %v4053
    %4055 = vmatprep.subr.mxu0 0.0
    %v4056 = vand.u32 %v57, 4294901760
    %v4057 = vsub.f32 %v57, %v4056
    %4058 = vmatpush1.msra.mxu0 %v4057
    %4059 = vmatprep.subr.mxu0 0.0
    %4060 = vmatpush2.msra.mxu0 0.0
    %4061 = vmatprep.subr.mxu0 0.0
    %4062 = vmatpush2.msra.mxu0 0.0
    %4063 = vmatprep.subr.mxu0 0.0
    %4064 = vmatpush2.msra.mxu0 0.0
    %4065 = vmatprep.subr.mxu0 0.0
    %4066 = vmatpush2.msra.mxu0 0.0
    %4067 = vmatprep.subr.mxu0 0.0
    %4068 = vmatpush2.msra.mxu0 0.0
    %4069 = vmatprep.subr.mxu0 0.0
    %4070 = vmatpush2.msra.mxu0 0.0
    %4071 = vmatprep.subr.mxu0 0.0
    %4072 = vmatpush2.msra.mxu0 0.0
    %4073 = vmatprep.subr.mxu0 0.0
    %4074 = vmatpush2.msra.mxu0 0.0
    %4075 = vmatprep.subr.mxu0 0.0
    %4076 = vmatpush2.msra.mxu0 0.0
    %4077 = vmatprep.subr.mxu0 0.0
    %4078 = vmatpush2.msra.mxu0 0.0
    %4079 = vmatprep.subr.mxu0 0.0
    %4080 = vmatpush2.msra.mxu0 0.0
    %4081 = vmatprep.subr.mxu0 0.0
    %4082 = vmatpush2.msra.mxu0 0.0
    %4083 = vmatprep.subr.mxu0 0.0
    %v4084 = vand.u32 %v76, 4294901760
    %v4085 = vsub.f32 %v76, %v4084
    %4086 = vmatpush2.msra.mxu0 %v4085
    %4087 = vmatprep.subr.mxu0 0.0
    %v4088 = vand.u32 %v75, 4294901760
    %v4089 = vsub.f32 %v75, %v4088
    %4090 = vmatpush2.msra.mxu0 %v4089
    %4091 = vmatprep.subr.mxu0 0.0
    %v4092 = vand.u32 %v74, 4294901760
    %v4093 = vsub.f32 %v74, %v4092
    %4094 = vmatpush2.msra.mxu0 %v4093
    %4095 = vmatprep.subr.mxu0 0.0
    %v4096 = vand.u32 %v73, 4294901760
    %v4097 = vsub.f32 %v73, %v4096
    %4098 = vmatpush2.msra.mxu0 %v4097
    %v4099 = vand.u32 %v3646, 4294901760
    %v4100 = vsub.f32 %v3646, %v4099
    %4101 = vmatprep.mubr.f32.mxu0 %v4100
    %v4102 = vand.u32 %v3637, 4294901760
    %v4103 = vsub.f32 %v3637, %v4102
    %4104 = vmatmul.mubr.f32.gmra.mxu0 %v4103
    %v4105 = vpop.f32.mrf.mxu0
    %v4106 = vadd.f32 %v3971, %v4105
    %v4107 = vpop.f32.mrf.mxu0
    %v4108 = vand.u32 %v3649, 4294901760
    %v4109 = vsub.f32 %v3649, %v4108
    %4110 = vmatprep.mubr.f32.mxu0 %v4109
    %v4111 = vand.u32 %v3639, 4294901760
    %v4112 = vsub.f32 %v3639, %v4111
    %4113 = vmatmul.mubr.f32.gmra.mxu0 %v4112
    %v4114 = vpop.f32.mrf.mxu0
    %v4115 = vadd.f32 %v3978, %v4114
    %v4116 = vpop.f32.mrf.mxu0
    %v4117 = vand.u32 %v3652, 4294901760
    %v4118 = vsub.f32 %v3652, %v4117
    %4119 = vmatprep.mubr.f32.mxu0 %v4118
    %v4120 = vand.u32 %v3641, 4294901760
    %v4121 = vsub.f32 %v3641, %v4120
    %4122 = vmatmul.mubr.f32.gmra.mxu0 %v4121
    %v4123 = vpop.f32.mrf.mxu0
    %v4124 = vadd.f32 %v3985, %v4123
    %v4125 = vpop.f32.mrf.mxu0
    %v4126 = vand.u32 %v3655, 4294901760
    %v4127 = vsub.f32 %v3655, %v4126
    %4128 = vmatprep.mubr.f32.mxu0 %v4127
    %v4129 = vand.u32 %v3643, 4294901760
    %v4130 = vsub.f32 %v3643, %v4129
    %4131 = vmatmul.mubr.f32.gmra.mxu0 %v4130
    %v4132 = vpop.f32.mrf.mxu0
    %v4133 = vadd.f32 %v3992, %v4132
    %v4134 = vpop.f32.mrf.mxu0
    %4135 = vdwg.mxu0
    %4136 = vmatprep.subr.mxu0 0.0
    %v4137 = vand.u32 %v72, 4294901760
    %4138 = vmatpush1.msra.mxu0 %v4137
    %4139 = vmatprep.subr.mxu0 0.0
    %v4140 = vand.u32 %v71, 4294901760
    %4141 = vmatpush1.msra.mxu0 %v4140
    %4142 = vmatprep.subr.mxu0 0.0
    %v4143 = vand.u32 %v70, 4294901760
    %4144 = vmatpush1.msra.mxu0 %v4143
    %4145 = vmatprep.subr.mxu0 0.0
    %v4146 = vand.u32 %v69, 4294901760
    %4147 = vmatpush1.msra.mxu0 %v4146
    %4148 = vmatprep.subr.mxu0 0.0
    %v4149 = vand.u32 %v68, 4294901760
    %4150 = vmatpush1.msra.mxu0 %v4149
    %4151 = vmatprep.subr.mxu0 0.0
    %v4152 = vand.u32 %v67, 4294901760
    %4153 = vmatpush1.msra.mxu0 %v4152
    %4154 = vmatprep.subr.mxu0 0.0
    %v4155 = vand.u32 %v66, 4294901760
    %4156 = vmatpush1.msra.mxu0 %v4155
    %4157 = vmatprep.subr.mxu0 0.0
    %v4158 = vand.u32 %v65, 4294901760
    %4159 = vmatpush1.msra.mxu0 %v4158
    %4160 = vmatprep.subr.mxu0 0.0
    %v4161 = vand.u32 %v64, 4294901760
    %4162 = vmatpush1.msra.mxu0 %v4161
    %4163 = vmatprep.subr.mxu0 0.0
    %v4164 = vand.u32 %v63, 4294901760
    %4165 = vmatpush1.msra.mxu0 %v4164
    %4166 = vmatprep.subr.mxu0 0.0
    %v4167 = vand.u32 %v62, 4294901760
    %4168 = vmatpush1.msra.mxu0 %v4167
    %4169 = vmatprep.subr.mxu0 0.0
    %v4170 = vand.u32 %v61, 4294901760
    %4171 = vmatpush1.msra.mxu0 %v4170
    %4172 = vmatprep.subr.mxu0 0.0
    %v4173 = vand.u32 %v60, 4294901760
    %4174 = vmatpush1.msra.mxu0 %v4173
    %4175 = vmatprep.subr.mxu0 0.0
    %v4176 = vand.u32 %v59, 4294901760
    %4177 = vmatpush1.msra.mxu0 %v4176
    %4178 = vmatprep.subr.mxu0 0.0
    %v4179 = vand.u32 %v58, 4294901760
    %4180 = vmatpush1.msra.mxu0 %v4179
    %4181 = vmatprep.subr.mxu0 0.0
    %v4182 = vand.u32 %v57, 4294901760
    %4183 = vmatpush1.msra.mxu0 %v4182
    %4184 = vmatprep.subr.mxu0 0.0
    %4185 = vmatpush2.msra.mxu0 0.0
    %4186 = vmatprep.subr.mxu0 0.0
    %4187 = vmatpush2.msra.mxu0 0.0
    %4188 = vmatprep.subr.mxu0 0.0
    %4189 = vmatpush2.msra.mxu0 0.0
    %4190 = vmatprep.subr.mxu0 0.0
    %4191 = vmatpush2.msra.mxu0 0.0
    %4192 = vmatprep.subr.mxu0 0.0
    %4193 = vmatpush2.msra.mxu0 0.0
    %4194 = vmatprep.subr.mxu0 0.0
    %4195 = vmatpush2.msra.mxu0 0.0
    %4196 = vmatprep.subr.mxu0 0.0
    %4197 = vmatpush2.msra.mxu0 0.0
    %4198 = vmatprep.subr.mxu0 0.0
    %4199 = vmatpush2.msra.mxu0 0.0
    %4200 = vmatprep.subr.mxu0 0.0
    %4201 = vmatpush2.msra.mxu0 0.0
    %4202 = vmatprep.subr.mxu0 0.0
    %4203 = vmatpush2.msra.mxu0 0.0
    %4204 = vmatprep.subr.mxu0 0.0
    %4205 = vmatpush2.msra.mxu0 0.0
    %4206 = vmatprep.subr.mxu0 0.0
    %4207 = vmatpush2.msra.mxu0 0.0
    %4208 = vmatprep.subr.mxu0 0.0
    %v4209 = vand.u32 %v76, 4294901760
    %4210 = vmatpush2.msra.mxu0 %v4209
    %4211 = vmatprep.subr.mxu0 0.0
    %v4212 = vand.u32 %v75, 4294901760
    %4213 = vmatpush2.msra.mxu0 %v4212
    %4214 = vmatprep.subr.mxu0 0.0
    %v4215 = vand.u32 %v74, 4294901760
    %4216 = vmatpush2.msra.mxu0 %v4215
    %4217 = vmatprep.subr.mxu0 0.0
    %v4218 = vand.u32 %v73, 4294901760
    %4219 = vmatpush2.msra.mxu0 %v4218
    %v4220 = vand.u32 %v3646, 4294901760
    %v4221 = vsub.f32 %v3646, %v4220
    %v4222 = vand.u32 %v4221, 4294901760
    %4223 = vmatprep.mubr.f32.mxu0 %v4222
    %v4224 = vand.u32 %v3637, 4294901760
    %v4225 = vsub.f32 %v3637, %v4224
    %v4226 = vand.u32 %v4225, 4294901760
    %4227 = vmatmul.mubr.f32.gmra.mxu0 %v4226
    %v4228 = vpop.f32.mrf.mxu0
    %v4229 = vadd.f32 %v4106, %v4228
    %v4230 = vpop.f32.mrf.mxu0
    %v4231 = vand.u32 %v3649, 4294901760
    %v4232 = vsub.f32 %v3649, %v4231
    %v4233 = vand.u32 %v4232, 4294901760
    %4234 = vmatprep.mubr.f32.mxu0 %v4233
    %v4235 = vand.u32 %v3639, 4294901760
    %v4236 = vsub.f32 %v3639, %v4235
    %v4237 = vand.u32 %v4236, 4294901760
    %4238 = vmatmul.mubr.f32.gmra.mxu0 %v4237
    %v4239 = vpop.f32.mrf.mxu0
    %v4240 = vadd.f32 %v4115, %v4239
    %v4241 = vpop.f32.mrf.mxu0
    %v4242 = vand.u32 %v3652, 4294901760
    %v4243 = vsub.f32 %v3652, %v4242
    %v4244 = vand.u32 %v4243, 4294901760
    %4245 = vmatprep.mubr.f32.mxu0 %v4244
    %v4246 = vand.u32 %v3641, 4294901760
    %v4247 = vsub.f32 %v3641, %v4246
    %v4248 = vand.u32 %v4247, 4294901760
    %4249 = vmatmul.mubr.f32.gmra.mxu0 %v4248
    %v4250 = vpop.f32.mrf.mxu0
    %v4251 = vadd.f32 %v4124, %v4250
    %v4252 = vpop.f32.mrf.mxu0
    %v4253 = vand.u32 %v3655, 4294901760
    %v4254 = vsub.f32 %v3655, %v4253
    %v4255 = vand.u32 %v4254, 4294901760
    %4256 = vmatprep.mubr.f32.mxu0 %v4255
    %v4257 = vand.u32 %v3643, 4294901760
    %v4258 = vsub.f32 %v3643, %v4257
    %v4259 = vand.u32 %v4258, 4294901760
    %4260 = vmatmul.mubr.f32.gmra.mxu0 %v4259
    %v4261 = vpop.f32.mrf.mxu0
    %v4262 = vadd.f32 %v4133, %v4261
    %v4263 = vpop.f32.mrf.mxu0
    %4264 = vdwg.mxu0
    %4265 = vmatprep.subr.mxu0 0.0
    %v4266 = vand.u32 %v72, 4294901760
    %v4267 = vsub.f32 %v72, %v4266
    %v4268 = vand.u32 %v4267, 4294901760
    %4269 = vmatpush1.msra.mxu0 %v4268
    %4270 = vmatprep.subr.mxu0 0.0
    %v4271 = vand.u32 %v71, 4294901760
    %v4272 = vsub.f32 %v71, %v4271
    %v4273 = vand.u32 %v4272, 4294901760
    %4274 = vmatpush1.msra.mxu0 %v4273
    %4275 = vmatprep.subr.mxu0 0.0
    %v4276 = vand.u32 %v70, 4294901760
    %v4277 = vsub.f32 %v70, %v4276
    %v4278 = vand.u32 %v4277, 4294901760
    %4279 = vmatpush1.msra.mxu0 %v4278
    %4280 = vmatprep.subr.mxu0 0.0
    %v4281 = vand.u32 %v69, 4294901760
    %v4282 = vsub.f32 %v69, %v4281
    %v4283 = vand.u32 %v4282, 4294901760
    %4284 = vmatpush1.msra.mxu0 %v4283
    %4285 = vmatprep.subr.mxu0 0.0
    %v4286 = vand.u32 %v68, 4294901760
    %v4287 = vsub.f32 %v68, %v4286
    %v4288 = vand.u32 %v4287, 4294901760
    %4289 = vmatpush1.msra.mxu0 %v4288
    %4290 = vmatprep.subr.mxu0 0.0
    %v4291 = vand.u32 %v67, 4294901760
    %v4292 = vsub.f32 %v67, %v4291
    %v4293 = vand.u32 %v4292, 4294901760
    %4294 = vmatpush1.msra.mxu0 %v4293
    %4295 = vmatprep.subr.mxu0 0.0
    %v4296 = vand.u32 %v66, 4294901760
    %v4297 = vsub.f32 %v66, %v4296
    %v4298 = vand.u32 %v4297, 4294901760
    %4299 = vmatpush1.msra.mxu0 %v4298
    %4300 = vmatprep.subr.mxu0 0.0
    %v4301 = vand.u32 %v65, 4294901760
    %v4302 = vsub.f32 %v65, %v4301
    %v4303 = vand.u32 %v4302, 4294901760
    %4304 = vmatpush1.msra.mxu0 %v4303
    %4305 = vmatprep.subr.mxu0 0.0
    %v4306 = vand.u32 %v64, 4294901760
    %v4307 = vsub.f32 %v64, %v4306
    %v4308 = vand.u32 %v4307, 4294901760
    %4309 = vmatpush1.msra.mxu0 %v4308
    %4310 = vmatprep.subr.mxu0 0.0
    %v4311 = vand.u32 %v63, 4294901760
    %v4312 = vsub.f32 %v63, %v4311
    %v4313 = vand.u32 %v4312, 4294901760
    %4314 = vmatpush1.msra.mxu0 %v4313
    %4315 = vmatprep.subr.mxu0 0.0
    %v4316 = vand.u32 %v62, 4294901760
    %v4317 = vsub.f32 %v62, %v4316
    %v4318 = vand.u32 %v4317, 4294901760
    %4319 = vmatpush1.msra.mxu0 %v4318
    %4320 = vmatprep.subr.mxu0 0.0
    %v4321 = vand.u32 %v61, 4294901760
    %v4322 = vsub.f32 %v61, %v4321
    %v4323 = vand.u32 %v4322, 4294901760
    %4324 = vmatpush1.msra.mxu0 %v4323
    %4325 = vmatprep.subr.mxu0 0.0
    %v4326 = vand.u32 %v60, 4294901760
    %v4327 = vsub.f32 %v60, %v4326
    %v4328 = vand.u32 %v4327, 4294901760
    %4329 = vmatpush1.msra.mxu0 %v4328
    %4330 = vmatprep.subr.mxu0 0.0
    %v4331 = vand.u32 %v59, 4294901760
    %v4332 = vsub.f32 %v59, %v4331
    %v4333 = vand.u32 %v4332, 4294901760
    %4334 = vmatpush1.msra.mxu0 %v4333
    %4335 = vmatprep.subr.mxu0 0.0
    %v4336 = vand.u32 %v58, 4294901760
    %v4337 = vsub.f32 %v58, %v4336
    %v4338 = vand.u32 %v4337, 4294901760
    %4339 = vmatpush1.msra.mxu0 %v4338
    %4340 = vmatprep.subr.mxu0 0.0
    %v4341 = vand.u32 %v57, 4294901760
    %v4342 = vsub.f32 %v57, %v4341
    %v4343 = vand.u32 %v4342, 4294901760
    %4344 = vmatpush1.msra.mxu0 %v4343
    %4345 = vmatprep.subr.mxu0 0.0
    %4346 = vmatpush2.msra.mxu0 0.0
    %4347 = vmatprep.subr.mxu0 0.0
    %4348 = vmatpush2.msra.mxu0 0.0
    %4349 = vmatprep.subr.mxu0 0.0
    %4350 = vmatpush2.msra.mxu0 0.0
    %4351 = vmatprep.subr.mxu0 0.0
    %4352 = vmatpush2.msra.mxu0 0.0
    %4353 = vmatprep.subr.mxu0 0.0
    %4354 = vmatpush2.msra.mxu0 0.0
    %4355 = vmatprep.subr.mxu0 0.0
    %4356 = vmatpush2.msra.mxu0 0.0
    %4357 = vmatprep.subr.mxu0 0.0
    %4358 = vmatpush2.msra.mxu0 0.0
    %4359 = vmatprep.subr.mxu0 0.0
    %4360 = vmatpush2.msra.mxu0 0.0
    %4361 = vmatprep.subr.mxu0 0.0
    %4362 = vmatpush2.msra.mxu0 0.0
    %4363 = vmatprep.subr.mxu0 0.0
    %4364 = vmatpush2.msra.mxu0 0.0
    %4365 = vmatprep.subr.mxu0 0.0
    %4366 = vmatpush2.msra.mxu0 0.0
    %4367 = vmatprep.subr.mxu0 0.0
    %4368 = vmatpush2.msra.mxu0 0.0
    %4369 = vmatprep.subr.mxu0 0.0
    %v4370 = vand.u32 %v76, 4294901760
    %v4371 = vsub.f32 %v76, %v4370
    %v4372 = vand.u32 %v4371, 4294901760
    %4373 = vmatpush2.msra.mxu0 %v4372
    %4374 = vmatprep.subr.mxu0 0.0
    %v4375 = vand.u32 %v75, 4294901760
    %v4376 = vsub.f32 %v75, %v4375
    %v4377 = vand.u32 %v4376, 4294901760
    %4378 = vmatpush2.msra.mxu0 %v4377
    %4379 = vmatprep.subr.mxu0 0.0
    %v4380 = vand.u32 %v74, 4294901760
    %v4381 = vsub.f32 %v74, %v4380
    %v4382 = vand.u32 %v4381, 4294901760
    %4383 = vmatpush2.msra.mxu0 %v4382
    %4384 = vmatprep.subr.mxu0 0.0
    %v4385 = vand.u32 %v73, 4294901760
    %v4386 = vsub.f32 %v73, %v4385
    %v4387 = vand.u32 %v4386, 4294901760
    %4388 = vmatpush2.msra.mxu0 %v4387
    %v4389 = vand.u32 %v3646, 4294901760
    %4390 = vmatprep.mubr.f32.mxu0 %v4389
    %v4391 = vand.u32 %v3637, 4294901760
    %4392 = vmatmul.mubr.f32.gmra.mxu0 %v4391
    %v4393 = vpop.f32.mrf.mxu0
    %v4394 = vadd.f32 %v4229, %v4393
    %v4395 = vpop.f32.mrf.mxu0
    %v4396 = vand.u32 %v3649, 4294901760
    %4397 = vmatprep.mubr.f32.mxu0 %v4396
    %v4398 = vand.u32 %v3639, 4294901760
    %4399 = vmatmul.mubr.f32.gmra.mxu0 %v4398
    %v4400 = vpop.f32.mrf.mxu0
    %v4401 = vadd.f32 %v4240, %v4400
    %v4402 = vpop.f32.mrf.mxu0
    %v4403 = vand.u32 %v3652, 4294901760
    %4404 = vmatprep.mubr.f32.mxu0 %v4403
    %v4405 = vand.u32 %v3641, 4294901760
    %4406 = vmatmul.mubr.f32.gmra.mxu0 %v4405
    %v4407 = vpop.f32.mrf.mxu0
    %v4408 = vadd.f32 %v4251, %v4407
    %v4409 = vpop.f32.mrf.mxu0
    %v4410 = vand.u32 %v3655, 4294901760
    %4411 = vmatprep.mubr.f32.mxu0 %v4410
    %v4412 = vand.u32 %v3643, 4294901760
    %4413 = vmatmul.mubr.f32.gmra.mxu0 %v4412
    %v4414 = vpop.f32.mrf.mxu0
    %v4415 = vadd.f32 %v4262, %v4414
    %v4416 = vpop.f32.mrf.mxu0
    %4417 = vdwg.mxu0
    %4418 = vmatprep.subr.mxu0 0.0
    %v4419 = vand.u32 %v72, 4294901760
    %4420 = vmatpush1.msra.mxu0 %v4419
    %4421 = vmatprep.subr.mxu0 0.0
    %v4422 = vand.u32 %v71, 4294901760
    %4423 = vmatpush1.msra.mxu0 %v4422
    %4424 = vmatprep.subr.mxu0 0.0
    %v4425 = vand.u32 %v70, 4294901760
    %4426 = vmatpush1.msra.mxu0 %v4425
    %4427 = vmatprep.subr.mxu0 0.0
    %v4428 = vand.u32 %v69, 4294901760
    %4429 = vmatpush1.msra.mxu0 %v4428
    %4430 = vmatprep.subr.mxu0 0.0
    %v4431 = vand.u32 %v68, 4294901760
    %4432 = vmatpush1.msra.mxu0 %v4431
    %4433 = vmatprep.subr.mxu0 0.0
    %v4434 = vand.u32 %v67, 4294901760
    %4435 = vmatpush1.msra.mxu0 %v4434
    %4436 = vmatprep.subr.mxu0 0.0
    %v4437 = vand.u32 %v66, 4294901760
    %4438 = vmatpush1.msra.mxu0 %v4437
    %4439 = vmatprep.subr.mxu0 0.0
    %v4440 = vand.u32 %v65, 4294901760
    %4441 = vmatpush1.msra.mxu0 %v4440
    %4442 = vmatprep.subr.mxu0 0.0
    %v4443 = vand.u32 %v64, 4294901760
    %4444 = vmatpush1.msra.mxu0 %v4443
    %4445 = vmatprep.subr.mxu0 0.0
    %v4446 = vand.u32 %v63, 4294901760
    %4447 = vmatpush1.msra.mxu0 %v4446
    %4448 = vmatprep.subr.mxu0 0.0
    %v4449 = vand.u32 %v62, 4294901760
    %4450 = vmatpush1.msra.mxu0 %v4449
    %4451 = vmatprep.subr.mxu0 0.0
    %v4452 = vand.u32 %v61, 4294901760
    %4453 = vmatpush1.msra.mxu0 %v4452
    %4454 = vmatprep.subr.mxu0 0.0
    %v4455 = vand.u32 %v60, 4294901760
    %4456 = vmatpush1.msra.mxu0 %v4455
    %4457 = vmatprep.subr.mxu0 0.0
    %v4458 = vand.u32 %v59, 4294901760
    %4459 = vmatpush1.msra.mxu0 %v4458
    %4460 = vmatprep.subr.mxu0 0.0
    %v4461 = vand.u32 %v58, 4294901760
    %4462 = vmatpush1.msra.mxu0 %v4461
    %4463 = vmatprep.subr.mxu0 0.0
    %v4464 = vand.u32 %v57, 4294901760
    %4465 = vmatpush1.msra.mxu0 %v4464
    %4466 = vmatprep.subr.mxu0 0.0
    %4467 = vmatpush2.msra.mxu0 0.0
    %4468 = vmatprep.subr.mxu0 0.0
    %4469 = vmatpush2.msra.mxu0 0.0
    %4470 = vmatprep.subr.mxu0 0.0
    %4471 = vmatpush2.msra.mxu0 0.0
    %4472 = vmatprep.subr.mxu0 0.0
    %4473 = vmatpush2.msra.mxu0 0.0
    %4474 = vmatprep.subr.mxu0 0.0
    %4475 = vmatpush2.msra.mxu0 0.0
    %4476 = vmatprep.subr.mxu0 0.0
    %4477 = vmatpush2.msra.mxu0 0.0
    %4478 = vmatprep.subr.mxu0 0.0
    %4479 = vmatpush2.msra.mxu0 0.0
    %4480 = vmatprep.subr.mxu0 0.0
    %4481 = vmatpush2.msra.mxu0 0.0
    %4482 = vmatprep.subr.mxu0 0.0
    %4483 = vmatpush2.msra.mxu0 0.0
    %4484 = vmatprep.subr.mxu0 0.0
    %4485 = vmatpush2.msra.mxu0 0.0
    %4486 = vmatprep.subr.mxu0 0.0
    %4487 = vmatpush2.msra.mxu0 0.0
    %4488 = vmatprep.subr.mxu0 0.0
    %4489 = vmatpush2.msra.mxu0 0.0
    %4490 = vmatprep.subr.mxu0 0.0
    %v4491 = vand.u32 %v76, 4294901760
    %4492 = vmatpush2.msra.mxu0 %v4491
    %4493 = vmatprep.subr.mxu0 0.0
    %v4494 = vand.u32 %v75, 4294901760
    %4495 = vmatpush2.msra.mxu0 %v4494
    %4496 = vmatprep.subr.mxu0 0.0
    %v4497 = vand.u32 %v74, 4294901760
    %4498 = vmatpush2.msra.mxu0 %v4497
    %4499 = vmatprep.subr.mxu0 0.0
    %v4500 = vand.u32 %v73, 4294901760
    %4501 = vmatpush2.msra.mxu0 %v4500
    %v4502 = vand.u32 %v3646, 4294901760
    %4503 = vmatprep.mubr.f32.mxu0 %v4502
    %v4504 = vand.u32 %v3637, 4294901760
    %4505 = vmatmul.mubr.f32.gmra.mxu0 %v4504
    %v4506 = vpop.f32.mrf.mxu0
    %v4507 = vadd.f32 %v4394, %v4506
    %v4508 = vpop.f32.mrf.mxu0
    %v4509 = vand.u32 %v3649, 4294901760
    %4510 = vmatprep.mubr.f32.mxu0 %v4509
    %v4511 = vand.u32 %v3639, 4294901760
    %4512 = vmatmul.mubr.f32.gmra.mxu0 %v4511
    %v4513 = vpop.f32.mrf.mxu0
    %v4514 = vadd.f32 %v4401, %v4513
    %v4515 = vpop.f32.mrf.mxu0
    %v4516 = vand.u32 %v3652, 4294901760
    %4517 = vmatprep.mubr.f32.mxu0 %v4516
    %v4518 = vand.u32 %v3641, 4294901760
    %4519 = vmatmul.mubr.f32.gmra.mxu0 %v4518
    %v4520 = vpop.f32.mrf.mxu0
    %v4521 = vadd.f32 %v4408, %v4520
    %v4522 = vpop.f32.mrf.mxu0
    %v4523 = vand.u32 %v3655, 4294901760
    %4524 = vmatprep.mubr.f32.mxu0 %v4523
    %v4525 = vand.u32 %v3643, 4294901760
    %4526 = vmatmul.mubr.f32.gmra.mxu0 %v4525
    %v4527 = vpop.f32.mrf.mxu0
    %v4528 = vadd.f32 %v4415, %v4527
    %v4529 = vpop.f32.mrf.mxu0
    %4530 = vdwg.mxu0
    %v4531 = vmul.f32 %v4507, 0.5
    %v4532 = vmul.f32 %v4514, 0.5
    %v4533 = vmul.f32 %v4521, 0.5
    %v4534 = vmul.f32 %v4528, 0.5
    %v4535 = vadd.f32 %v2526, %v4531
    %v4536 = vadd.f32 %v2527, %v4532
    %v4537 = vadd.f32 %v2528, %v4533
    %v4538 = vadd.f32 %v2529, %v4534
    %v4539 = vsel %vm1481, %v4535, -inf
    %4540 = vmax.xlane.f32.xlu0 %v4539
    %v4541 = vpop.xlane.xlu0 %4540
    %v4542 = vsel %vm1481, %v4536, -inf
    %4543 = vmax.xlane.f32.xlu0 %v4542
    %v4544 = vpop.xlane.xlu0 %4543
    %v4545 = vsel %vm1481, %v4537, -inf
    %4546 = vmax.xlane.f32.xlu0 %v4545
    %v4547 = vpop.xlane.xlu0 %4546
    %v4548 = vsel %vm1481, %v4538, -inf
    %4549 = vmax.xlane.f32.xlu0 %v4548
    %v4550 = vpop.xlane.xlu0 %4549
    %v4551 = vsub.f32 %v4535, %v4541
    %v4552 = vsub.f32 %v4536, %v4544
    %v4553 = vsub.f32 %v4537, %v4547
    %v4554 = vsub.f32 %v4538, %v4550
    %v4555 = vmul.f32 %v4551, 1.442695
    %v4556 = vpow.pop %v4555
    %v4557 = vmul.f32 %v4552, 1.442695
    %v4558 = vpow.pop %v4557
    %v4559 = vmul.f32 %v4553, 1.442695
    %v4560 = vpow.pop %v4559
    %v4561 = vmul.f32 %v4554, 1.442695
    %v4562 = vpow.pop %v4561
    %v4563 = vsel %vm1481, %v4556, 0.0
    %4564 = vadd.xlane.f32.xlu0 %v4563
    %v4565 = vpop.xlane.xlu0 %4564
    %v4566 = vsel %vm1481, %v4558, 0.0
    %4567 = vadd.xlane.f32.xlu0 %v4566
    %v4568 = vpop.xlane.xlu0 %4567
    %v4569 = vsel %vm1481, %v4560, 0.0
    %4570 = vadd.xlane.f32.xlu0 %v4569
    %v4571 = vpop.xlane.xlu0 %4570
    %v4572 = vsel %vm1481, %v4562, 0.0
    %4573 = vadd.xlane.f32.xlu0 %v4572
    %v4574 = vpop.xlane.xlu0 %4573
    %v4575 = vrcp.pop %v4565
    %v4576 = vmul.f32 %v4556, %v4575
    %v4577 = vrcp.pop %v4568
    %v4578 = vmul.f32 %v4558, %v4577
    %v4579 = vrcp.pop %v4571
    %v4580 = vmul.f32 %v4560, %v4579
    %v4581 = vrcp.pop %v4574
    %v4582 = vmul.f32 %v4562, %v4581
    %v4584 = vsel %vm1481, %v4576, 0
    %v4587 = vsel %vm1481, %v4578, 0
    %v4590 = vsel %vm1481, %v4580, 0
    %v4593 = vsel %vm1481, %v4582, 0
    %4595 = vmatprep.subr.mxu0 0.0
    %4596 = vmatpush1.msra.mxu0 0.0
    %4597 = vmatprep.subr.mxu0 0.0
    %4598 = vmatpush1.msra.mxu0 0.0
    %4599 = vmatprep.subr.mxu0 0.0
    %4600 = vmatpush1.msra.mxu0 0.0
    %4601 = vmatprep.subr.mxu0 0.0
    %4602 = vmatpush1.msra.mxu0 0.0
    %4603 = vmatprep.subr.mxu0 0.0
    %4604 = vmatpush1.msra.mxu0 0.0
    %4605 = vmatprep.subr.mxu0 0.0
    %4606 = vmatpush1.msra.mxu0 0.0
    %4607 = vmatprep.subr.mxu0 0.0
    %4608 = vmatpush1.msra.mxu0 0.0
    %4609 = vmatprep.subr.mxu0 0.0
    %4610 = vmatpush1.msra.mxu0 0.0
    %4611 = vmatprep.subr.mxu0 0.0
    %4612 = vmatpush1.msra.mxu0 0.0
    %4613 = vmatprep.subr.mxu0 0.0
    %4614 = vmatpush1.msra.mxu0 0.0
    %4615 = vmatprep.subr.mxu0 0.0
    %4616 = vmatpush1.msra.mxu0 0.0
    %4617 = vmatprep.subr.mxu0 0.0
    %4618 = vmatpush1.msra.mxu0 0.0
    %4619 = vmatprep.subr.mxu0 0.0
    %4620 = vmatpush1.msra.mxu0 0.0
    %4621 = vmatprep.subr.mxu0 0.0
    %4622 = vmatpush1.msra.mxu0 0.0
    %4623 = vmatprep.subr.mxu0 %v1490
    %4624 = vmatpush1.msra.mxu0 %v1487
    %4625 = vmatprep.subr.mxu0 %v54
    %4626 = vmatpush1.msra.mxu0 %v53
    %4627 = vmatprep.subr.mxu0 0.0
    %4628 = vmatpush2.msra.mxu0 0.0
    %4629 = vmatprep.subr.mxu0 0.0
    %4630 = vmatpush2.msra.mxu0 0.0
    %4631 = vmatprep.subr.mxu0 0.0
    %4632 = vmatpush2.msra.mxu0 0.0
    %4633 = vmatprep.subr.mxu0 0.0
    %4634 = vmatpush2.msra.mxu0 0.0
    %4635 = vmatprep.subr.mxu0 0.0
    %4636 = vmatpush2.msra.mxu0 0.0
    %4637 = vmatprep.subr.mxu0 0.0
    %4638 = vmatpush2.msra.mxu0 0.0
    %4639 = vmatprep.subr.mxu0 0.0
    %4640 = vmatpush2.msra.mxu0 0.0
    %4641 = vmatprep.subr.mxu0 0.0
    %4642 = vmatpush2.msra.mxu0 0.0
    %4643 = vmatprep.subr.mxu0 0.0
    %4644 = vmatpush2.msra.mxu0 0.0
    %4645 = vmatprep.subr.mxu0 0.0
    %4646 = vmatpush2.msra.mxu0 0.0
    %4647 = vmatprep.subr.mxu0 0.0
    %4648 = vmatpush2.msra.mxu0 0.0
    %4649 = vmatprep.subr.mxu0 0.0
    %4650 = vmatpush2.msra.mxu0 0.0
    %4651 = vmatprep.subr.mxu0 0.0
    %4652 = vmatpush2.msra.mxu0 0.0
    %4653 = vmatprep.subr.mxu0 0.0
    %4654 = vmatpush2.msra.mxu0 0.0
    %4655 = vmatprep.subr.mxu0 0.0
    %4656 = vmatpush2.msra.mxu0 0.0
    %4657 = vmatprep.subr.mxu0 0.0
    %4658 = vmatpush2.msra.mxu0 0.0
    %4659 = vmatprep.mubr.f32.mxu0 0.0
    %4660 = vmatmul.mubr.f32.gmra.mxu0 %v4584
    %v4661 = vpop.f32.mrf.mxu0
    %v4662 = vadd.f32 0.0, %v4661
    %v4663 = vpop.f32.mrf.mxu0
    %v4664 = vadd.f32 0.0, %v4663
    %4665 = vmatprep.mubr.f32.mxu0 0.0
    %4666 = vmatmul.mubr.f32.gmra.mxu0 %v4587
    %v4667 = vpop.f32.mrf.mxu0
    %v4668 = vadd.f32 0.0, %v4667
    %v4669 = vpop.f32.mrf.mxu0
    %v4670 = vadd.f32 0.0, %v4669
    %4671 = vmatprep.mubr.f32.mxu0 0.0
    %4672 = vmatmul.mubr.f32.gmra.mxu0 %v4590
    %v4673 = vpop.f32.mrf.mxu0
    %v4674 = vadd.f32 0.0, %v4673
    %v4675 = vpop.f32.mrf.mxu0
    %v4676 = vadd.f32 0.0, %v4675
    %4677 = vmatprep.mubr.f32.mxu0 0.0
    %4678 = vmatmul.mubr.f32.gmra.mxu0 %v4593
    %v4679 = vpop.f32.mrf.mxu0
    %v4680 = vadd.f32 0.0, %v4679
    %v4681 = vpop.f32.mrf.mxu0
    %v4682 = vadd.f32 0.0, %v4681
    %4683 = vdwg.mxu0
    %v4684 = vmul.f32 %v4662, %v612
    %v4685 = vmul.f32 %v4664, %v613
    %v4686 = vmul.f32 %v4668, %v614
    %v4687 = vmul.f32 %v4670, %v615
    %v4688 = vmul.f32 %v4674, %v616
    %v4689 = vmul.f32 %v4676, %v617
    %v4690 = vmul.f32 %v4680, %v618
    %v4691 = vmul.f32 %v4682, %v619
    %v4692 = vadd.f32 %v4684, %v4686
    %v4693 = vadd.f32 %v4692, %v4688
    %v4694 = vadd.f32 %v4693, %v4690
    %v4695 = vrot.slane %v4694, 4
    %v4696 = vadd.f32 %v4694, %v4695
    %v4697 = vrot.slane %v4696, 2
    %v4698 = vadd.f32 %v4696, %v4697
    %v4699 = vrot.slane %v4698, 1
    %v4700 = vadd.f32 %v4698, %v4699
    %v4701 = vsel %vm669, %v4685, 0.0
    %v4702 = vsel %vm669, %v4687, 0.0
    %v4703 = vadd.f32 %v4701, %v4702
    %v4704 = vsel %vm669, %v4689, 0.0
    %v4705 = vadd.f32 %v4703, %v4704
    %v4706 = vsel %vm669, %v4691, 0.0
    %v4707 = vadd.f32 %v4705, %v4706
    %v4708 = vrot.slane %v4707, 4
    %v4709 = vadd.f32 %v4707, %v4708
    %v4710 = vrot.slane %v4709, 2
    %v4711 = vadd.f32 %v4709, %v4710
    %v4712 = vrot.slane %v4711, 1
    %v4713 = vadd.f32 %v4711, %v4712
    %v4716 = vcombine.low %v4700, %v4713
    %v4718 = vunpack.c.l.s4 1966171168
    %v4719 = vunpack.c.0.s8 %v4718
    %v4720 = vlaneseq
    %v4721 = vshrl.u32 %v4720, 7
    %v4722 = vsub.s32 %v4719, %v4721
    %v4723 = vrot.slane %v4716, %v4722
    %v4725 = vunpack.c.l.s4 1966171168
    %v4726 = vunpack.c.0.s8 %v4725
    %v4727 = vlaneseq
    %v4728 = vshrl.u32 %v4727, 7
    %v4729 = vsub.s32 %v4726, %v4728
    %v4730 = vrot.slane %v4723, %v4729
    %4732 = vst.msk [vmem:[#allocation2] ss:$2 sm:$0x3] %vm704, %v4730
    %v4733 = vmul.f32 %v4662, %v644
    %v4734 = vmul.f32 %v4664, %v645
    %v4735 = vmul.f32 %v4668, %v646
    %v4736 = vmul.f32 %v4670, %v647
    %v4737 = vmul.f32 %v4674, %v648
    %v4738 = vmul.f32 %v4676, %v649
    %v4739 = vmul.f32 %v4680, %v650
    %v4740 = vmul.f32 %v4682, %v651
    %v4741 = vadd.f32 %v4733, %v4735
    %v4742 = vadd.f32 %v4741, %v4737
    %v4743 = vadd.f32 %v4742, %v4739
    %v4744 = vrot.slane %v4743, 4
    %v4745 = vadd.f32 %v4743, %v4744
    %v4746 = vrot.slane %v4745, 2
    %v4747 = vadd.f32 %v4745, %v4746
    %v4748 = vrot.slane %v4747, 1
    %v4749 = vadd.f32 %v4747, %v4748
    %v4750 = vsel %vm669, %v4734, 0.0
    %v4751 = vsel %vm669, %v4736, 0.0
    %v4752 = vadd.f32 %v4750, %v4751
    %v4753 = vsel %vm669, %v4738, 0.0
    %v4754 = vadd.f32 %v4752, %v4753
    %v4755 = vsel %vm669, %v4740, 0.0
    %v4756 = vadd.f32 %v4754, %v4755
    %v4757 = vrot.slane %v4756, 4
    %v4758 = vadd.f32 %v4756, %v4757
    %v4759 = vrot.slane %v4758, 2
    %v4760 = vadd.f32 %v4758, %v4759
    %v4761 = vrot.slane %v4760, 1
    %v4762 = vadd.f32 %v4760, %v4761
    %v4765 = vcombine.low %v4749, %v4762
    %v4767 = vunpack.c.l.s4 1966171168
    %v4768 = vunpack.c.0.s8 %v4767
    %v4769 = vlaneseq
    %v4770 = vshrl.u32 %v4769, 7
    %v4771 = vsub.s32 %v4768, %v4770
    %v4772 = vrot.slane %v4765, %v4771
    %v4774 = vunpack.c.l.s4 1966171168
    %v4775 = vunpack.c.0.s8 %v4774
    %v4776 = vlaneseq
    %v4777 = vshrl.u32 %v4776, 7
    %v4778 = vsub.s32 %v4775, %v4777
    %v4779 = vrot.slane %v4772, %v4778
    %4781 = vst.msk [vmem:[%s754] ss:$2 sm:$0x3] %vm704, %v4779
    %v4782 = vld [vmem:[#allocation2] sm:$0xf]
    %v4783 = vmul.f32 %v4782, %v4782
    %v4786 = vunpack.c.l.s4 1983009808
    %v4787 = vunpack.c.0.s8 %v4786
    %v4788 = vlaneseq
    %v4789 = vshrl.u32 %v4788, 7
    %v4790 = vsub.s32 %v4787, %v4789
    %v4791 = vrot.slane %v4783, %v4790
    %v4792 = vcombine.high %v4791, %v4791
    %v4794 = vsel %vm669, %v4792, 0
    %4796 = vmatprep.subr.mxu0 0.0
    %v4797 = vand.u32 %v72, 4294901760
    %4798 = vmatpush1.msra.mxu0 %v4797
    %4799 = vmatprep.subr.mxu0 0.0
    %v4800 = vand.u32 %v71, 4294901760
    %4801 = vmatpush1.msra.mxu0 %v4800
    %4802 = vmatprep.subr.mxu0 0.0
    %v4803 = vand.u32 %v70, 4294901760
    %4804 = vmatpush1.msra.mxu0 %v4803
    %4805 = vmatprep.subr.mxu0 0.0
    %v4806 = vand.u32 %v69, 4294901760
    %4807 = vmatpush1.msra.mxu0 %v4806
    %4808 = vmatprep.subr.mxu0 0.0
    %v4809 = vand.u32 %v68, 4294901760
    %4810 = vmatpush1.msra.mxu0 %v4809
    %4811 = vmatprep.subr.mxu0 0.0
    %v4812 = vand.u32 %v67, 4294901760
    %4813 = vmatpush1.msra.mxu0 %v4812
    %4814 = vmatprep.subr.mxu0 0.0
    %v4815 = vand.u32 %v66, 4294901760
    %4816 = vmatpush1.msra.mxu0 %v4815
    %4817 = vmatprep.subr.mxu0 0.0
    %v4818 = vand.u32 %v65, 4294901760
    %4819 = vmatpush1.msra.mxu0 %v4818
    %4820 = vmatprep.subr.mxu0 0.0
    %v4821 = vand.u32 %v64, 4294901760
    %4822 = vmatpush1.msra.mxu0 %v4821
    %4823 = vmatprep.subr.mxu0 0.0
    %v4824 = vand.u32 %v63, 4294901760
    %4825 = vmatpush1.msra.mxu0 %v4824
    %4826 = vmatprep.subr.mxu0 0.0
    %v4827 = vand.u32 %v62, 4294901760
    %4828 = vmatpush1.msra.mxu0 %v4827
    %4829 = vmatprep.subr.mxu0 0.0
    %v4830 = vand.u32 %v61, 4294901760
    %4831 = vmatpush1.msra.mxu0 %v4830
    %4832 = vmatprep.subr.mxu0 0.0
    %v4833 = vand.u32 %v60, 4294901760
    %4834 = vmatpush1.msra.mxu0 %v4833
    %4835 = vmatprep.subr.mxu0 0.0
    %v4836 = vand.u32 %v59, 4294901760
    %4837 = vmatpush1.msra.mxu0 %v4836
    %4838 = vmatprep.subr.mxu0 0.0
    %v4839 = vand.u32 %v58, 4294901760
    %4840 = vmatpush1.msra.mxu0 %v4839
    %4841 = vmatprep.subr.mxu0 0.0
    %v4842 = vand.u32 %v57, 4294901760
    %4843 = vmatpush1.msra.mxu0 %v4842
    %4844 = vmatprep.subr.mxu0 0.0
    %4845 = vmatpush2.msra.mxu0 0.0
    %4846 = vmatprep.subr.mxu0 0.0
    %4847 = vmatpush2.msra.mxu0 0.0
    %4848 = vmatprep.subr.mxu0 0.0
    %4849 = vmatpush2.msra.mxu0 0.0
    %4850 = vmatprep.subr.mxu0 0.0
    %4851 = vmatpush2.msra.mxu0 0.0
    %4852 = vmatprep.subr.mxu0 0.0
    %4853 = vmatpush2.msra.mxu0 0.0
    %4854 = vmatprep.subr.mxu0 0.0
    %4855 = vmatpush2.msra.mxu0 0.0
    %4856 = vmatprep.subr.mxu0 0.0
    %4857 = vmatpush2.msra.mxu0 0.0
    %4858 = vmatprep.subr.mxu0 0.0
    %4859 = vmatpush2.msra.mxu0 0.0
    %4860 = vmatprep.subr.mxu0 0.0
    %4861 = vmatpush2.msra.mxu0 0.0
    %4862 = vmatprep.subr.mxu0 0.0
    %4863 = vmatpush2.msra.mxu0 0.0
    %4864 = vmatprep.subr.mxu0 0.0
    %4865 = vmatpush2.msra.mxu0 0.0
    %4866 = vmatprep.subr.mxu0 0.0
    %4867 = vmatpush2.msra.mxu0 0.0
    %4868 = vmatprep.subr.mxu0 0.0
    %v4869 = vand.u32 %v76, 4294901760
    %4870 = vmatpush2.msra.mxu0 %v4869
    %4871 = vmatprep.subr.mxu0 0.0
    %v4872 = vand.u32 %v75, 4294901760
    %4873 = vmatpush2.msra.mxu0 %v4872
    %4874 = vmatprep.subr.mxu0 0.0
    %v4875 = vand.u32 %v74, 4294901760
    %4876 = vmatpush2.msra.mxu0 %v4875
    %4877 = vmatprep.subr.mxu0 0.0
    %v4878 = vand.u32 %v73, 4294901760
    %4879 = vmatpush2.msra.mxu0 %v4878
    %v4880 = vand.u32 %v4794, 4294901760
    %v4881 = vsub.f32 %v4794, %v4880
    %v4882 = vand.u32 %v4881, 4294901760
    %v4883 = vsub.f32 %v4881, %v4882
    %v4884 = vand.u32 %v4883, 4294901760
    %4885 = vmatprep.mubr.f32.mxu0 %v4884
    %v4886 = vand.u32 %v4791, 4294901760
    %v4887 = vsub.f32 %v4791, %v4886
    %v4888 = vand.u32 %v4887, 4294901760
    %v4889 = vsub.f32 %v4887, %v4888
    %v4890 = vand.u32 %v4889, 4294901760
    %4891 = vmatmul.mubr.f32.gmra.mxu0 %v4890
    %v4892 = vpop.f32.mrf.mxu0
    %v4893 = vadd.f32 0.0, %v4892
    %v4894 = vpop.f32.mrf.mxu0
    %4895 = vdwg.mxu0
    %4896 = vmatprep.subr.mxu0 0.0
    %v4897 = vand.u32 %v72, 4294901760
    %v4898 = vsub.f32 %v72, %v4897
    %v4899 = vand.u32 %v4898, 4294901760
    %v4900 = vsub.f32 %v4898, %v4899
    %v4901 = vand.u32 %v4900, 4294901760
    %4902 = vmatpush1.msra.mxu0 %v4901
    %4903 = vmatprep.subr.mxu0 0.0
    %v4904 = vand.u32 %v71, 4294901760
    %v4905 = vsub.f32 %v71, %v4904
    %v4906 = vand.u32 %v4905, 4294901760
    %v4907 = vsub.f32 %v4905, %v4906
    %v4908 = vand.u32 %v4907, 4294901760
    %4909 = vmatpush1.msra.mxu0 %v4908
    %4910 = vmatprep.subr.mxu0 0.0
    %v4911 = vand.u32 %v70, 4294901760
    %v4912 = vsub.f32 %v70, %v4911
    %v4913 = vand.u32 %v4912, 4294901760
    %v4914 = vsub.f32 %v4912, %v4913
    %v4915 = vand.u32 %v4914, 4294901760
    %4916 = vmatpush1.msra.mxu0 %v4915
    %4917 = vmatprep.subr.mxu0 0.0
    %v4918 = vand.u32 %v69, 4294901760
    %v4919 = vsub.f32 %v69, %v4918
    %v4920 = vand.u32 %v4919, 4294901760
    %v4921 = vsub.f32 %v4919, %v4920
    %v4922 = vand.u32 %v4921, 4294901760
    %4923 = vmatpush1.msra.mxu0 %v4922
    %4924 = vmatprep.subr.mxu0 0.0
    %v4925 = vand.u32 %v68, 4294901760
    %v4926 = vsub.f32 %v68, %v4925
    %v4927 = vand.u32 %v4926, 4294901760
    %v4928 = vsub.f32 %v4926, %v4927
    %v4929 = vand.u32 %v4928, 4294901760
    %4930 = vmatpush1.msra.mxu0 %v4929
    %4931 = vmatprep.subr.mxu0 0.0
    %v4932 = vand.u32 %v67, 4294901760
    %v4933 = vsub.f32 %v67, %v4932
    %v4934 = vand.u32 %v4933, 4294901760
    %v4935 = vsub.f32 %v4933, %v4934
    %v4936 = vand.u32 %v4935, 4294901760
    %4937 = vmatpush1.msra.mxu0 %v4936
    %4938 = vmatprep.subr.mxu0 0.0
    %v4939 = vand.u32 %v66, 4294901760
    %v4940 = vsub.f32 %v66, %v4939
    %v4941 = vand.u32 %v4940, 4294901760
    %v4942 = vsub.f32 %v4940, %v4941
    %v4943 = vand.u32 %v4942, 4294901760
    %4944 = vmatpush1.msra.mxu0 %v4943
    %4945 = vmatprep.subr.mxu0 0.0
    %v4946 = vand.u32 %v65, 4294901760
    %v4947 = vsub.f32 %v65, %v4946
    %v4948 = vand.u32 %v4947, 4294901760
    %v4949 = vsub.f32 %v4947, %v4948
    %v4950 = vand.u32 %v4949, 4294901760
    %4951 = vmatpush1.msra.mxu0 %v4950
    %4952 = vmatprep.subr.mxu0 0.0
    %v4953 = vand.u32 %v64, 4294901760
    %v4954 = vsub.f32 %v64, %v4953
    %v4955 = vand.u32 %v4954, 4294901760
    %v4956 = vsub.f32 %v4954, %v4955
    %v4957 = vand.u32 %v4956, 4294901760
    %4958 = vmatpush1.msra.mxu0 %v4957
    %4959 = vmatprep.subr.mxu0 0.0
    %v4960 = vand.u32 %v63, 4294901760
    %v4961 = vsub.f32 %v63, %v4960
    %v4962 = vand.u32 %v4961, 4294901760
    %v4963 = vsub.f32 %v4961, %v4962
    %v4964 = vand.u32 %v4963, 4294901760
    %4965 = vmatpush1.msra.mxu0 %v4964
    %4966 = vmatprep.subr.mxu0 0.0
    %v4967 = vand.u32 %v62, 4294901760
    %v4968 = vsub.f32 %v62, %v4967
    %v4969 = vand.u32 %v4968, 4294901760
    %v4970 = vsub.f32 %v4968, %v4969
    %v4971 = vand.u32 %v4970, 4294901760
    %4972 = vmatpush1.msra.mxu0 %v4971
    %4973 = vmatprep.subr.mxu0 0.0
    %v4974 = vand.u32 %v61, 4294901760
    %v4975 = vsub.f32 %v61, %v4974
    %v4976 = vand.u32 %v4975, 4294901760
    %v4977 = vsub.f32 %v4975, %v4976
    %v4978 = vand.u32 %v4977, 4294901760
    %4979 = vmatpush1.msra.mxu0 %v4978
    %4980 = vmatprep.subr.mxu0 0.0
    %v4981 = vand.u32 %v60, 4294901760
    %v4982 = vsub.f32 %v60, %v4981
    %v4983 = vand.u32 %v4982, 4294901760
    %v4984 = vsub.f32 %v4982, %v4983
    %v4985 = vand.u32 %v4984, 4294901760
    %4986 = vmatpush1.msra.mxu0 %v4985
    %4987 = vmatprep.subr.mxu0 0.0
    %v4988 = vand.u32 %v59, 4294901760
    %v4989 = vsub.f32 %v59, %v4988
    %v4990 = vand.u32 %v4989, 4294901760
    %v4991 = vsub.f32 %v4989, %v4990
    %v4992 = vand.u32 %v4991, 4294901760
    %4993 = vmatpush1.msra.mxu0 %v4992
    %4994 = vmatprep.subr.mxu0 0.0
    %v4995 = vand.u32 %v58, 4294901760
    %v4996 = vsub.f32 %v58, %v4995
    %v4997 = vand.u32 %v4996, 4294901760
    %v4998 = vsub.f32 %v4996, %v4997
    %v4999 = vand.u32 %v4998, 4294901760
    %5000 = vmatpush1.msra.mxu0 %v4999
    %5001 = vmatprep.subr.mxu0 0.0
    %v5002 = vand.u32 %v57, 4294901760
    %v5003 = vsub.f32 %v57, %v5002
    %v5004 = vand.u32 %v5003, 4294901760
    %v5005 = vsub.f32 %v5003, %v5004
    %v5006 = vand.u32 %v5005, 4294901760
    %5007 = vmatpush1.msra.mxu0 %v5006
    %5008 = vmatprep.subr.mxu0 0.0
    %5009 = vmatpush2.msra.mxu0 0.0
    %5010 = vmatprep.subr.mxu0 0.0
    %5011 = vmatpush2.msra.mxu0 0.0
    %5012 = vmatprep.subr.mxu0 0.0
    %5013 = vmatpush2.msra.mxu0 0.0
    %5014 = vmatprep.subr.mxu0 0.0
    %5015 = vmatpush2.msra.mxu0 0.0
    %5016 = vmatprep.subr.mxu0 0.0
    %5017 = vmatpush2.msra.mxu0 0.0
    %5018 = vmatprep.subr.mxu0 0.0
    %5019 = vmatpush2.msra.mxu0 0.0
    %5020 = vmatprep.subr.mxu0 0.0
    %5021 = vmatpush2.msra.mxu0 0.0
    %5022 = vmatprep.subr.mxu0 0.0
    %5023 = vmatpush2.msra.mxu0 0.0
    %5024 = vmatprep.subr.mxu0 0.0
    %5025 = vmatpush2.msra.mxu0 0.0
    %5026 = vmatprep.subr.mxu0 0.0
    %5027 = vmatpush2.msra.mxu0 0.0
    %5028 = vmatprep.subr.mxu0 0.0
    %5029 = vmatpush2.msra.mxu0 0.0
    %5030 = vmatprep.subr.mxu0 0.0
    %5031 = vmatpush2.msra.mxu0 0.0
    %5032 = vmatprep.subr.mxu0 0.0
    %v5033 = vand.u32 %v76, 4294901760
    %v5034 = vsub.f32 %v76, %v5033
    %v5035 = vand.u32 %v5034, 4294901760
    %v5036 = vsub.f32 %v5034, %v5035
    %v5037 = vand.u32 %v5036, 4294901760
    %5038 = vmatpush2.msra.mxu0 %v5037
    %5039 = vmatprep.subr.mxu0 0.0
    %v5040 = vand.u32 %v75, 4294901760
    %v5041 = vsub.f32 %v75, %v5040
    %v5042 = vand.u32 %v5041, 4294901760
    %v5043 = vsub.f32 %v5041, %v5042
    %v5044 = vand.u32 %v5043, 4294901760
    %5045 = vmatpush2.msra.mxu0 %v5044
    %5046 = vmatprep.subr.mxu0 0.0
    %v5047 = vand.u32 %v74, 4294901760
    %v5048 = vsub.f32 %v74, %v5047
    %v5049 = vand.u32 %v5048, 4294901760
    %v5050 = vsub.f32 %v5048, %v5049
    %v5051 = vand.u32 %v5050, 4294901760
    %5052 = vmatpush2.msra.mxu0 %v5051
    %5053 = vmatprep.subr.mxu0 0.0
    %v5054 = vand.u32 %v73, 4294901760
    %v5055 = vsub.f32 %v73, %v5054
    %v5056 = vand.u32 %v5055, 4294901760
    %v5057 = vsub.f32 %v5055, %v5056
    %v5058 = vand.u32 %v5057, 4294901760
    %5059 = vmatpush2.msra.mxu0 %v5058
    %v5060 = vand.u32 %v4794, 4294901760
    %5061 = vmatprep.mubr.f32.mxu0 %v5060
    %v5062 = vand.u32 %v4791, 4294901760
    %5063 = vmatmul.mubr.f32.gmra.mxu0 %v5062
    %v5064 = vpop.f32.mrf.mxu0
    %v5065 = vadd.f32 %v4893, %v5064
    %v5066 = vpop.f32.mrf.mxu0
    %5067 = vdwg.mxu0
    %5068 = vmatprep.subr.mxu0 0.0
    %v5069 = vand.u32 %v72, 4294901760
    %v5070 = vsub.f32 %v72, %v5069
    %5071 = vmatpush1.msra.mxu0 %v5070
    %5072 = vmatprep.subr.mxu0 0.0
    %v5073 = vand.u32 %v71, 4294901760
    %v5074 = vsub.f32 %v71, %v5073
    %5075 = vmatpush1.msra.mxu0 %v5074
    %5076 = vmatprep.subr.mxu0 0.0
    %v5077 = vand.u32 %v70, 4294901760
    %v5078 = vsub.f32 %v70, %v5077
    %5079 = vmatpush1.msra.mxu0 %v5078
    %5080 = vmatprep.subr.mxu0 0.0
    %v5081 = vand.u32 %v69, 4294901760
    %v5082 = vsub.f32 %v69, %v5081
    %5083 = vmatpush1.msra.mxu0 %v5082
    %5084 = vmatprep.subr.mxu0 0.0
    %v5085 = vand.u32 %v68, 4294901760
    %v5086 = vsub.f32 %v68, %v5085
    %5087 = vmatpush1.msra.mxu0 %v5086
    %5088 = vmatprep.subr.mxu0 0.0
    %v5089 = vand.u32 %v67, 4294901760
    %v5090 = vsub.f32 %v67, %v5089
    %5091 = vmatpush1.msra.mxu0 %v5090
    %5092 = vmatprep.subr.mxu0 0.0
    %v5093 = vand.u32 %v66, 4294901760
    %v5094 = vsub.f32 %v66, %v5093
    %5095 = vmatpush1.msra.mxu0 %v5094
    %5096 = vmatprep.subr.mxu0 0.0
    %v5097 = vand.u32 %v65, 4294901760
    %v5098 = vsub.f32 %v65, %v5097
    %5099 = vmatpush1.msra.mxu0 %v5098
    %5100 = vmatprep.subr.mxu0 0.0
    %v5101 = vand.u32 %v64, 4294901760
    %v5102 = vsub.f32 %v64, %v5101
    %5103 = vmatpush1.msra.mxu0 %v5102
    %5104 = vmatprep.subr.mxu0 0.0
    %v5105 = vand.u32 %v63, 4294901760
    %v5106 = vsub.f32 %v63, %v5105
    %5107 = vmatpush1.msra.mxu0 %v5106
    %5108 = vmatprep.subr.mxu0 0.0
    %v5109 = vand.u32 %v62, 4294901760
    %v5110 = vsub.f32 %v62, %v5109
    %5111 = vmatpush1.msra.mxu0 %v5110
    %5112 = vmatprep.subr.mxu0 0.0
    %v5113 = vand.u32 %v61, 4294901760
    %v5114 = vsub.f32 %v61, %v5113
    %5115 = vmatpush1.msra.mxu0 %v5114
    %5116 = vmatprep.subr.mxu0 0.0
    %v5117 = vand.u32 %v60, 4294901760
    %v5118 = vsub.f32 %v60, %v5117
    %5119 = vmatpush1.msra.mxu0 %v5118
    %5120 = vmatprep.subr.mxu0 0.0
    %v5121 = vand.u32 %v59, 4294901760
    %v5122 = vsub.f32 %v59, %v5121
    %5123 = vmatpush1.msra.mxu0 %v5122
    %5124 = vmatprep.subr.mxu0 0.0
    %v5125 = vand.u32 %v58, 4294901760
    %v5126 = vsub.f32 %v58, %v5125
    %5127 = vmatpush1.msra.mxu0 %v5126
    %5128 = vmatprep.subr.mxu0 0.0
    %v5129 = vand.u32 %v57, 4294901760
    %v5130 = vsub.f32 %v57, %v5129
    %5131 = vmatpush1.msra.mxu0 %v5130
    %5132 = vmatprep.subr.mxu0 0.0
    %5133 = vmatpush2.msra.mxu0 0.0
    %5134 = vmatprep.subr.mxu0 0.0
    %5135 = vmatpush2.msra.mxu0 0.0
    %5136 = vmatprep.subr.mxu0 0.0
    %5137 = vmatpush2.msra.mxu0 0.0
    %5138 = vmatprep.subr.mxu0 0.0
    %5139 = vmatpush2.msra.mxu0 0.0
    %5140 = vmatprep.subr.mxu0 0.0
    %5141 = vmatpush2.msra.mxu0 0.0
    %5142 = vmatprep.subr.mxu0 0.0
    %5143 = vmatpush2.msra.mxu0 0.0
    %5144 = vmatprep.subr.mxu0 0.0
    %5145 = vmatpush2.msra.mxu0 0.0
    %5146 = vmatprep.subr.mxu0 0.0
    %5147 = vmatpush2.msra.mxu0 0.0
    %5148 = vmatprep.subr.mxu0 0.0
    %5149 = vmatpush2.msra.mxu0 0.0
    %5150 = vmatprep.subr.mxu0 0.0
    %5151 = vmatpush2.msra.mxu0 0.0
    %5152 = vmatprep.subr.mxu0 0.0
    %5153 = vmatpush2.msra.mxu0 0.0
    %5154 = vmatprep.subr.mxu0 0.0
    %5155 = vmatpush2.msra.mxu0 0.0
    %5156 = vmatprep.subr.mxu0 0.0
    %v5157 = vand.u32 %v76, 4294901760
    %v5158 = vsub.f32 %v76, %v5157
    %5159 = vmatpush2.msra.mxu0 %v5158
    %5160 = vmatprep.subr.mxu0 0.0
    %v5161 = vand.u32 %v75, 4294901760
    %v5162 = vsub.f32 %v75, %v5161
    %5163 = vmatpush2.msra.mxu0 %v5162
    %5164 = vmatprep.subr.mxu0 0.0
    %v5165 = vand.u32 %v74, 4294901760
    %v5166 = vsub.f32 %v74, %v5165
    %5167 = vmatpush2.msra.mxu0 %v5166
    %5168 = vmatprep.subr.mxu0 0.0
    %v5169 = vand.u32 %v73, 4294901760
    %v5170 = vsub.f32 %v73, %v5169
    %5171 = vmatpush2.msra.mxu0 %v5170
    %v5172 = vand.u32 %v4794, 4294901760
    %v5173 = vsub.f32 %v4794, %v5172
    %5174 = vmatprep.mubr.f32.mxu0 %v5173
    %v5175 = vand.u32 %v4791, 4294901760
    %v5176 = vsub.f32 %v4791, %v5175
    %5177 = vmatmul.mubr.f32.gmra.mxu0 %v5176
    %v5178 = vpop.f32.mrf.mxu0
    %v5179 = vadd.f32 %v5065, %v5178
    %v5180 = vpop.f32.mrf.mxu0
    %5181 = vdwg.mxu0
    %5182 = vmatprep.subr.mxu0 0.0
    %v5183 = vand.u32 %v72, 4294901760
    %5184 = vmatpush1.msra.mxu0 %v5183
    %5185 = vmatprep.subr.mxu0 0.0
    %v5186 = vand.u32 %v71, 4294901760
    %5187 = vmatpush1.msra.mxu0 %v5186
    %5188 = vmatprep.subr.mxu0 0.0
    %v5189 = vand.u32 %v70, 4294901760
    %5190 = vmatpush1.msra.mxu0 %v5189
    %5191 = vmatprep.subr.mxu0 0.0
    %v5192 = vand.u32 %v69, 4294901760
    %5193 = vmatpush1.msra.mxu0 %v5192
    %5194 = vmatprep.subr.mxu0 0.0
    %v5195 = vand.u32 %v68, 4294901760
    %5196 = vmatpush1.msra.mxu0 %v5195
    %5197 = vmatprep.subr.mxu0 0.0
    %v5198 = vand.u32 %v67, 4294901760
    %5199 = vmatpush1.msra.mxu0 %v5198
    %5200 = vmatprep.subr.mxu0 0.0
    %v5201 = vand.u32 %v66, 4294901760
    %5202 = vmatpush1.msra.mxu0 %v5201
    %5203 = vmatprep.subr.mxu0 0.0
    %v5204 = vand.u32 %v65, 4294901760
    %5205 = vmatpush1.msra.mxu0 %v5204
    %5206 = vmatprep.subr.mxu0 0.0
    %v5207 = vand.u32 %v64, 4294901760
    %5208 = vmatpush1.msra.mxu0 %v5207
    %5209 = vmatprep.subr.mxu0 0.0
    %v5210 = vand.u32 %v63, 4294901760
    %5211 = vmatpush1.msra.mxu0 %v5210
    %5212 = vmatprep.subr.mxu0 0.0
    %v5213 = vand.u32 %v62, 4294901760
    %5214 = vmatpush1.msra.mxu0 %v5213
    %5215 = vmatprep.subr.mxu0 0.0
    %v5216 = vand.u32 %v61, 4294901760
    %5217 = vmatpush1.msra.mxu0 %v5216
    %5218 = vmatprep.subr.mxu0 0.0
    %v5219 = vand.u32 %v60, 4294901760
    %5220 = vmatpush1.msra.mxu0 %v5219
    %5221 = vmatprep.subr.mxu0 0.0
    %v5222 = vand.u32 %v59, 4294901760
    %5223 = vmatpush1.msra.mxu0 %v5222
    %5224 = vmatprep.subr.mxu0 0.0
    %v5225 = vand.u32 %v58, 4294901760
    %5226 = vmatpush1.msra.mxu0 %v5225
    %5227 = vmatprep.subr.mxu0 0.0
    %v5228 = vand.u32 %v57, 4294901760
    %5229 = vmatpush1.msra.mxu0 %v5228
    %5230 = vmatprep.subr.mxu0 0.0
    %5231 = vmatpush2.msra.mxu0 0.0
    %5232 = vmatprep.subr.mxu0 0.0
    %5233 = vmatpush2.msra.mxu0 0.0
    %5234 = vmatprep.subr.mxu0 0.0
    %5235 = vmatpush2.msra.mxu0 0.0
    %5236 = vmatprep.subr.mxu0 0.0
    %5237 = vmatpush2.msra.mxu0 0.0
    %5238 = vmatprep.subr.mxu0 0.0
    %5239 = vmatpush2.msra.mxu0 0.0
    %5240 = vmatprep.subr.mxu0 0.0
    %5241 = vmatpush2.msra.mxu0 0.0
    %5242 = vmatprep.subr.mxu0 0.0
    %5243 = vmatpush2.msra.mxu0 0.0
    %5244 = vmatprep.subr.mxu0 0.0
    %5245 = vmatpush2.msra.mxu0 0.0
    %5246 = vmatprep.subr.mxu0 0.0
    %5247 = vmatpush2.msra.mxu0 0.0
    %5248 = vmatprep.subr.mxu0 0.0
    %5249 = vmatpush2.msra.mxu0 0.0
    %5250 = vmatprep.subr.mxu0 0.0
    %5251 = vmatpush2.msra.mxu0 0.0
    %5252 = vmatprep.subr.mxu0 0.0
    %5253 = vmatpush2.msra.mxu0 0.0
    %5254 = vmatprep.subr.mxu0 0.0
    %v5255 = vand.u32 %v76, 4294901760
    %5256 = vmatpush2.msra.mxu0 %v5255
    %5257 = vmatprep.subr.mxu0 0.0
    %v5258 = vand.u32 %v75, 4294901760
    %5259 = vmatpush2.msra.mxu0 %v5258
    %5260 = vmatprep.subr.mxu0 0.0
    %v5261 = vand.u32 %v74, 4294901760
    %5262 = vmatpush2.msra.mxu0 %v5261
    %5263 = vmatprep.subr.mxu0 0.0
    %v5264 = vand.u32 %v73, 4294901760
    %5265 = vmatpush2.msra.mxu0 %v5264
    %v5266 = vand.u32 %v4794, 4294901760
    %v5267 = vsub.f32 %v4794, %v5266
    %v5268 = vand.u32 %v5267, 4294901760
    %5269 = vmatprep.mubr.f32.mxu0 %v5268
    %v5270 = vand.u32 %v4791, 4294901760
    %v5271 = vsub.f32 %v4791, %v5270
    %v5272 = vand.u32 %v5271, 4294901760
    %5273 = vmatmul.mubr.f32.gmra.mxu0 %v5272
    %v5274 = vpop.f32.mrf.mxu0
    %v5275 = vadd.f32 %v5179, %v5274
    %v5276 = vpop.f32.mrf.mxu0
    %5277 = vdwg.mxu0
    %5278 = vmatprep.subr.mxu0 0.0
    %v5279 = vand.u32 %v72, 4294901760
    %v5280 = vsub.f32 %v72, %v5279
    %v5281 = vand.u32 %v5280, 4294901760
    %5282 = vmatpush1.msra.mxu0 %v5281
    %5283 = vmatprep.subr.mxu0 0.0
    %v5284 = vand.u32 %v71, 4294901760
    %v5285 = vsub.f32 %v71, %v5284
    %v5286 = vand.u32 %v5285, 4294901760
    %5287 = vmatpush1.msra.mxu0 %v5286
    %5288 = vmatprep.subr.mxu0 0.0
    %v5289 = vand.u32 %v70, 4294901760
    %v5290 = vsub.f32 %v70, %v5289
    %v5291 = vand.u32 %v5290, 4294901760
    %5292 = vmatpush1.msra.mxu0 %v5291
    %5293 = vmatprep.subr.mxu0 0.0
    %v5294 = vand.u32 %v69, 4294901760
    %v5295 = vsub.f32 %v69, %v5294
    %v5296 = vand.u32 %v5295, 4294901760
    %5297 = vmatpush1.msra.mxu0 %v5296
    %5298 = vmatprep.subr.mxu0 0.0
    %v5299 = vand.u32 %v68, 4294901760
    %v5300 = vsub.f32 %v68, %v5299
    %v5301 = vand.u32 %v5300, 4294901760
    %5302 = vmatpush1.msra.mxu0 %v5301
    %5303 = vmatprep.subr.mxu0 0.0
    %v5304 = vand.u32 %v67, 4294901760
    %v5305 = vsub.f32 %v67, %v5304
    %v5306 = vand.u32 %v5305, 4294901760
    %5307 = vmatpush1.msra.mxu0 %v5306
    %5308 = vmatprep.subr.mxu0 0.0
    %v5309 = vand.u32 %v66, 4294901760
    %v5310 = vsub.f32 %v66, %v5309
    %v5311 = vand.u32 %v5310, 4294901760
    %5312 = vmatpush1.msra.mxu0 %v5311
    %5313 = vmatprep.subr.mxu0 0.0
    %v5314 = vand.u32 %v65, 4294901760
    %v5315 = vsub.f32 %v65, %v5314
    %v5316 = vand.u32 %v5315, 4294901760
    %5317 = vmatpush1.msra.mxu0 %v5316
    %5318 = vmatprep.subr.mxu0 0.0
    %v5319 = vand.u32 %v64, 4294901760
    %v5320 = vsub.f32 %v64, %v5319
    %v5321 = vand.u32 %v5320, 4294901760
    %5322 = vmatpush1.msra.mxu0 %v5321
    %5323 = vmatprep.subr.mxu0 0.0
    %v5324 = vand.u32 %v63, 4294901760
    %v5325 = vsub.f32 %v63, %v5324
    %v5326 = vand.u32 %v5325, 4294901760
    %5327 = vmatpush1.msra.mxu0 %v5326
    %5328 = vmatprep.subr.mxu0 0.0
    %v5329 = vand.u32 %v62, 4294901760
    %v5330 = vsub.f32 %v62, %v5329
    %v5331 = vand.u32 %v5330, 4294901760
    %5332 = vmatpush1.msra.mxu0 %v5331
    %5333 = vmatprep.subr.mxu0 0.0
    %v5334 = vand.u32 %v61, 4294901760
    %v5335 = vsub.f32 %v61, %v5334
    %v5336 = vand.u32 %v5335, 4294901760
    %5337 = vmatpush1.msra.mxu0 %v5336
    %5338 = vmatprep.subr.mxu0 0.0
    %v5339 = vand.u32 %v60, 4294901760
    %v5340 = vsub.f32 %v60, %v5339
    %v5341 = vand.u32 %v5340, 4294901760
    %5342 = vmatpush1.msra.mxu0 %v5341
    %5343 = vmatprep.subr.mxu0 0.0
    %v5344 = vand.u32 %v59, 4294901760
    %v5345 = vsub.f32 %v59, %v5344
    %v5346 = vand.u32 %v5345, 4294901760
    %5347 = vmatpush1.msra.mxu0 %v5346
    %5348 = vmatprep.subr.mxu0 0.0
    %v5349 = vand.u32 %v58, 4294901760
    %v5350 = vsub.f32 %v58, %v5349
    %v5351 = vand.u32 %v5350, 4294901760
    %5352 = vmatpush1.msra.mxu0 %v5351
    %5353 = vmatprep.subr.mxu0 0.0
    %v5354 = vand.u32 %v57, 4294901760
    %v5355 = vsub.f32 %v57, %v5354
    %v5356 = vand.u32 %v5355, 4294901760
    %5357 = vmatpush1.msra.mxu0 %v5356
    %5358 = vmatprep.subr.mxu0 0.0
    %5359 = vmatpush2.msra.mxu0 0.0
    %5360 = vmatprep.subr.mxu0 0.0
    %5361 = vmatpush2.msra.mxu0 0.0
    %5362 = vmatprep.subr.mxu0 0.0
    %5363 = vmatpush2.msra.mxu0 0.0
    %5364 = vmatprep.subr.mxu0 0.0
    %5365 = vmatpush2.msra.mxu0 0.0
    %5366 = vmatprep.subr.mxu0 0.0
    %5367 = vmatpush2.msra.mxu0 0.0
    %5368 = vmatprep.subr.mxu0 0.0
    %5369 = vmatpush2.msra.mxu0 0.0
    %5370 = vmatprep.subr.mxu0 0.0
    %5371 = vmatpush2.msra.mxu0 0.0
    %5372 = vmatprep.subr.mxu0 0.0
    %5373 = vmatpush2.msra.mxu0 0.0
    %5374 = vmatprep.subr.mxu0 0.0
    %5375 = vmatpush2.msra.mxu0 0.0
    %5376 = vmatprep.subr.mxu0 0.0
    %5377 = vmatpush2.msra.mxu0 0.0
    %5378 = vmatprep.subr.mxu0 0.0
    %5379 = vmatpush2.msra.mxu0 0.0
    %5380 = vmatprep.subr.mxu0 0.0
    %5381 = vmatpush2.msra.mxu0 0.0
    %5382 = vmatprep.subr.mxu0 0.0
    %v5383 = vand.u32 %v76, 4294901760
    %v5384 = vsub.f32 %v76, %v5383
    %v5385 = vand.u32 %v5384, 4294901760
    %5386 = vmatpush2.msra.mxu0 %v5385
    %5387 = vmatprep.subr.mxu0 0.0
    %v5388 = vand.u32 %v75, 4294901760
    %v5389 = vsub.f32 %v75, %v5388
    %v5390 = vand.u32 %v5389, 4294901760
    %5391 = vmatpush2.msra.mxu0 %v5390
    %5392 = vmatprep.subr.mxu0 0.0
    %v5393 = vand.u32 %v74, 4294901760
    %v5394 = vsub.f32 %v74, %v5393
    %v5395 = vand.u32 %v5394, 4294901760
    %5396 = vmatpush2.msra.mxu0 %v5395
    %5397 = vmatprep.subr.mxu0 0.0
    %v5398 = vand.u32 %v73, 4294901760
    %v5399 = vsub.f32 %v73, %v5398
    %v5400 = vand.u32 %v5399, 4294901760
    %5401 = vmatpush2.msra.mxu0 %v5400
    %v5402 = vand.u32 %v4794, 4294901760
    %5403 = vmatprep.mubr.f32.mxu0 %v5402
    %v5404 = vand.u32 %v4791, 4294901760
    %5405 = vmatmul.mubr.f32.gmra.mxu0 %v5404
    %v5406 = vpop.f32.mrf.mxu0
    %v5407 = vadd.f32 %v5275, %v5406
    %v5408 = vpop.f32.mrf.mxu0
    %5409 = vdwg.mxu0
    %5410 = vmatprep.subr.mxu0 0.0
    %v5411 = vand.u32 %v72, 4294901760
    %5412 = vmatpush1.msra.mxu0 %v5411
    %5413 = vmatprep.subr.mxu0 0.0
    %v5414 = vand.u32 %v71, 4294901760
    %5415 = vmatpush1.msra.mxu0 %v5414
    %5416 = vmatprep.subr.mxu0 0.0
    %v5417 = vand.u32 %v70, 4294901760
    %5418 = vmatpush1.msra.mxu0 %v5417
    %5419 = vmatprep.subr.mxu0 0.0
    %v5420 = vand.u32 %v69, 4294901760
    %5421 = vmatpush1.msra.mxu0 %v5420
    %5422 = vmatprep.subr.mxu0 0.0
    %v5423 = vand.u32 %v68, 4294901760
    %5424 = vmatpush1.msra.mxu0 %v5423
    %5425 = vmatprep.subr.mxu0 0.0
    %v5426 = vand.u32 %v67, 4294901760
    %5427 = vmatpush1.msra.mxu0 %v5426
    %5428 = vmatprep.subr.mxu0 0.0
    %v5429 = vand.u32 %v66, 4294901760
    %5430 = vmatpush1.msra.mxu0 %v5429
    %5431 = vmatprep.subr.mxu0 0.0
    %v5432 = vand.u32 %v65, 4294901760
    %5433 = vmatpush1.msra.mxu0 %v5432
    %5434 = vmatprep.subr.mxu0 0.0
    %v5435 = vand.u32 %v64, 4294901760
    %5436 = vmatpush1.msra.mxu0 %v5435
    %5437 = vmatprep.subr.mxu0 0.0
    %v5438 = vand.u32 %v63, 4294901760
    %5439 = vmatpush1.msra.mxu0 %v5438
    %5440 = vmatprep.subr.mxu0 0.0
    %v5441 = vand.u32 %v62, 4294901760
    %5442 = vmatpush1.msra.mxu0 %v5441
    %5443 = vmatprep.subr.mxu0 0.0
    %v5444 = vand.u32 %v61, 4294901760
    %5445 = vmatpush1.msra.mxu0 %v5444
    %5446 = vmatprep.subr.mxu0 0.0
    %v5447 = vand.u32 %v60, 4294901760
    %5448 = vmatpush1.msra.mxu0 %v5447
    %5449 = vmatprep.subr.mxu0 0.0
    %v5450 = vand.u32 %v59, 4294901760
    %5451 = vmatpush1.msra.mxu0 %v5450
    %5452 = vmatprep.subr.mxu0 0.0
    %v5453 = vand.u32 %v58, 4294901760
    %5454 = vmatpush1.msra.mxu0 %v5453
    %5455 = vmatprep.subr.mxu0 0.0
    %v5456 = vand.u32 %v57, 4294901760
    %5457 = vmatpush1.msra.mxu0 %v5456
    %5458 = vmatprep.subr.mxu0 0.0
    %5459 = vmatpush2.msra.mxu0 0.0
    %5460 = vmatprep.subr.mxu0 0.0
    %5461 = vmatpush2.msra.mxu0 0.0
    %5462 = vmatprep.subr.mxu0 0.0
    %5463 = vmatpush2.msra.mxu0 0.0
    %5464 = vmatprep.subr.mxu0 0.0
    %5465 = vmatpush2.msra.mxu0 0.0
    %5466 = vmatprep.subr.mxu0 0.0
    %5467 = vmatpush2.msra.mxu0 0.0
    %5468 = vmatprep.subr.mxu0 0.0
    %5469 = vmatpush2.msra.mxu0 0.0
    %5470 = vmatprep.subr.mxu0 0.0
    %5471 = vmatpush2.msra.mxu0 0.0
    %5472 = vmatprep.subr.mxu0 0.0
    %5473 = vmatpush2.msra.mxu0 0.0
    %5474 = vmatprep.subr.mxu0 0.0
    %5475 = vmatpush2.msra.mxu0 0.0
    %5476 = vmatprep.subr.mxu0 0.0
    %5477 = vmatpush2.msra.mxu0 0.0
    %5478 = vmatprep.subr.mxu0 0.0
    %5479 = vmatpush2.msra.mxu0 0.0
    %5480 = vmatprep.subr.mxu0 0.0
    %5481 = vmatpush2.msra.mxu0 0.0
    %5482 = vmatprep.subr.mxu0 0.0
    %v5483 = vand.u32 %v76, 4294901760
    %5484 = vmatpush2.msra.mxu0 %v5483
    %5485 = vmatprep.subr.mxu0 0.0
    %v5486 = vand.u32 %v75, 4294901760
    %5487 = vmatpush2.msra.mxu0 %v5486
    %5488 = vmatprep.subr.mxu0 0.0
    %v5489 = vand.u32 %v74, 4294901760
    %5490 = vmatpush2.msra.mxu0 %v5489
    %5491 = vmatprep.subr.mxu0 0.0
    %v5492 = vand.u32 %v73, 4294901760
    %5493 = vmatpush2.msra.mxu0 %v5492
    %v5494 = vand.u32 %v4794, 4294901760
    %5495 = vmatprep.mubr.f32.mxu0 %v5494
    %v5496 = vand.u32 %v4791, 4294901760
    %5497 = vmatmul.mubr.f32.gmra.mxu0 %v5496
    %v5498 = vpop.f32.mrf.mxu0
    %v5499 = vadd.f32 %v5407, %v5498
    %v5500 = vpop.f32.mrf.mxu0
    %5501 = vdwg.mxu0
    %v5502 = vadd.f32 %v5499, 1.0
    %v5503 = vrcp.pop %v5502
    %v5504 = vmul.f32 %v5499, %v5503
    %v5505 = vrsqrt.pop %v5499
    %v5506 = vmul.f32 %v5504, %v5505
    %v5508 = vsel %vm1481, %v5506, 0
    %5510 = vmatprep.subr.mxu0 0.0
    %5511 = vmatpush1.msra.mxu0 0.0
    %5512 = vmatprep.subr.mxu0 0.0
    %5513 = vmatpush1.msra.mxu0 0.0
    %5514 = vmatprep.subr.mxu0 0.0
    %5515 = vmatpush1.msra.mxu0 0.0
    %5516 = vmatprep.subr.mxu0 0.0
    %5517 = vmatpush1.msra.mxu0 0.0
    %5518 = vmatprep.subr.mxu0 0.0
    %5519 = vmatpush1.msra.mxu0 0.0
    %5520 = vmatprep.subr.mxu0 0.0
    %5521 = vmatpush1.msra.mxu0 0.0
    %5522 = vmatprep.subr.mxu0 0.0
    %5523 = vmatpush1.msra.mxu0 0.0
    %5524 = vmatprep.subr.mxu0 0.0
    %5525 = vmatpush1.msra.mxu0 0.0
    %5526 = vmatprep.subr.mxu0 0.0
    %5527 = vmatpush1.msra.mxu0 0.0
    %5528 = vmatprep.subr.mxu0 0.0
    %5529 = vmatpush1.msra.mxu0 0.0
    %5530 = vmatprep.subr.mxu0 0.0
    %5531 = vmatpush1.msra.mxu0 0.0
    %5532 = vmatprep.subr.mxu0 0.0
    %5533 = vmatpush1.msra.mxu0 0.0
    %5534 = vmatprep.subr.mxu0 0.0
    %5535 = vmatpush1.msra.mxu0 0.0
    %5536 = vmatprep.subr.mxu0 0.0
    %5537 = vmatpush1.msra.mxu0 0.0
    %5538 = vmatprep.subr.mxu0 %v1490
    %5539 = vmatpush1.msra.mxu0 %v1487
    %5540 = vmatprep.subr.mxu0 %v54
    %5541 = vmatpush1.msra.mxu0 %v53
    %5542 = vmatprep.subr.mxu0 0.0
    %5543 = vmatpush2.msra.mxu0 0.0
    %5544 = vmatprep.subr.mxu0 0.0
    %5545 = vmatpush2.msra.mxu0 0.0
    %5546 = vmatprep.subr.mxu0 0.0
    %5547 = vmatpush2.msra.mxu0 0.0
    %5548 = vmatprep.subr.mxu0 0.0
    %5549 = vmatpush2.msra.mxu0 0.0
    %5550 = vmatprep.subr.mxu0 0.0
    %5551 = vmatpush2.msra.mxu0 0.0
    %5552 = vmatprep.subr.mxu0 0.0
    %5553 = vmatpush2.msra.mxu0 0.0
    %5554 = vmatprep.subr.mxu0 0.0
    %5555 = vmatpush2.msra.mxu0 0.0
    %5556 = vmatprep.subr.mxu0 0.0
    %5557 = vmatpush2.msra.mxu0 0.0
    %5558 = vmatprep.subr.mxu0 0.0
    %5559 = vmatpush2.msra.mxu0 0.0
    %5560 = vmatprep.subr.mxu0 0.0
    %5561 = vmatpush2.msra.mxu0 0.0
    %5562 = vmatprep.subr.mxu0 0.0
    %5563 = vmatpush2.msra.mxu0 0.0
    %5564 = vmatprep.subr.mxu0 0.0
    %5565 = vmatpush2.msra.mxu0 0.0
    %5566 = vmatprep.subr.mxu0 0.0
    %5567 = vmatpush2.msra.mxu0 0.0
    %5568 = vmatprep.subr.mxu0 0.0
    %5569 = vmatpush2.msra.mxu0 0.0
    %5570 = vmatprep.subr.mxu0 0.0
    %5571 = vmatpush2.msra.mxu0 0.0
    %5572 = vmatprep.subr.mxu0 0.0
    %5573 = vmatpush2.msra.mxu0 0.0
    %5574 = vmatprep.mubr.f32.mxu0 0.0
    %5575 = vmatmul.mubr.f32.gmra.mxu0 %v5508
    %v5576 = vpop.f32.mrf.mxu0
    %v5577 = vadd.f32 0.0, %v5576
    %v5578 = vpop.f32.mrf.mxu0
    %v5579 = vadd.f32 0.0, %v5578
    %5580 = vdwg.mxu0
    %v5583 = vcombine.low %v5577, %v5579
    %v5585 = vunpack.c.l.s4 1983009808
    %v5586 = vunpack.c.0.s8 %v5585
    %v5587 = vlaneseq
    %v5588 = vshrl.u32 %v5587, 7
    %v5589 = vsub.s32 %v5586, %v5588
    %v5590 = vrot.slane %v5583, %v5589
    %v5592 = vmul.f32 %v4782, %v5590
    %vm5593 = vcmask 257026
    %vm5594 = vmor %vm5593, %vm1485
    %5595 = vst.msk [vmem:[%s4] sm:$0xf] %vm5594, %v5592
    // Predicated region
    $region26: #{capsule_layer_routing.1} parent=1 // pred_check
      _
    $region27: #{capsule_layer_routing.1} parent=1 // pred_check_branch
      %5597 = sbr.rel (0) target = $region29
    $region28: #{capsule_layer_routing.1} parent=1 // pred_region
      _
    $region29: #{capsule_layer_routing.1} parent=1 // pred_fallthru
      _
    // Predicated region
    $region30: #{capsule_layer_routing.1} parent=1 // pred_check
      _
    $region31: #{capsule_layer_routing.1} parent=1 // pred_check_branch
      %5599 = sbr.rel (0) target = $region33
    $region32: #{capsule_layer_routing.1} parent=1 // pred_region
      _
    $region33: #{capsule_layer_routing.1} parent=1 // pred_fallthru
      _
    %5600 = vsyncpa [#allocation4], 1
    %5601 = vsyncpa [#allocation6], 1

</llo_original>
